<compile_context>
chip_gen: v7x
topology: tpu7x:2x2x1
jax: 0.10.0
libtpu: 0.0.40
codegen_flags: <defaults>
</compile_context>

<pallas_src>
import jax
import jax.numpy as jnp
from jax.experimental import pallas as pl
from jax.experimental.pallas import tpu as pltpu

LANE = 128      # vreg lane width  (last dim)
SUBLANE = 8     # vreg sublane depth (second-last dim)


def _round_up(x, m):
    return ((x + m - 1) // m) * m


def mlp_kernel(x_ref, w1_ref, b1_ref, w2_ref, b2_ref, w3_ref, b3_ref, o_ref):
    # x_ref: [TILE_B, D_in_pad]; weights [K_pad, N_pad]; biases [1, N_pad]
    x = x_ref[...]

    # fc1 + ReLU (true-f32 MXU, f32 accumulation)
    h1 = jnp.dot(x, w1_ref[...], preferred_element_type=jnp.float32,
                 precision=jax.lax.Precision.HIGHEST)
    h1 = jnp.maximum(h1 + b1_ref[...], 0.0)
    # dropout (inference) == identity

    # fc2 + ReLU
    h2 = jnp.dot(h1, w2_ref[...], preferred_element_type=jnp.float32,
                 precision=jax.lax.Precision.HIGHEST)
    h2 = jnp.maximum(h2 + b2_ref[...], 0.0)
    # dropout (inference) == identity

    # fc3 (logits)
    out = jnp.dot(h2, w3_ref[...], preferred_element_type=jnp.float32,
                  precision=jax.lax.Precision.HIGHEST)
    o_ref[...] = (out + b3_ref[...]).astype(o_ref.dtype)


def prepare_params(params):
    """One-time lane-dense zero-padding of weights/biases (hoisted out of the
    per-call forward). Padding is exact: zero weight rows/cols + zero bias and
    ReLU(0)=0, so padded lanes never affect the real logits."""
    w1, b1, w2, b2, w3, b3 = params
    d_in, h1_dim = w1.shape
    h2_dim, nc = w2.shape[1], w3.shape[1]
    d_in_p = _round_up(d_in, LANE)
    h1_p = _round_up(h1_dim, LANE)
    h2_p = _round_up(h2_dim, LANE)
    nc_p = _round_up(nc, LANE)

    def pad2d(a, rows, cols):
        a = a.astype(jnp.float32)
        return jnp.pad(a, ((0, rows - a.shape[0]), (0, cols - a.shape[1])))

    return (pad2d(w1, d_in_p, h1_p), pad2d(b1, 1, h1_p),
            pad2d(w2, h1_p, h2_p), pad2d(b2, 1, h2_p),
            pad2d(w3, h2_p, nc_p), pad2d(b3, 1, nc_p))


def simple_neural_network_forward(x_nchw, padded_params, num_classes):
    """x_nchw: [B, C, H, W] float32. Returns logits [B, num_classes]."""
    w1p, b1p, w2p, b2p, w3p, b3p = padded_params
    B = x_nchw.shape[0]
    x2d = x_nchw.reshape(B, -1).astype(jnp.float32)   # same flatten as torch .view

    d_in = x2d.shape[1]
    d_in_p, h1_p = w1p.shape
    h2_p, nc_p = w2p.shape[1], w3p.shape[1]

    # Lane-dense pad of the feature dim only (zero-width for 64*64*3 = 12288).
    # No batch padding: the ragged last block is handled by the cdiv grid
    # (rows are independent; out-of-range output rows are discarded).
    if d_in != d_in_p:
        x2d = jnp.pad(x2d, ((0, 0), (0, d_in_p - d_in)))

    # Batch tile: up to 1024 rows. Per-step VMEM at 1024: x 2x~3 MiB (double
    # buffered) + out 2x0.5 MiB + weights ~1 MiB -> ~8 MiB on all generations.
    tile_b = min(1024, _round_up(B, SUBLANE))
    grid = (pl.cdiv(B, tile_b),)

    flops = 2 * B * (d_in_p * h1_p + h1_p * h2_p + h2_p * nc_p)
    bytes_accessed = 4 * (x2d.size + w1p.size + b1p.size + w2p.size + b2p.size
                          + w3p.size + b3p.size + B * nc_p)

    out = pl.pallas_call(
        mlp_kernel,
        out_shape=jax.ShapeDtypeStruct((B, nc_p), jnp.float32),
        grid_spec=pltpu.PrefetchScalarGridSpec(
            num_scalar_prefetch=0,
            grid=grid,
            in_specs=[
                # activations: tiled along batch -> auto double-buffered DMA
                pl.BlockSpec((tile_b, d_in_p), lambda i: (i, 0)),
                # weights / biases: full blocks, VMEM-resident across steps
                pl.BlockSpec((d_in_p, h1_p), lambda i: (0, 0)),
                pl.BlockSpec((1, h1_p), lambda i: (0, 0)),
                pl.BlockSpec((h1_p, h2_p), lambda i: (0, 0)),
                pl.BlockSpec((1, h2_p), lambda i: (0, 0)),
                pl.BlockSpec((h2_p, nc_p), lambda i: (0, 0)),
                pl.BlockSpec((1, nc_p), lambda i: (0, 0)),
            ],
            out_specs=pl.BlockSpec((tile_b, nc_p), lambda i: (i, 0)),
        ),
        compiler_params=pltpu.CompilerParams(
            dimension_semantics=("parallel",),      # megacore / v7x 2nd TC
        ),
        cost_estimate=pl.CostEstimate(
            flops=flops, transcendentals=0, bytes_accessed=bytes_accessed),
    )(x2d, w1p, b1p, w2p, b2p, w3p, b3p)

    # Logits stay lane-dense (nc_p=128) inside the kernel; slice to the true
    # class count for the public interface. (Consumers that can eat the padded
    # buffer should take out[:, :] directly and fuse the slice.)
    return out[:, :num_classes]


def init_linear(key, fan_in, fan_out):
    """Deterministic PyTorch-style nn.Linear init: U(-1/sqrt(fan_in), 1/sqrt(fan_in))."""
    kw, kb = jax.random.split(key)
    bound = 1.0 / (fan_in ** 0.5)
    w = jax.random.uniform(kw, (fan_in, fan_out), jnp.float32, -bound, bound)
    b = jax.random.uniform(kb, (1, fan_out), jnp.float32, -bound, bound)
    return w, b


if __name__ == "__main__":
    # Small shapes consistent with the module's forward (flattened NCHW -> fc1).
    B, C, H, W = 2, 3, 16, 16
    input_dim = C * H * W          # 768
    hidden_dim = 32
    num_classes = 29

    key = jax.random.PRNGKey(0)
    kx, k1, k2, k3 = jax.random.split(key, 4)

    x = jax.random.normal(kx, (B, C, H, W), jnp.float32)
    w1, b1 = init_linear(k1, input_dim, hidden_dim)
    w2, b2 = init_linear(k2, hidden_dim, hidden_dim // 2)
    w3, b3 = init_linear(k3, hidden_dim // 2, num_classes)
    params = (w1, b1, w2, b2, w3, b3)

    # One-time parameter prep (padding hoisted out of the per-call forward).
    padded_params = jax.tree_util.tree_map(jax.block_until_ready,
                                           prepare_params(params))

    logits = simple_neural_network_forward(x, padded_params, num_classes)
    jax.block_until_ready(logits)

    # sanity check against plain-JAX reference (inference forward)
    x2d = x.reshape(B, -1)
    ref = jnp.maximum(x2d @ w1 + b1, 0.0)
    ref = jnp.maximum(ref @ w2 + b2, 0.0)
    ref = ref @ w3 + b3
    assert logits.shape == (B, num_classes)
    assert jnp.allclose(logits, ref, atol=1e-4, rtol=1e-4)

    print("KERNEL_OK")
</pallas_src>

<mosaic_0001>
module attributes {stable_mosaic.version = 11 : i64} {
  func.func @mlp_kernel(%arg0: i32, %arg1: memref<8x768xf32, #tpu.memory_space<vmem>>, %arg2: memref<768x128xf32, #tpu.memory_space<vmem>>, %arg3: memref<1x128xf32, #tpu.memory_space<vmem>>, %arg4: memref<128x128xf32, #tpu.memory_space<vmem>>, %arg5: memref<1x128xf32, #tpu.memory_space<vmem>>, %arg6: memref<128x128xf32, #tpu.memory_space<vmem>>, %arg7: memref<1x128xf32, #tpu.memory_space<vmem>>, %arg8: memref<8x128xf32, #tpu.memory_space<vmem>>) attributes {dimension_semantics = [#tpu.dimension_semantics<parallel>], iteration_bounds = array<i64: 1>, scalar_prefetch = 0 : i64, scratch_operands = 0 : i64, tpu.core_type = #tpu.core_type<tc>, window_params = [{transform_indices = @transform_0, window_bounds = array<i64: 8, 768>}, {pipeline_mode = #tpu.pipeline_mode<synchronous>, transform_indices = @transform_1, window_bounds = array<i64: 768, 128>}, {pipeline_mode = #tpu.pipeline_mode<synchronous>, transform_indices = @transform_2, window_bounds = array<i64: 1, 128>}, {pipeline_mode = #tpu.pipeline_mode<synchronous>, transform_indices = @transform_3, window_bounds = array<i64: 128, 128>}, {pipeline_mode = #tpu.pipeline_mode<synchronous>, transform_indices = @transform_4, window_bounds = array<i64: 1, 128>}, {pipeline_mode = #tpu.pipeline_mode<synchronous>, transform_indices = @transform_5, window_bounds = array<i64: 128, 128>}, {pipeline_mode = #tpu.pipeline_mode<synchronous>, transform_indices = @transform_6, window_bounds = array<i64: 1, 128>}, {transform_indices = @transform_7, window_bounds = array<i64: 8, 128>}]} {
    %c0 = arith.constant 0 : index
    %c0_0 = arith.constant 0 : index
    %0 = vector.load %arg1[%c0, %c0_0] : memref<8x768xf32, #tpu.memory_space<vmem>>, vector<8x768xf32>
    %c0_1 = arith.constant 0 : index
    %c0_2 = arith.constant 0 : index
    %1 = vector.load %arg2[%c0_1, %c0_2] : memref<768x128xf32, #tpu.memory_space<vmem>>, vector<768x128xf32>
    %cst = arith.constant dense<0.000000e+00> : vector<8x128xf32>
    %2 = tpu.matmul %0, %1, %cst {dimension_numbers = #tpu.dot_dimension_numbers<[1], [0], [0], [1], [0, 0, 1, 1], [], []>, precision = #tpu.contract_precision<fp32>} : vector<8x768xf32>, vector<768x128xf32>, vector<8x128xf32> -> vector<8x128xf32>
    %c0_3 = arith.constant 0 : index
    %c0_4 = arith.constant 0 : index
    %3 = vector.load %arg3[%c0_3, %c0_4] : memref<1x128xf32, #tpu.memory_space<vmem>>, vector<1x128xf32>
    %4 = vector.broadcast %3 : vector<1x128xf32> to vector<8x128xf32>
    %5 = arith.addf %2, %4 : vector<8x128xf32>
    %cst_5 = arith.constant 0.000000e+00 : f32
    %6 = vector.broadcast %cst_5 : f32 to vector<8x128xf32>
    %7 = arith.maximumf %5, %6 : vector<8x128xf32>
    %c0_6 = arith.constant 0 : index
    %c0_7 = arith.constant 0 : index
    %8 = vector.load %arg4[%c0_6, %c0_7] : memref<128x128xf32, #tpu.memory_space<vmem>>, vector<128x128xf32>
    %cst_8 = arith.constant dense<0.000000e+00> : vector<8x128xf32>
    %9 = tpu.matmul %7, %8, %cst_8 {dimension_numbers = #tpu.dot_dimension_numbers<[1], [0], [0], [1], [0, 0, 1, 1], [], []>, precision = #tpu.contract_precision<fp32>} : vector<8x128xf32>, vector<128x128xf32>, vector<8x128xf32> -> vector<8x128xf32>
    %c0_9 = arith.constant 0 : index
    %c0_10 = arith.constant 0 : index
    %10 = vector.load %arg5[%c0_9, %c0_10] : memref<1x128xf32, #tpu.memory_space<vmem>>, vector<1x128xf32>
    %11 = vector.broadcast %10 : vector<1x128xf32> to vector<8x128xf32>
    %12 = arith.addf %9, %11 : vector<8x128xf32>
    %cst_11 = arith.constant 0.000000e+00 : f32
    %13 = vector.broadcast %cst_11 : f32 to vector<8x128xf32>
    %14 = arith.maximumf %12, %13 : vector<8x128xf32>
    %c0_12 = arith.constant 0 : index
    %c0_13 = arith.constant 0 : index
    %15 = vector.load %arg6[%c0_12, %c0_13] : memref<128x128xf32, #tpu.memory_space<vmem>>, vector<128x128xf32>
    %cst_14 = arith.constant dense<0.000000e+00> : vector<8x128xf32>
    %16 = tpu.matmul %14, %15, %cst_14 {dimension_numbers = #tpu.dot_dimension_numbers<[1], [0], [0], [1], [0, 0, 1, 1], [], []>, precision = #tpu.contract_precision<fp32>} : vector<8x128xf32>, vector<128x128xf32>, vector<8x128xf32> -> vector<8x128xf32>
    %c0_15 = arith.constant 0 : index
    %c0_16 = arith.constant 0 : index
    %17 = vector.load %arg7[%c0_15, %c0_16] : memref<1x128xf32, #tpu.memory_space<vmem>>, vector<1x128xf32>
    %18 = vector.broadcast %17 : vector<1x128xf32> to vector<8x128xf32>
    %19 = arith.addf %16, %18 : vector<8x128xf32>
    %c0_17 = arith.constant 0 : index
    %c0_18 = arith.constant 0 : index
    %20 = vector.load %arg8[%c0_17, %c0_18] : memref<8x128xf32, #tpu.memory_space<vmem>>, vector<8x128xf32>
    tpu.vector_store %arg8[%c0_17, %c0_18], %19 {strides = array<i32>} : memref<8x128xf32, #tpu.memory_space<vmem>>, vector<8x128xf32>,
    return
  }
  func.func @transform_0(%arg0: i32) -> (i32, i32) {
    %c0_i32 = arith.constant 0 : i32
    %c0_i32_0 = arith.constant 0 : i32
    return %arg0, %c0_i32 : i32, i32
  }
  func.func @transform_1(%arg0: i32) -> (i32, i32) {
    %c0_i32 = arith.constant 0 : i32
    %c0_i32_0 = arith.constant 0 : i32
    %c0_i32_1 = arith.constant 0 : i32
    return %c0_i32, %c0_i32_0 : i32, i32
  }
  func.func @transform_2(%arg0: i32) -> (i32, i32) {
    %c0_i32 = arith.constant 0 : i32
    %c0_i32_0 = arith.constant 0 : i32
    %c0_i32_1 = arith.constant 0 : i32
    return %c0_i32, %c0_i32_0 : i32, i32
  }
  func.func @transform_3(%arg0: i32) -> (i32, i32) {
    %c0_i32 = arith.constant 0 : i32
    %c0_i32_0 = arith.constant 0 : i32
    %c0_i32_1 = arith.constant 0 : i32
    return %c0_i32, %c0_i32_0 : i32, i32
  }
  func.func @transform_4(%arg0: i32) -> (i32, i32) {
    %c0_i32 = arith.constant 0 : i32
    %c0_i32_0 = arith.constant 0 : i32
    %c0_i32_1 = arith.constant 0 : i32
    return %c0_i32, %c0_i32_0 : i32, i32
  }
  func.func @transform_5(%arg0: i32) -> (i32, i32) {
    %c0_i32 = arith.constant 0 : i32
    %c0_i32_0 = arith.constant 0 : i32
    %c0_i32_1 = arith.constant 0 : i32
    return %c0_i32, %c0_i32_0 : i32, i32
  }
  func.func @transform_6(%arg0: i32) -> (i32, i32) {
    %c0_i32 = arith.constant 0 : i32
    %c0_i32_0 = arith.constant 0 : i32
    %c0_i32_1 = arith.constant 0 : i32
    return %c0_i32, %c0_i32_0 : i32, i32
  }
  func.func @transform_7(%arg0: i32) -> (i32, i32) {
    %c0_i32 = arith.constant 0 : i32
    %c0_i32_0 = arith.constant 0 : i32
    return %arg0, %c0_i32 : i32, i32
  }
}

</mosaic_0001>

<llo_original>
// kernel: tpu_custom_call.1
$region0: #{tpu_custom_call.1}
  #allocation0 [shape = 'u32[]', space=smem, size = 0x4, offset = 0x4, fixed_abs, tag = 'smem constant byte address 0x4 - core index']
  #allocation1 [shape = 'u32[144,128]{1,0:T(1,128)}', space=vmem, size = 0x12000, scoped, tag = 'internal scratch']
  %s0 = inlined_call_operand.hbm [shape: f32[2,768], index: 0, kind: input, shape index: {}]
  %s1 = inlined_call_operand.hbm [shape: f32[768,128], index: 1, kind: input, shape index: {}]
  %s2 = inlined_call_operand.vmem [shape: f32[1,128], index: 2, kind: input, shape index: {}]
  %s3 = inlined_call_operand.hbm [shape: f32[128,128], index: 3, kind: input, shape index: {}]
  %s4 = inlined_call_operand.vmem [shape: f32[1,128], index: 4, kind: input, shape index: {}]
  %s5 = inlined_call_operand.hbm [shape: f32[128,128], index: 5, kind: input, shape index: {}]
  %s6 = inlined_call_operand.vmem [shape: f32[1,128], index: 6, kind: input, shape index: {}]
  %s7 = inlined_call_operand.hbm [shape: f32[2,128], index: 7, kind: output, shape index: {}]
  %s8 = sld [smem:[#allocation0]]
  $region54: #{tpu_custom_call.1} parent=0
    _
  %s10 = ssub.s32 1, %s8
  %s11 = scalar_select 0, %s10, %s8
  $region1: #{tpu_custom_call.1} parent=0
    #allocation2 [shape = 'u8[24576]{0}', space=vmem, size = 0x6000, scoped, tag = 'input window, operand 0, single buffered']
    #allocation3 [shape = 's32[1]{0}', space=sflag, size = 0x4, scoped, tag = 'scoped memory for tpu_custom_call.1']
    #allocation4 [shape = 's32[1]{0}', space=sflag, size = 0x4, scoped, tag = 'scoped memory for tpu_custom_call.1']
    #allocation5 [shape = 'u8[393216]{0}', space=vmem, size = 0x60000, scoped, tag = 'input window, operand 1, single buffered']
    #allocation6 [shape = 's32[1]{0}', space=sflag, size = 0x4, scoped, tag = 'scoped memory for tpu_custom_call.1']
    #allocation7 [shape = 'u8[65536]{0}', space=vmem, size = 0x10000, scoped, tag = 'input window, operand 3, single buffered']
    #allocation8 [shape = 'u8[65536]{0}', space=vmem, size = 0x10000, scoped, tag = 'input window, operand 5, single buffered']
    #allocation9 [shape = 's32[1]{0}', space=sflag, size = 0x4, scoped, tag = 'scoped memory for tpu_custom_call.1']
    #allocation10 [shape = 'u8[4096]{0}', space=vmem, size = 0x1000, scoped, tag = 'output window, operand 0, single buffered']
    %12 = vsyncpa [#allocation3], 0
    %13 = vsyncpa [#allocation6], 0
    %14 = vsyncpa [#allocation9], 0
    %15 = vsyncpa [#allocation4], 0
    // Predicated region
    $region2: #{tpu_custom_call.1} parent=1 // pred_check
      _
    $region3: #{tpu_custom_call.1} parent=1 // pred_check_branch
      %17 = sbr.rel (0) target = $region5
    $region4: #{tpu_custom_call.1} parent=1 // pred_region
      %s19 = ssub.s32 768, 192
      %20 = vsyncadd [#allocation3], %s19
      %s21 = sshll.u32 [#allocation2], 4
      %s22 = int_to_ptr.vmem [resolvable:$true] %s21
      %27 = dma.hbm_to_vmem [thread:$0]  %s0, 192, %s22, [#allocation3], 192, 192, 12
    $region5: #{tpu_custom_call.1} parent=1 // pred_fallthru
      _
    // Predicated region
    $region6: #{tpu_custom_call.1} parent=1 // pred_check
      _
    $region7: #{tpu_custom_call.1} parent=1 // pred_check_branch
      %29 = sbr.rel (0) target = $region9
    $region8: #{tpu_custom_call.1} parent=1 // pred_region
      %s31 = ssub.s32 12288, 12288
      %32 = vsyncadd [#allocation6], %s31
      %s33 = sshll.u32 [#allocation5], 4
      %s34 = int_to_ptr.vmem [resolvable:$true] %s33
      %39 = dma.hbm_to_vmem [thread:$0]  %s1, 12288, %s34, [#allocation6], 128, 128, 8
    $region9: #{tpu_custom_call.1} parent=1 // pred_fallthru
      _
    // Predicated region
    $region10: #{tpu_custom_call.1} parent=1 // pred_check
      _
    $region11: #{tpu_custom_call.1} parent=1 // pred_check_branch
      %41 = sbr.rel (0) target = $region13
    $region12: #{tpu_custom_call.1} parent=1 // pred_region
      _
    $region13: #{tpu_custom_call.1} parent=1 // pred_fallthru
      _
    // Predicated region
    $region14: #{tpu_custom_call.1} parent=1 // pred_check
      _
    $region15: #{tpu_custom_call.1} parent=1 // pred_check_branch
      %43 = sbr.rel (0) target = $region17
    $region16: #{tpu_custom_call.1} parent=1 // pred_region
      %s45 = ssub.s32 2048, 2048
      %46 = vsyncadd [#allocation6], %s45
      %s47 = sshll.u32 [#allocation7], 4
      %s48 = int_to_ptr.vmem [resolvable:$true] %s47
      %53 = dma.hbm_to_vmem [thread:$0]  %s3, 2048, %s48, [#allocation6], 128, 128, 8
    $region17: #{tpu_custom_call.1} parent=1 // pred_fallthru
      _
    // Predicated region
    $region18: #{tpu_custom_call.1} parent=1 // pred_check
      _
    $region19: #{tpu_custom_call.1} parent=1 // pred_check_branch
      %55 = sbr.rel (0) target = $region21
    $region20: #{tpu_custom_call.1} parent=1 // pred_region
      _
    $region21: #{tpu_custom_call.1} parent=1 // pred_fallthru
      _
    // Predicated region
    $region22: #{tpu_custom_call.1} parent=1 // pred_check
      _
    $region23: #{tpu_custom_call.1} parent=1 // pred_check_branch
      %57 = sbr.rel (0) target = $region25
    $region24: #{tpu_custom_call.1} parent=1 // pred_region
      %s59 = ssub.s32 2048, 2048
      %60 = vsyncadd [#allocation9], %s59
      %s61 = sshll.u32 [#allocation8], 4
      %s62 = int_to_ptr.vmem [resolvable:$true] %s61
      %67 = dma.hbm_to_vmem [thread:$0]  %s5, 2048, %s62, [#allocation9], 128, 128, 8
    $region25: #{tpu_custom_call.1} parent=1 // pred_fallthru
      _
    // Predicated region
    $region26: #{tpu_custom_call.1} parent=1 // pred_check
      _
    $region27: #{tpu_custom_call.1} parent=1 // pred_check_branch
      %69 = sbr.rel (0) target = $region29
    $region28: #{tpu_custom_call.1} parent=1 // pred_region
      _
    $region29: #{tpu_custom_call.1} parent=1 // pred_fallthru
      _
    // Predicated region
    $region30: #{tpu_custom_call.1} parent=1 // pred_check
      _
    $region31: #{tpu_custom_call.1} parent=1 // pred_check_branch
      %71 = sbr.rel (0) target = $region33
    $region32: #{tpu_custom_call.1} parent=1 // pred_region
      %72 = dma.done [#allocation3], 768
    $region33: #{tpu_custom_call.1} parent=1 // pred_fallthru
      _
    // Predicated region
    $region34: #{tpu_custom_call.1} parent=1 // pred_check
      _
    $region35: #{tpu_custom_call.1} parent=1 // pred_check_branch
      %74 = sbr.rel (0) target = $region37
    $region36: #{tpu_custom_call.1} parent=1 // pred_region
      %75 = dma.done [#allocation6], 12288
    $region37: #{tpu_custom_call.1} parent=1 // pred_fallthru
      _
    // Predicated region
    $region38: #{tpu_custom_call.1} parent=1 // pred_check
      _
    $region39: #{tpu_custom_call.1} parent=1 // pred_check_branch
      %77 = sbr.rel (0) target = $region41
    $region40: #{tpu_custom_call.1} parent=1 // pred_region
      %78 = dma.done [#allocation6], 2048
    $region41: #{tpu_custom_call.1} parent=1 // pred_fallthru
      _
    // Predicated region
    $region42: #{tpu_custom_call.1} parent=1 // pred_check
      _
    $region43: #{tpu_custom_call.1} parent=1 // pred_check_branch
      %80 = sbr.rel (0) target = $region45
    $region44: #{tpu_custom_call.1} parent=1 // pred_region
      %81 = dma.done [#allocation9], 2048
    $region45: #{tpu_custom_call.1} parent=1 // pred_fallthru
      _
    %v82 = vld [vmem:[#allocation2] sm:$0xff]
    %v83 = vld [vmem:[#allocation2 + $0x8] sm:$0xf]
    %v84 = vld [vmem:[#allocation2 + $0xc] sm:$0xff]
    %v85 = vld [vmem:[#allocation2 + $0x14] sm:$0xf]
    %v86 = vld [vmem:[#allocation2 + $0x18] sm:$0xff]
    %v87 = vld [vmem:[#allocation2 + $0x20] sm:$0xf]
    %v88 = vld [vmem:[#allocation2 + $0x24] sm:$0xff]
    %v89 = vld [vmem:[#allocation2 + $0x2c] sm:$0xf]
    %v90 = vld [vmem:[#allocation5] sm:$0xff]
    %v91 = vld [vmem:[#allocation5 + $0x8] sm:$0xff]
    %v92 = vld [vmem:[#allocation5 + $0x10] sm:$0xff]
    %v93 = vld [vmem:[#allocation5 + $0x18] sm:$0xff]
    %v94 = vld [vmem:[#allocation5 + $0x20] sm:$0xff]
    %v95 = vld [vmem:[#allocation5 + $0x28] sm:$0xff]
    %v96 = vld [vmem:[#allocation5 + $0x30] sm:$0xff]
    %v97 = vld [vmem:[#allocation5 + $0x38] sm:$0xff]
    %v98 = vld [vmem:[#allocation5 + $0x40] sm:$0xff]
    %v99 = vld [vmem:[#allocation5 + $0x48] sm:$0xff]
    %v100 = vld [vmem:[#allocation5 + $0x50] sm:$0xff]
    %v101 = vld [vmem:[#allocation5 + $0x58] sm:$0xff]
    %v102 = vld [vmem:[#allocation5 + $0x60] sm:$0xff]
    %v103 = vld [vmem:[#allocation5 + $0x68] sm:$0xff]
    %v104 = vld [vmem:[#allocation5 + $0x70] sm:$0xff]
    %v105 = vld [vmem:[#allocation5 + $0x78] sm:$0xff]
    %v106 = vld [vmem:[#allocation5 + $0x80] sm:$0xff]
    %v107 = vld [vmem:[#allocation5 + $0x88] sm:$0xff]
    %v108 = vld [vmem:[#allocation5 + $0x90] sm:$0xff]
    %v109 = vld [vmem:[#allocation5 + $0x98] sm:$0xff]
    %v110 = vld [vmem:[#allocation5 + $0xa0] sm:$0xff]
    %v111 = vld [vmem:[#allocation5 + $0xa8] sm:$0xff]
    %v112 = vld [vmem:[#allocation5 + $0xb0] sm:$0xff]
    %v113 = vld [vmem:[#allocation5 + $0xb8] sm:$0xff]
    %v114 = vld [vmem:[#allocation5 + $0xc0] sm:$0xff]
    %v115 = vld [vmem:[#allocation5 + $0xc8] sm:$0xff]
    %v116 = vld [vmem:[#allocation5 + $0xd0] sm:$0xff]
    %v117 = vld [vmem:[#allocation5 + $0xd8] sm:$0xff]
    %v118 = vld [vmem:[#allocation5 + $0xe0] sm:$0xff]
    %v119 = vld [vmem:[#allocation5 + $0xe8] sm:$0xff]
    %v120 = vld [vmem:[#allocation5 + $0xf0] sm:$0xff]
    %v121 = vld [vmem:[#allocation5 + $0xf8] sm:$0xff]
    %v122 = vld [vmem:[#allocation5 + $0x100] sm:$0xff]
    %v123 = vld [vmem:[#allocation5 + $0x108] sm:$0xff]
    %v124 = vld [vmem:[#allocation5 + $0x110] sm:$0xff]
    %v125 = vld [vmem:[#allocation5 + $0x118] sm:$0xff]
    %v126 = vld [vmem:[#allocation5 + $0x120] sm:$0xff]
    %v127 = vld [vmem:[#allocation5 + $0x128] sm:$0xff]
    %v128 = vld [vmem:[#allocation5 + $0x130] sm:$0xff]
    %v129 = vld [vmem:[#allocation5 + $0x138] sm:$0xff]
    %v130 = vld [vmem:[#allocation5 + $0x140] sm:$0xff]
    %v131 = vld [vmem:[#allocation5 + $0x148] sm:$0xff]
    %v132 = vld [vmem:[#allocation5 + $0x150] sm:$0xff]
    %v133 = vld [vmem:[#allocation5 + $0x158] sm:$0xff]
    %v134 = vld [vmem:[#allocation5 + $0x160] sm:$0xff]
    %v135 = vld [vmem:[#allocation5 + $0x168] sm:$0xff]
    %v136 = vld [vmem:[#allocation5 + $0x170] sm:$0xff]
    %v137 = vld [vmem:[#allocation5 + $0x178] sm:$0xff]
    %v138 = vld [vmem:[#allocation5 + $0x180] sm:$0xff]
    %v139 = vld [vmem:[#allocation5 + $0x188] sm:$0xff]
    %v140 = vld [vmem:[#allocation5 + $0x190] sm:$0xff]
    %v141 = vld [vmem:[#allocation5 + $0x198] sm:$0xff]
    %v142 = vld [vmem:[#allocation5 + $0x1a0] sm:$0xff]
    %v143 = vld [vmem:[#allocation5 + $0x1a8] sm:$0xff]
    %v144 = vld [vmem:[#allocation5 + $0x1b0] sm:$0xff]
    %v145 = vld [vmem:[#allocation5 + $0x1b8] sm:$0xff]
    %v146 = vld [vmem:[#allocation5 + $0x1c0] sm:$0xff]
    %v147 = vld [vmem:[#allocation5 + $0x1c8] sm:$0xff]
    %v148 = vld [vmem:[#allocation5 + $0x1d0] sm:$0xff]
    %v149 = vld [vmem:[#allocation5 + $0x1d8] sm:$0xff]
    %v150 = vld [vmem:[#allocation5 + $0x1e0] sm:$0xff]
    %v151 = vld [vmem:[#allocation5 + $0x1e8] sm:$0xff]
    %v152 = vld [vmem:[#allocation5 + $0x1f0] sm:$0xff]
    %v153 = vld [vmem:[#allocation5 + $0x1f8] sm:$0xff]
    %v154 = vld [vmem:[#allocation5 + $0x200] sm:$0xff]
    %v155 = vld [vmem:[#allocation5 + $0x208] sm:$0xff]
    %v156 = vld [vmem:[#allocation5 + $0x210] sm:$0xff]
    %v157 = vld [vmem:[#allocation5 + $0x218] sm:$0xff]
    %v158 = vld [vmem:[#allocation5 + $0x220] sm:$0xff]
    %v159 = vld [vmem:[#allocation5 + $0x228] sm:$0xff]
    %v160 = vld [vmem:[#allocation5 + $0x230] sm:$0xff]
    %v161 = vld [vmem:[#allocation5 + $0x238] sm:$0xff]
    %v162 = vld [vmem:[#allocation5 + $0x240] sm:$0xff]
    %v163 = vld [vmem:[#allocation5 + $0x248] sm:$0xff]
    %v164 = vld [vmem:[#allocation5 + $0x250] sm:$0xff]
    %v165 = vld [vmem:[#allocation5 + $0x258] sm:$0xff]
    %v166 = vld [vmem:[#allocation5 + $0x260] sm:$0xff]
    %v167 = vld [vmem:[#allocation5 + $0x268] sm:$0xff]
    %v168 = vld [vmem:[#allocation5 + $0x270] sm:$0xff]
    %v169 = vld [vmem:[#allocation5 + $0x278] sm:$0xff]
    %v170 = vld [vmem:[#allocation5 + $0x280] sm:$0xff]
    %v171 = vld [vmem:[#allocation5 + $0x288] sm:$0xff]
    %v172 = vld [vmem:[#allocation5 + $0x290] sm:$0xff]
    %v173 = vld [vmem:[#allocation5 + $0x298] sm:$0xff]
    %v174 = vld [vmem:[#allocation5 + $0x2a0] sm:$0xff]
    %v175 = vld [vmem:[#allocation5 + $0x2a8] sm:$0xff]
    %v176 = vld [vmem:[#allocation5 + $0x2b0] sm:$0xff]
    %v177 = vld [vmem:[#allocation5 + $0x2b8] sm:$0xff]
    %v178 = vld [vmem:[#allocation5 + $0x2c0] sm:$0xff]
    %v179 = vld [vmem:[#allocation5 + $0x2c8] sm:$0xff]
    %v180 = vld [vmem:[#allocation5 + $0x2d0] sm:$0xff]
    %v181 = vld [vmem:[#allocation5 + $0x2d8] sm:$0xff]
    %v182 = vld [vmem:[#allocation5 + $0x2e0] sm:$0xff]
    %v183 = vld [vmem:[#allocation5 + $0x2e8] sm:$0xff]
    %v184 = vld [vmem:[#allocation5 + $0x2f0] sm:$0xff]
    %v185 = vld [vmem:[#allocation5 + $0x2f8] sm:$0xff]
    %v186 = vld [vmem:[%s2] sm:$0x1]
    %v188 = vlaneseq
    %v189 = vshrl.u32 %v188, 7
    %v190 = vsub.s32 0, %v189
    %v191 = vrot.slane %v186, %v190
    %v201 = vcombine.low %v82, %v84
    %v202 = vcombine.high %v82, %v84
    %v203 = vcombine.low %v86, %v88
    %v204 = vcombine.high %v86, %v88
    %v206 = vunpack.c.l.s4 1983009808
    %v207 = vunpack.c.0.s8 %v206
    %v208 = vlaneseq
    %v209 = vshrl.u32 %v208, 7
    %v210 = vsub.s32 %v207, %v209
    %v211 = vrot.slane %v201, %v210
    %v213 = vunpack.c.l.s4 1983009808
    %v214 = vunpack.c.0.s8 %v213
    %v215 = vlaneseq
    %v216 = vshrl.u32 %v215, 7
    %v217 = vsub.s32 %v214, %v216
    %v218 = vrot.slane %v202, %v217
    %v220 = vunpack.c.l.s4 1983009808
    %v221 = vunpack.c.0.s8 %v220
    %v222 = vlaneseq
    %v223 = vshrl.u32 %v222, 7
    %v224 = vsub.s32 %v221, %v223
    %v225 = vrot.slane %v203, %v224
    %v227 = vunpack.c.l.s4 1983009808
    %v228 = vunpack.c.0.s8 %v227
    %v229 = vlaneseq
    %v230 = vshrl.u32 %v229, 7
    %v231 = vsub.s32 %v228, %v230
    %v232 = vrot.slane %v204, %v231
    %v233 = vcombine.low %v211, %v225
    %v234 = vcombine.high %v211, %v225
    %v235 = vcombine.low %v218, %v232
    %v236 = vcombine.high %v218, %v232
    %v237 = vcombine.low %v83, %v85
    %v238 = vcombine.low %v87, %v89
    %v240 = vunpack.c.l.s4 1983009808
    %v241 = vunpack.c.0.s8 %v240
    %v242 = vlaneseq
    %v243 = vshrl.u32 %v242, 7
    %v244 = vsub.s32 %v241, %v243
    %v245 = vrot.slane %v237, %v244
    %v247 = vunpack.c.l.s4 1983009808
    %v248 = vunpack.c.0.s8 %v247
    %v249 = vlaneseq
    %v250 = vshrl.u32 %v249, 7
    %v251 = vsub.s32 %v248, %v250
    %v252 = vrot.slane %v238, %v251
    %v253 = vcombine.low %v245, %v252
    %v254 = vcombine.high %v245, %v252
    %261 = vmatprep.subr.mxu0 0.0
    %v262 = vand.u32 %v90, 4294901760
    %263 = vmatpush1.msra.mxu0 %v262
    %264 = vmatprep.subr.mxu0 0.0
    %v265 = vand.u32 %v91, 4294901760
    %266 = vmatpush1.msra.mxu0 %v265
    %267 = vmatprep.subr.mxu0 0.0
    %v268 = vand.u32 %v92, 4294901760
    %269 = vmatpush1.msra.mxu0 %v268
    %270 = vmatprep.subr.mxu0 0.0
    %v271 = vand.u32 %v93, 4294901760
    %272 = vmatpush1.msra.mxu0 %v271
    %273 = vmatprep.subr.mxu0 0.0
    %v274 = vand.u32 %v94, 4294901760
    %275 = vmatpush1.msra.mxu0 %v274
    %276 = vmatprep.subr.mxu0 0.0
    %v277 = vand.u32 %v95, 4294901760
    %278 = vmatpush1.msra.mxu0 %v277
    %279 = vmatprep.subr.mxu0 0.0
    %v280 = vand.u32 %v96, 4294901760
    %281 = vmatpush1.msra.mxu0 %v280
    %282 = vmatprep.subr.mxu0 0.0
    %v283 = vand.u32 %v97, 4294901760
    %284 = vmatpush1.msra.mxu0 %v283
    %285 = vmatprep.subr.mxu0 0.0
    %v286 = vand.u32 %v98, 4294901760
    %287 = vmatpush1.msra.mxu0 %v286
    %288 = vmatprep.subr.mxu0 0.0
    %v289 = vand.u32 %v99, 4294901760
    %290 = vmatpush1.msra.mxu0 %v289
    %291 = vmatprep.subr.mxu0 0.0
    %v292 = vand.u32 %v100, 4294901760
    %293 = vmatpush1.msra.mxu0 %v292
    %294 = vmatprep.subr.mxu0 0.0
    %v295 = vand.u32 %v101, 4294901760
    %296 = vmatpush1.msra.mxu0 %v295
    %297 = vmatprep.subr.mxu0 0.0
    %v298 = vand.u32 %v102, 4294901760
    %299 = vmatpush1.msra.mxu0 %v298
    %300 = vmatprep.subr.mxu0 0.0
    %v301 = vand.u32 %v103, 4294901760
    %302 = vmatpush1.msra.mxu0 %v301
    %303 = vmatprep.subr.mxu0 0.0
    %v304 = vand.u32 %v104, 4294901760
    %305 = vmatpush1.msra.mxu0 %v304
    %306 = vmatprep.subr.mxu0 0.0
    %v307 = vand.u32 %v105, 4294901760
    %308 = vmatpush1.msra.mxu0 %v307
    %309 = vmatprep.subr.mxu0 0.0
    %v310 = vand.u32 %v106, 4294901760
    %311 = vmatpush1.msra.mxu0 %v310
    %312 = vmatprep.subr.mxu0 0.0
    %v313 = vand.u32 %v107, 4294901760
    %314 = vmatpush1.msra.mxu0 %v313
    %315 = vmatprep.subr.mxu0 0.0
    %v316 = vand.u32 %v108, 4294901760
    %317 = vmatpush1.msra.mxu0 %v316
    %318 = vmatprep.subr.mxu0 0.0
    %v319 = vand.u32 %v109, 4294901760
    %320 = vmatpush1.msra.mxu0 %v319
    %321 = vmatprep.subr.mxu0 0.0
    %v322 = vand.u32 %v110, 4294901760
    %323 = vmatpush1.msra.mxu0 %v322
    %324 = vmatprep.subr.mxu0 0.0
    %v325 = vand.u32 %v111, 4294901760
    %326 = vmatpush1.msra.mxu0 %v325
    %327 = vmatprep.subr.mxu0 0.0
    %v328 = vand.u32 %v112, 4294901760
    %329 = vmatpush1.msra.mxu0 %v328
    %330 = vmatprep.subr.mxu0 0.0
    %v331 = vand.u32 %v113, 4294901760
    %332 = vmatpush1.msra.mxu0 %v331
    %333 = vmatprep.subr.mxu0 0.0
    %v334 = vand.u32 %v114, 4294901760
    %335 = vmatpush1.msra.mxu0 %v334
    %336 = vmatprep.subr.mxu0 0.0
    %v337 = vand.u32 %v115, 4294901760
    %338 = vmatpush1.msra.mxu0 %v337
    %339 = vmatprep.subr.mxu0 0.0
    %v340 = vand.u32 %v116, 4294901760
    %341 = vmatpush1.msra.mxu0 %v340
    %342 = vmatprep.subr.mxu0 0.0
    %v343 = vand.u32 %v117, 4294901760
    %344 = vmatpush1.msra.mxu0 %v343
    %345 = vmatprep.subr.mxu0 0.0
    %v346 = vand.u32 %v118, 4294901760
    %347 = vmatpush1.msra.mxu0 %v346
    %348 = vmatprep.subr.mxu0 0.0
    %v349 = vand.u32 %v119, 4294901760
    %350 = vmatpush1.msra.mxu0 %v349
    %351 = vmatprep.subr.mxu0 0.0
    %v352 = vand.u32 %v120, 4294901760
    %353 = vmatpush1.msra.mxu0 %v352
    %354 = vmatprep.subr.mxu0 0.0
    %v355 = vand.u32 %v121, 4294901760
    %356 = vmatpush1.msra.mxu0 %v355
    %v357 = vand.u32 %v234, 4294901760
    %v358 = vsub.f32 %v234, %v357
    %v359 = vand.u32 %v358, 4294901760
    %v360 = vsub.f32 %v358, %v359
    %v361 = vand.u32 %v360, 4294901760
    %362 = vmatprep.mubr.f32.mxu0 %v361
    %v363 = vand.u32 %v233, 4294901760
    %v364 = vsub.f32 %v233, %v363
    %v365 = vand.u32 %v364, 4294901760
    %v366 = vsub.f32 %v364, %v365
    %v367 = vand.u32 %v366, 4294901760
    %368 = vmatmul.mubr.f32.gmra.mrb[0].mxu0 %v367
    %v369 = vpop.f32.mrb[0].mxu0
    %v370 = vadd.f32 %v191, %v369
    %v371 = vpop.f32.mrb[0].mxu0
    %372 = vdwg.mxu0
    %373 = vmatprep.subr.mxu0 0.0
    %v374 = vand.u32 %v90, 4294901760
    %v375 = vsub.f32 %v90, %v374
    %v376 = vand.u32 %v375, 4294901760
    %v377 = vsub.f32 %v375, %v376
    %v378 = vand.u32 %v377, 4294901760
    %379 = vmatpush1.msra.mxu0 %v378
    %380 = vmatprep.subr.mxu0 0.0
    %v381 = vand.u32 %v91, 4294901760
    %v382 = vsub.f32 %v91, %v381
    %v383 = vand.u32 %v382, 4294901760
    %v384 = vsub.f32 %v382, %v383
    %v385 = vand.u32 %v384, 4294901760
    %386 = vmatpush1.msra.mxu0 %v385
    %387 = vmatprep.subr.mxu0 0.0
    %v388 = vand.u32 %v92, 4294901760
    %v389 = vsub.f32 %v92, %v388
    %v390 = vand.u32 %v389, 4294901760
    %v391 = vsub.f32 %v389, %v390
    %v392 = vand.u32 %v391, 4294901760
    %393 = vmatpush1.msra.mxu0 %v392
    %394 = vmatprep.subr.mxu0 0.0
    %v395 = vand.u32 %v93, 4294901760
    %v396 = vsub.f32 %v93, %v395
    %v397 = vand.u32 %v396, 4294901760
    %v398 = vsub.f32 %v396, %v397
    %v399 = vand.u32 %v398, 4294901760
    %400 = vmatpush1.msra.mxu0 %v399
    %401 = vmatprep.subr.mxu0 0.0
    %v402 = vand.u32 %v94, 4294901760
    %v403 = vsub.f32 %v94, %v402
    %v404 = vand.u32 %v403, 4294901760
    %v405 = vsub.f32 %v403, %v404
    %v406 = vand.u32 %v405, 4294901760
    %407 = vmatpush1.msra.mxu0 %v406
    %408 = vmatprep.subr.mxu0 0.0
    %v409 = vand.u32 %v95, 4294901760
    %v410 = vsub.f32 %v95, %v409
    %v411 = vand.u32 %v410, 4294901760
    %v412 = vsub.f32 %v410, %v411
    %v413 = vand.u32 %v412, 4294901760
    %414 = vmatpush1.msra.mxu0 %v413
    %415 = vmatprep.subr.mxu0 0.0
    %v416 = vand.u32 %v96, 4294901760
    %v417 = vsub.f32 %v96, %v416
    %v418 = vand.u32 %v417, 4294901760
    %v419 = vsub.f32 %v417, %v418
    %v420 = vand.u32 %v419, 4294901760
    %421 = vmatpush1.msra.mxu0 %v420
    %422 = vmatprep.subr.mxu0 0.0
    %v423 = vand.u32 %v97, 4294901760
    %v424 = vsub.f32 %v97, %v423
    %v425 = vand.u32 %v424, 4294901760
    %v426 = vsub.f32 %v424, %v425
    %v427 = vand.u32 %v426, 4294901760
    %428 = vmatpush1.msra.mxu0 %v427
    %429 = vmatprep.subr.mxu0 0.0
    %v430 = vand.u32 %v98, 4294901760
    %v431 = vsub.f32 %v98, %v430
    %v432 = vand.u32 %v431, 4294901760
    %v433 = vsub.f32 %v431, %v432
    %v434 = vand.u32 %v433, 4294901760
    %435 = vmatpush1.msra.mxu0 %v434
    %436 = vmatprep.subr.mxu0 0.0
    %v437 = vand.u32 %v99, 4294901760
    %v438 = vsub.f32 %v99, %v437
    %v439 = vand.u32 %v438, 4294901760
    %v440 = vsub.f32 %v438, %v439
    %v441 = vand.u32 %v440, 4294901760
    %442 = vmatpush1.msra.mxu0 %v441
    %443 = vmatprep.subr.mxu0 0.0
    %v444 = vand.u32 %v100, 4294901760
    %v445 = vsub.f32 %v100, %v444
    %v446 = vand.u32 %v445, 4294901760
    %v447 = vsub.f32 %v445, %v446
    %v448 = vand.u32 %v447, 4294901760
    %449 = vmatpush1.msra.mxu0 %v448
    %450 = vmatprep.subr.mxu0 0.0
    %v451 = vand.u32 %v101, 4294901760
    %v452 = vsub.f32 %v101, %v451
    %v453 = vand.u32 %v452, 4294901760
    %v454 = vsub.f32 %v452, %v453
    %v455 = vand.u32 %v454, 4294901760
    %456 = vmatpush1.msra.mxu0 %v455
    %457 = vmatprep.subr.mxu0 0.0
    %v458 = vand.u32 %v102, 4294901760
    %v459 = vsub.f32 %v102, %v458
    %v460 = vand.u32 %v459, 4294901760
    %v461 = vsub.f32 %v459, %v460
    %v462 = vand.u32 %v461, 4294901760
    %463 = vmatpush1.msra.mxu0 %v462
    %464 = vmatprep.subr.mxu0 0.0
    %v465 = vand.u32 %v103, 4294901760
    %v466 = vsub.f32 %v103, %v465
    %v467 = vand.u32 %v466, 4294901760
    %v468 = vsub.f32 %v466, %v467
    %v469 = vand.u32 %v468, 4294901760
    %470 = vmatpush1.msra.mxu0 %v469
    %471 = vmatprep.subr.mxu0 0.0
    %v472 = vand.u32 %v104, 4294901760
    %v473 = vsub.f32 %v104, %v472
    %v474 = vand.u32 %v473, 4294901760
    %v475 = vsub.f32 %v473, %v474
    %v476 = vand.u32 %v475, 4294901760
    %477 = vmatpush1.msra.mxu0 %v476
    %478 = vmatprep.subr.mxu0 0.0
    %v479 = vand.u32 %v105, 4294901760
    %v480 = vsub.f32 %v105, %v479
    %v481 = vand.u32 %v480, 4294901760
    %v482 = vsub.f32 %v480, %v481
    %v483 = vand.u32 %v482, 4294901760
    %484 = vmatpush1.msra.mxu0 %v483
    %485 = vmatprep.subr.mxu0 0.0
    %v486 = vand.u32 %v106, 4294901760
    %v487 = vsub.f32 %v106, %v486
    %v488 = vand.u32 %v487, 4294901760
    %v489 = vsub.f32 %v487, %v488
    %v490 = vand.u32 %v489, 4294901760
    %491 = vmatpush1.msra.mxu0 %v490
    %492 = vmatprep.subr.mxu0 0.0
    %v493 = vand.u32 %v107, 4294901760
    %v494 = vsub.f32 %v107, %v493
    %v495 = vand.u32 %v494, 4294901760
    %v496 = vsub.f32 %v494, %v495
    %v497 = vand.u32 %v496, 4294901760
    %498 = vmatpush1.msra.mxu0 %v497
    %499 = vmatprep.subr.mxu0 0.0
    %v500 = vand.u32 %v108, 4294901760
    %v501 = vsub.f32 %v108, %v500
    %v502 = vand.u32 %v501, 4294901760
    %v503 = vsub.f32 %v501, %v502
    %v504 = vand.u32 %v503, 4294901760
    %505 = vmatpush1.msra.mxu0 %v504
    %506 = vmatprep.subr.mxu0 0.0
    %v507 = vand.u32 %v109, 4294901760
    %v508 = vsub.f32 %v109, %v507
    %v509 = vand.u32 %v508, 4294901760
    %v510 = vsub.f32 %v508, %v509
    %v511 = vand.u32 %v510, 4294901760
    %512 = vmatpush1.msra.mxu0 %v511
    %513 = vmatprep.subr.mxu0 0.0
    %v514 = vand.u32 %v110, 4294901760
    %v515 = vsub.f32 %v110, %v514
    %v516 = vand.u32 %v515, 4294901760
    %v517 = vsub.f32 %v515, %v516
    %v518 = vand.u32 %v517, 4294901760
    %519 = vmatpush1.msra.mxu0 %v518
    %520 = vmatprep.subr.mxu0 0.0
    %v521 = vand.u32 %v111, 4294901760
    %v522 = vsub.f32 %v111, %v521
    %v523 = vand.u32 %v522, 4294901760
    %v524 = vsub.f32 %v522, %v523
    %v525 = vand.u32 %v524, 4294901760
    %526 = vmatpush1.msra.mxu0 %v525
    %527 = vmatprep.subr.mxu0 0.0
    %v528 = vand.u32 %v112, 4294901760
    %v529 = vsub.f32 %v112, %v528
    %v530 = vand.u32 %v529, 4294901760
    %v531 = vsub.f32 %v529, %v530
    %v532 = vand.u32 %v531, 4294901760
    %533 = vmatpush1.msra.mxu0 %v532
    %534 = vmatprep.subr.mxu0 0.0
    %v535 = vand.u32 %v113, 4294901760
    %v536 = vsub.f32 %v113, %v535
    %v537 = vand.u32 %v536, 4294901760
    %v538 = vsub.f32 %v536, %v537
    %v539 = vand.u32 %v538, 4294901760
    %540 = vmatpush1.msra.mxu0 %v539
    %541 = vmatprep.subr.mxu0 0.0
    %v542 = vand.u32 %v114, 4294901760
    %v543 = vsub.f32 %v114, %v542
    %v544 = vand.u32 %v543, 4294901760
    %v545 = vsub.f32 %v543, %v544
    %v546 = vand.u32 %v545, 4294901760
    %547 = vmatpush1.msra.mxu0 %v546
    %548 = vmatprep.subr.mxu0 0.0
    %v549 = vand.u32 %v115, 4294901760
    %v550 = vsub.f32 %v115, %v549
    %v551 = vand.u32 %v550, 4294901760
    %v552 = vsub.f32 %v550, %v551
    %v553 = vand.u32 %v552, 4294901760
    %554 = vmatpush1.msra.mxu0 %v553
    %555 = vmatprep.subr.mxu0 0.0
    %v556 = vand.u32 %v116, 4294901760
    %v557 = vsub.f32 %v116, %v556
    %v558 = vand.u32 %v557, 4294901760
    %v559 = vsub.f32 %v557, %v558
    %v560 = vand.u32 %v559, 4294901760
    %561 = vmatpush1.msra.mxu0 %v560
    %562 = vmatprep.subr.mxu0 0.0
    %v563 = vand.u32 %v117, 4294901760
    %v564 = vsub.f32 %v117, %v563
    %v565 = vand.u32 %v564, 4294901760
    %v566 = vsub.f32 %v564, %v565
    %v567 = vand.u32 %v566, 4294901760
    %568 = vmatpush1.msra.mxu0 %v567
    %569 = vmatprep.subr.mxu0 0.0
    %v570 = vand.u32 %v118, 4294901760
    %v571 = vsub.f32 %v118, %v570
    %v572 = vand.u32 %v571, 4294901760
    %v573 = vsub.f32 %v571, %v572
    %v574 = vand.u32 %v573, 4294901760
    %575 = vmatpush1.msra.mxu0 %v574
    %576 = vmatprep.subr.mxu0 0.0
    %v577 = vand.u32 %v119, 4294901760
    %v578 = vsub.f32 %v119, %v577
    %v579 = vand.u32 %v578, 4294901760
    %v580 = vsub.f32 %v578, %v579
    %v581 = vand.u32 %v580, 4294901760
    %582 = vmatpush1.msra.mxu0 %v581
    %583 = vmatprep.subr.mxu0 0.0
    %v584 = vand.u32 %v120, 4294901760
    %v585 = vsub.f32 %v120, %v584
    %v586 = vand.u32 %v585, 4294901760
    %v587 = vsub.f32 %v585, %v586
    %v588 = vand.u32 %v587, 4294901760
    %589 = vmatpush1.msra.mxu0 %v588
    %590 = vmatprep.subr.mxu0 0.0
    %v591 = vand.u32 %v121, 4294901760
    %v592 = vsub.f32 %v121, %v591
    %v593 = vand.u32 %v592, 4294901760
    %v594 = vsub.f32 %v592, %v593
    %v595 = vand.u32 %v594, 4294901760
    %596 = vmatpush1.msra.mxu0 %v595
    %v597 = vand.u32 %v234, 4294901760
    %598 = vmatprep.mubr.f32.mxu0 %v597
    %v599 = vand.u32 %v233, 4294901760
    %600 = vmatmul.mubr.f32.gmra.mrb[0].mxu0 %v599
    %v601 = vpop.f32.mrb[0].mxu0
    %v602 = vadd.f32 %v370, %v601
    %v603 = vpop.f32.mrb[0].mxu0
    %604 = vdwg.mxu0
    %605 = vmatprep.subr.mxu0 0.0
    %v606 = vand.u32 %v90, 4294901760
    %v607 = vsub.f32 %v90, %v606
    %608 = vmatpush1.msra.mxu0 %v607
    %609 = vmatprep.subr.mxu0 0.0
    %v610 = vand.u32 %v91, 4294901760
    %v611 = vsub.f32 %v91, %v610
    %612 = vmatpush1.msra.mxu0 %v611
    %613 = vmatprep.subr.mxu0 0.0
    %v614 = vand.u32 %v92, 4294901760
    %v615 = vsub.f32 %v92, %v614
    %616 = vmatpush1.msra.mxu0 %v615
    %617 = vmatprep.subr.mxu0 0.0
    %v618 = vand.u32 %v93, 4294901760
    %v619 = vsub.f32 %v93, %v618
    %620 = vmatpush1.msra.mxu0 %v619
    %621 = vmatprep.subr.mxu0 0.0
    %v622 = vand.u32 %v94, 4294901760
    %v623 = vsub.f32 %v94, %v622
    %624 = vmatpush1.msra.mxu0 %v623
    %625 = vmatprep.subr.mxu0 0.0
    %v626 = vand.u32 %v95, 4294901760
    %v627 = vsub.f32 %v95, %v626
    %628 = vmatpush1.msra.mxu0 %v627
    %629 = vmatprep.subr.mxu0 0.0
    %v630 = vand.u32 %v96, 4294901760
    %v631 = vsub.f32 %v96, %v630
    %632 = vmatpush1.msra.mxu0 %v631
    %633 = vmatprep.subr.mxu0 0.0
    %v634 = vand.u32 %v97, 4294901760
    %v635 = vsub.f32 %v97, %v634
    %636 = vmatpush1.msra.mxu0 %v635
    %637 = vmatprep.subr.mxu0 0.0
    %v638 = vand.u32 %v98, 4294901760
    %v639 = vsub.f32 %v98, %v638
    %640 = vmatpush1.msra.mxu0 %v639
    %641 = vmatprep.subr.mxu0 0.0
    %v642 = vand.u32 %v99, 4294901760
    %v643 = vsub.f32 %v99, %v642
    %644 = vmatpush1.msra.mxu0 %v643
    %645 = vmatprep.subr.mxu0 0.0
    %v646 = vand.u32 %v100, 4294901760
    %v647 = vsub.f32 %v100, %v646
    %648 = vmatpush1.msra.mxu0 %v647
    %649 = vmatprep.subr.mxu0 0.0
    %v650 = vand.u32 %v101, 4294901760
    %v651 = vsub.f32 %v101, %v650
    %652 = vmatpush1.msra.mxu0 %v651
    %653 = vmatprep.subr.mxu0 0.0
    %v654 = vand.u32 %v102, 4294901760
    %v655 = vsub.f32 %v102, %v654
    %656 = vmatpush1.msra.mxu0 %v655
    %657 = vmatprep.subr.mxu0 0.0
    %v658 = vand.u32 %v103, 4294901760
    %v659 = vsub.f32 %v103, %v658
    %660 = vmatpush1.msra.mxu0 %v659
    %661 = vmatprep.subr.mxu0 0.0
    %v662 = vand.u32 %v104, 4294901760
    %v663 = vsub.f32 %v104, %v662
    %664 = vmatpush1.msra.mxu0 %v663
    %665 = vmatprep.subr.mxu0 0.0
    %v666 = vand.u32 %v105, 4294901760
    %v667 = vsub.f32 %v105, %v666
    %668 = vmatpush1.msra.mxu0 %v667
    %669 = vmatprep.subr.mxu0 0.0
    %v670 = vand.u32 %v106, 4294901760
    %v671 = vsub.f32 %v106, %v670
    %672 = vmatpush1.msra.mxu0 %v671
    %673 = vmatprep.subr.mxu0 0.0
    %v674 = vand.u32 %v107, 4294901760
    %v675 = vsub.f32 %v107, %v674
    %676 = vmatpush1.msra.mxu0 %v675
    %677 = vmatprep.subr.mxu0 0.0
    %v678 = vand.u32 %v108, 4294901760
    %v679 = vsub.f32 %v108, %v678
    %680 = vmatpush1.msra.mxu0 %v679
    %681 = vmatprep.subr.mxu0 0.0
    %v682 = vand.u32 %v109, 4294901760
    %v683 = vsub.f32 %v109, %v682
    %684 = vmatpush1.msra.mxu0 %v683
    %685 = vmatprep.subr.mxu0 0.0
    %v686 = vand.u32 %v110, 4294901760
    %v687 = vsub.f32 %v110, %v686
    %688 = vmatpush1.msra.mxu0 %v687
    %689 = vmatprep.subr.mxu0 0.0
    %v690 = vand.u32 %v111, 4294901760
    %v691 = vsub.f32 %v111, %v690
    %692 = vmatpush1.msra.mxu0 %v691
    %693 = vmatprep.subr.mxu0 0.0
    %v694 = vand.u32 %v112, 4294901760
    %v695 = vsub.f32 %v112, %v694
    %696 = vmatpush1.msra.mxu0 %v695
    %697 = vmatprep.subr.mxu0 0.0
    %v698 = vand.u32 %v113, 4294901760
    %v699 = vsub.f32 %v113, %v698
    %700 = vmatpush1.msra.mxu0 %v699
    %701 = vmatprep.subr.mxu0 0.0
    %v702 = vand.u32 %v114, 4294901760
    %v703 = vsub.f32 %v114, %v702
    %704 = vmatpush1.msra.mxu0 %v703
    %705 = vmatprep.subr.mxu0 0.0
    %v706 = vand.u32 %v115, 4294901760
    %v707 = vsub.f32 %v115, %v706
    %708 = vmatpush1.msra.mxu0 %v707
    %709 = vmatprep.subr.mxu0 0.0
    %v710 = vand.u32 %v116, 4294901760
    %v711 = vsub.f32 %v116, %v710
    %712 = vmatpush1.msra.mxu0 %v711
    %713 = vmatprep.subr.mxu0 0.0
    %v714 = vand.u32 %v117, 4294901760
    %v715 = vsub.f32 %v117, %v714
    %716 = vmatpush1.msra.mxu0 %v715
    %717 = vmatprep.subr.mxu0 0.0
    %v718 = vand.u32 %v118, 4294901760
    %v719 = vsub.f32 %v118, %v718
    %720 = vmatpush1.msra.mxu0 %v719
    %721 = vmatprep.subr.mxu0 0.0
    %v722 = vand.u32 %v119, 4294901760
    %v723 = vsub.f32 %v119, %v722
    %724 = vmatpush1.msra.mxu0 %v723
    %725 = vmatprep.subr.mxu0 0.0
    %v726 = vand.u32 %v120, 4294901760
    %v727 = vsub.f32 %v120, %v726
    %728 = vmatpush1.msra.mxu0 %v727
    %729 = vmatprep.subr.mxu0 0.0
    %v730 = vand.u32 %v121, 4294901760
    %v731 = vsub.f32 %v121, %v730
    %732 = vmatpush1.msra.mxu0 %v731
    %v733 = vand.u32 %v234, 4294901760
    %v734 = vsub.f32 %v234, %v733
    %735 = vmatprep.mubr.f32.mxu0 %v734
    %v736 = vand.u32 %v233, 4294901760
    %v737 = vsub.f32 %v233, %v736
    %738 = vmatmul.mubr.f32.gmra.mrb[0].mxu0 %v737
    %v739 = vpop.f32.mrb[0].mxu0
    %v740 = vadd.f32 %v602, %v739
    %v741 = vpop.f32.mrb[0].mxu0
    %742 = vdwg.mxu0
    %743 = vmatprep.subr.mxu0 0.0
    %v744 = vand.u32 %v90, 4294901760
    %745 = vmatpush1.msra.mxu0 %v744
    %746 = vmatprep.subr.mxu0 0.0
    %v747 = vand.u32 %v91, 4294901760
    %748 = vmatpush1.msra.mxu0 %v747
    %749 = vmatprep.subr.mxu0 0.0
    %v750 = vand.u32 %v92, 4294901760
    %751 = vmatpush1.msra.mxu0 %v750
    %752 = vmatprep.subr.mxu0 0.0
    %v753 = vand.u32 %v93, 4294901760
    %754 = vmatpush1.msra.mxu0 %v753
    %755 = vmatprep.subr.mxu0 0.0
    %v756 = vand.u32 %v94, 4294901760
    %757 = vmatpush1.msra.mxu0 %v756
    %758 = vmatprep.subr.mxu0 0.0
    %v759 = vand.u32 %v95, 4294901760
    %760 = vmatpush1.msra.mxu0 %v759
    %761 = vmatprep.subr.mxu0 0.0
    %v762 = vand.u32 %v96, 4294901760
    %763 = vmatpush1.msra.mxu0 %v762
    %764 = vmatprep.subr.mxu0 0.0
    %v765 = vand.u32 %v97, 4294901760
    %766 = vmatpush1.msra.mxu0 %v765
    %767 = vmatprep.subr.mxu0 0.0
    %v768 = vand.u32 %v98, 4294901760
    %769 = vmatpush1.msra.mxu0 %v768
    %770 = vmatprep.subr.mxu0 0.0
    %v771 = vand.u32 %v99, 4294901760
    %772 = vmatpush1.msra.mxu0 %v771
    %773 = vmatprep.subr.mxu0 0.0
    %v774 = vand.u32 %v100, 4294901760
    %775 = vmatpush1.msra.mxu0 %v774
    %776 = vmatprep.subr.mxu0 0.0
    %v777 = vand.u32 %v101, 4294901760
    %778 = vmatpush1.msra.mxu0 %v777
    %779 = vmatprep.subr.mxu0 0.0
    %v780 = vand.u32 %v102, 4294901760
    %781 = vmatpush1.msra.mxu0 %v780
    %782 = vmatprep.subr.mxu0 0.0
    %v783 = vand.u32 %v103, 4294901760
    %784 = vmatpush1.msra.mxu0 %v783
    %785 = vmatprep.subr.mxu0 0.0
    %v786 = vand.u32 %v104, 4294901760
    %787 = vmatpush1.msra.mxu0 %v786
    %788 = vmatprep.subr.mxu0 0.0
    %v789 = vand.u32 %v105, 4294901760
    %790 = vmatpush1.msra.mxu0 %v789
    %791 = vmatprep.subr.mxu0 0.0
    %v792 = vand.u32 %v106, 4294901760
    %793 = vmatpush1.msra.mxu0 %v792
    %794 = vmatprep.subr.mxu0 0.0
    %v795 = vand.u32 %v107, 4294901760
    %796 = vmatpush1.msra.mxu0 %v795
    %797 = vmatprep.subr.mxu0 0.0
    %v798 = vand.u32 %v108, 4294901760
    %799 = vmatpush1.msra.mxu0 %v798
    %800 = vmatprep.subr.mxu0 0.0
    %v801 = vand.u32 %v109, 4294901760
    %802 = vmatpush1.msra.mxu0 %v801
    %803 = vmatprep.subr.mxu0 0.0
    %v804 = vand.u32 %v110, 4294901760
    %805 = vmatpush1.msra.mxu0 %v804
    %806 = vmatprep.subr.mxu0 0.0
    %v807 = vand.u32 %v111, 4294901760
    %808 = vmatpush1.msra.mxu0 %v807
    %809 = vmatprep.subr.mxu0 0.0
    %v810 = vand.u32 %v112, 4294901760
    %811 = vmatpush1.msra.mxu0 %v810
    %812 = vmatprep.subr.mxu0 0.0
    %v813 = vand.u32 %v113, 4294901760
    %814 = vmatpush1.msra.mxu0 %v813
    %815 = vmatprep.subr.mxu0 0.0
    %v816 = vand.u32 %v114, 4294901760
    %817 = vmatpush1.msra.mxu0 %v816
    %818 = vmatprep.subr.mxu0 0.0
    %v819 = vand.u32 %v115, 4294901760
    %820 = vmatpush1.msra.mxu0 %v819
    %821 = vmatprep.subr.mxu0 0.0
    %v822 = vand.u32 %v116, 4294901760
    %823 = vmatpush1.msra.mxu0 %v822
    %824 = vmatprep.subr.mxu0 0.0
    %v825 = vand.u32 %v117, 4294901760
    %826 = vmatpush1.msra.mxu0 %v825
    %827 = vmatprep.subr.mxu0 0.0
    %v828 = vand.u32 %v118, 4294901760
    %829 = vmatpush1.msra.mxu0 %v828
    %830 = vmatprep.subr.mxu0 0.0
    %v831 = vand.u32 %v119, 4294901760
    %832 = vmatpush1.msra.mxu0 %v831
    %833 = vmatprep.subr.mxu0 0.0
    %v834 = vand.u32 %v120, 4294901760
    %835 = vmatpush1.msra.mxu0 %v834
    %836 = vmatprep.subr.mxu0 0.0
    %v837 = vand.u32 %v121, 4294901760
    %838 = vmatpush1.msra.mxu0 %v837
    %v839 = vand.u32 %v234, 4294901760
    %v840 = vsub.f32 %v234, %v839
    %v841 = vand.u32 %v840, 4294901760
    %842 = vmatprep.mubr.f32.mxu0 %v841
    %v843 = vand.u32 %v233, 4294901760
    %v844 = vsub.f32 %v233, %v843
    %v845 = vand.u32 %v844, 4294901760
    %846 = vmatmul.mubr.f32.gmra.mrb[0].mxu0 %v845
    %v847 = vpop.f32.mrb[0].mxu0
    %v848 = vadd.f32 %v740, %v847
    %v849 = vpop.f32.mrb[0].mxu0
    %850 = vdwg.mxu0
    %851 = vmatprep.subr.mxu0 0.0
    %v852 = vand.u32 %v90, 4294901760
    %v853 = vsub.f32 %v90, %v852
    %v854 = vand.u32 %v853, 4294901760
    %855 = vmatpush1.msra.mxu0 %v854
    %856 = vmatprep.subr.mxu0 0.0
    %v857 = vand.u32 %v91, 4294901760
    %v858 = vsub.f32 %v91, %v857
    %v859 = vand.u32 %v858, 4294901760
    %860 = vmatpush1.msra.mxu0 %v859
    %861 = vmatprep.subr.mxu0 0.0
    %v862 = vand.u32 %v92, 4294901760
    %v863 = vsub.f32 %v92, %v862
    %v864 = vand.u32 %v863, 4294901760
    %865 = vmatpush1.msra.mxu0 %v864
    %866 = vmatprep.subr.mxu0 0.0
    %v867 = vand.u32 %v93, 4294901760
    %v868 = vsub.f32 %v93, %v867
    %v869 = vand.u32 %v868, 4294901760
    %870 = vmatpush1.msra.mxu0 %v869
    %871 = vmatprep.subr.mxu0 0.0
    %v872 = vand.u32 %v94, 4294901760
    %v873 = vsub.f32 %v94, %v872
    %v874 = vand.u32 %v873, 4294901760
    %875 = vmatpush1.msra.mxu0 %v874
    %876 = vmatprep.subr.mxu0 0.0
    %v877 = vand.u32 %v95, 4294901760
    %v878 = vsub.f32 %v95, %v877
    %v879 = vand.u32 %v878, 4294901760
    %880 = vmatpush1.msra.mxu0 %v879
    %881 = vmatprep.subr.mxu0 0.0
    %v882 = vand.u32 %v96, 4294901760
    %v883 = vsub.f32 %v96, %v882
    %v884 = vand.u32 %v883, 4294901760
    %885 = vmatpush1.msra.mxu0 %v884
    %886 = vmatprep.subr.mxu0 0.0
    %v887 = vand.u32 %v97, 4294901760
    %v888 = vsub.f32 %v97, %v887
    %v889 = vand.u32 %v888, 4294901760
    %890 = vmatpush1.msra.mxu0 %v889
    %891 = vmatprep.subr.mxu0 0.0
    %v892 = vand.u32 %v98, 4294901760
    %v893 = vsub.f32 %v98, %v892
    %v894 = vand.u32 %v893, 4294901760
    %895 = vmatpush1.msra.mxu0 %v894
    %896 = vmatprep.subr.mxu0 0.0
    %v897 = vand.u32 %v99, 4294901760
    %v898 = vsub.f32 %v99, %v897
    %v899 = vand.u32 %v898, 4294901760
    %900 = vmatpush1.msra.mxu0 %v899
    %901 = vmatprep.subr.mxu0 0.0
    %v902 = vand.u32 %v100, 4294901760
    %v903 = vsub.f32 %v100, %v902
    %v904 = vand.u32 %v903, 4294901760
    %905 = vmatpush1.msra.mxu0 %v904
    %906 = vmatprep.subr.mxu0 0.0
    %v907 = vand.u32 %v101, 4294901760
    %v908 = vsub.f32 %v101, %v907
    %v909 = vand.u32 %v908, 4294901760
    %910 = vmatpush1.msra.mxu0 %v909
    %911 = vmatprep.subr.mxu0 0.0
    %v912 = vand.u32 %v102, 4294901760
    %v913 = vsub.f32 %v102, %v912
    %v914 = vand.u32 %v913, 4294901760
    %915 = vmatpush1.msra.mxu0 %v914
    %916 = vmatprep.subr.mxu0 0.0
    %v917 = vand.u32 %v103, 4294901760
    %v918 = vsub.f32 %v103, %v917
    %v919 = vand.u32 %v918, 4294901760
    %920 = vmatpush1.msra.mxu0 %v919
    %921 = vmatprep.subr.mxu0 0.0
    %v922 = vand.u32 %v104, 4294901760
    %v923 = vsub.f32 %v104, %v922
    %v924 = vand.u32 %v923, 4294901760
    %925 = vmatpush1.msra.mxu0 %v924
    %926 = vmatprep.subr.mxu0 0.0
    %v927 = vand.u32 %v105, 4294901760
    %v928 = vsub.f32 %v105, %v927
    %v929 = vand.u32 %v928, 4294901760
    %930 = vmatpush1.msra.mxu0 %v929
    %931 = vmatprep.subr.mxu0 0.0
    %v932 = vand.u32 %v106, 4294901760
    %v933 = vsub.f32 %v106, %v932
    %v934 = vand.u32 %v933, 4294901760
    %935 = vmatpush1.msra.mxu0 %v934
    %936 = vmatprep.subr.mxu0 0.0
    %v937 = vand.u32 %v107, 4294901760
    %v938 = vsub.f32 %v107, %v937
    %v939 = vand.u32 %v938, 4294901760
    %940 = vmatpush1.msra.mxu0 %v939
    %941 = vmatprep.subr.mxu0 0.0
    %v942 = vand.u32 %v108, 4294901760
    %v943 = vsub.f32 %v108, %v942
    %v944 = vand.u32 %v943, 4294901760
    %945 = vmatpush1.msra.mxu0 %v944
    %946 = vmatprep.subr.mxu0 0.0
    %v947 = vand.u32 %v109, 4294901760
    %v948 = vsub.f32 %v109, %v947
    %v949 = vand.u32 %v948, 4294901760
    %950 = vmatpush1.msra.mxu0 %v949
    %951 = vmatprep.subr.mxu0 0.0
    %v952 = vand.u32 %v110, 4294901760
    %v953 = vsub.f32 %v110, %v952
    %v954 = vand.u32 %v953, 4294901760
    %955 = vmatpush1.msra.mxu0 %v954
    %956 = vmatprep.subr.mxu0 0.0
    %v957 = vand.u32 %v111, 4294901760
    %v958 = vsub.f32 %v111, %v957
    %v959 = vand.u32 %v958, 4294901760
    %960 = vmatpush1.msra.mxu0 %v959
    %961 = vmatprep.subr.mxu0 0.0
    %v962 = vand.u32 %v112, 4294901760
    %v963 = vsub.f32 %v112, %v962
    %v964 = vand.u32 %v963, 4294901760
    %965 = vmatpush1.msra.mxu0 %v964
    %966 = vmatprep.subr.mxu0 0.0
    %v967 = vand.u32 %v113, 4294901760
    %v968 = vsub.f32 %v113, %v967
    %v969 = vand.u32 %v968, 4294901760
    %970 = vmatpush1.msra.mxu0 %v969
    %971 = vmatprep.subr.mxu0 0.0
    %v972 = vand.u32 %v114, 4294901760
    %v973 = vsub.f32 %v114, %v972
    %v974 = vand.u32 %v973, 4294901760
    %975 = vmatpush1.msra.mxu0 %v974
    %976 = vmatprep.subr.mxu0 0.0
    %v977 = vand.u32 %v115, 4294901760
    %v978 = vsub.f32 %v115, %v977
    %v979 = vand.u32 %v978, 4294901760
    %980 = vmatpush1.msra.mxu0 %v979
    %981 = vmatprep.subr.mxu0 0.0
    %v982 = vand.u32 %v116, 4294901760
    %v983 = vsub.f32 %v116, %v982
    %v984 = vand.u32 %v983, 4294901760
    %985 = vmatpush1.msra.mxu0 %v984
    %986 = vmatprep.subr.mxu0 0.0
    %v987 = vand.u32 %v117, 4294901760
    %v988 = vsub.f32 %v117, %v987
    %v989 = vand.u32 %v988, 4294901760
    %990 = vmatpush1.msra.mxu0 %v989
    %991 = vmatprep.subr.mxu0 0.0
    %v992 = vand.u32 %v118, 4294901760
    %v993 = vsub.f32 %v118, %v992
    %v994 = vand.u32 %v993, 4294901760
    %995 = vmatpush1.msra.mxu0 %v994
    %996 = vmatprep.subr.mxu0 0.0
    %v997 = vand.u32 %v119, 4294901760
    %v998 = vsub.f32 %v119, %v997
    %v999 = vand.u32 %v998, 4294901760
    %1000 = vmatpush1.msra.mxu0 %v999
    %1001 = vmatprep.subr.mxu0 0.0
    %v1002 = vand.u32 %v120, 4294901760
    %v1003 = vsub.f32 %v120, %v1002
    %v1004 = vand.u32 %v1003, 4294901760
    %1005 = vmatpush1.msra.mxu0 %v1004
    %1006 = vmatprep.subr.mxu0 0.0
    %v1007 = vand.u32 %v121, 4294901760
    %v1008 = vsub.f32 %v121, %v1007
    %v1009 = vand.u32 %v1008, 4294901760
    %1010 = vmatpush1.msra.mxu0 %v1009
    %v1011 = vand.u32 %v234, 4294901760
    %1012 = vmatprep.mubr.f32.mxu0 %v1011
    %v1013 = vand.u32 %v233, 4294901760
    %1014 = vmatmul.mubr.f32.gmra.mrb[0].mxu0 %v1013
    %v1015 = vpop.f32.mrb[0].mxu0
    %v1016 = vadd.f32 %v848, %v1015
    %v1017 = vpop.f32.mrb[0].mxu0
    %1018 = vdwg.mxu0
    %1019 = vmatprep.subr.mxu0 0.0
    %v1020 = vand.u32 %v90, 4294901760
    %1021 = vmatpush1.msra.mxu0 %v1020
    %1022 = vmatprep.subr.mxu0 0.0
    %v1023 = vand.u32 %v91, 4294901760
    %1024 = vmatpush1.msra.mxu0 %v1023
    %1025 = vmatprep.subr.mxu0 0.0
    %v1026 = vand.u32 %v92, 4294901760
    %1027 = vmatpush1.msra.mxu0 %v1026
    %1028 = vmatprep.subr.mxu0 0.0
    %v1029 = vand.u32 %v93, 4294901760
    %1030 = vmatpush1.msra.mxu0 %v1029
    %1031 = vmatprep.subr.mxu0 0.0
    %v1032 = vand.u32 %v94, 4294901760
    %1033 = vmatpush1.msra.mxu0 %v1032
    %1034 = vmatprep.subr.mxu0 0.0
    %v1035 = vand.u32 %v95, 4294901760
    %1036 = vmatpush1.msra.mxu0 %v1035
    %1037 = vmatprep.subr.mxu0 0.0
    %v1038 = vand.u32 %v96, 4294901760
    %1039 = vmatpush1.msra.mxu0 %v1038
    %1040 = vmatprep.subr.mxu0 0.0
    %v1041 = vand.u32 %v97, 4294901760
    %1042 = vmatpush1.msra.mxu0 %v1041
    %1043 = vmatprep.subr.mxu0 0.0
    %v1044 = vand.u32 %v98, 4294901760
    %1045 = vmatpush1.msra.mxu0 %v1044
    %1046 = vmatprep.subr.mxu0 0.0
    %v1047 = vand.u32 %v99, 4294901760
    %1048 = vmatpush1.msra.mxu0 %v1047
    %1049 = vmatprep.subr.mxu0 0.0
    %v1050 = vand.u32 %v100, 4294901760
    %1051 = vmatpush1.msra.mxu0 %v1050
    %1052 = vmatprep.subr.mxu0 0.0
    %v1053 = vand.u32 %v101, 4294901760
    %1054 = vmatpush1.msra.mxu0 %v1053
    %1055 = vmatprep.subr.mxu0 0.0
    %v1056 = vand.u32 %v102, 4294901760
    %1057 = vmatpush1.msra.mxu0 %v1056
    %1058 = vmatprep.subr.mxu0 0.0
    %v1059 = vand.u32 %v103, 4294901760
    %1060 = vmatpush1.msra.mxu0 %v1059
    %1061 = vmatprep.subr.mxu0 0.0
    %v1062 = vand.u32 %v104, 4294901760
    %1063 = vmatpush1.msra.mxu0 %v1062
    %1064 = vmatprep.subr.mxu0 0.0
    %v1065 = vand.u32 %v105, 4294901760
    %1066 = vmatpush1.msra.mxu0 %v1065
    %1067 = vmatprep.subr.mxu0 0.0
    %v1068 = vand.u32 %v106, 4294901760
    %1069 = vmatpush1.msra.mxu0 %v1068
    %1070 = vmatprep.subr.mxu0 0.0
    %v1071 = vand.u32 %v107, 4294901760
    %1072 = vmatpush1.msra.mxu0 %v1071
    %1073 = vmatprep.subr.mxu0 0.0
    %v1074 = vand.u32 %v108, 4294901760
    %1075 = vmatpush1.msra.mxu0 %v1074
    %1076 = vmatprep.subr.mxu0 0.0
    %v1077 = vand.u32 %v109, 4294901760
    %1078 = vmatpush1.msra.mxu0 %v1077
    %1079 = vmatprep.subr.mxu0 0.0
    %v1080 = vand.u32 %v110, 4294901760
    %1081 = vmatpush1.msra.mxu0 %v1080
    %1082 = vmatprep.subr.mxu0 0.0
    %v1083 = vand.u32 %v111, 4294901760
    %1084 = vmatpush1.msra.mxu0 %v1083
    %1085 = vmatprep.subr.mxu0 0.0
    %v1086 = vand.u32 %v112, 4294901760
    %1087 = vmatpush1.msra.mxu0 %v1086
    %1088 = vmatprep.subr.mxu0 0.0
    %v1089 = vand.u32 %v113, 4294901760
    %1090 = vmatpush1.msra.mxu0 %v1089
    %1091 = vmatprep.subr.mxu0 0.0
    %v1092 = vand.u32 %v114, 4294901760
    %1093 = vmatpush1.msra.mxu0 %v1092
    %1094 = vmatprep.subr.mxu0 0.0
    %v1095 = vand.u32 %v115, 4294901760
    %1096 = vmatpush1.msra.mxu0 %v1095
    %1097 = vmatprep.subr.mxu0 0.0
    %v1098 = vand.u32 %v116, 4294901760
    %1099 = vmatpush1.msra.mxu0 %v1098
    %1100 = vmatprep.subr.mxu0 0.0
    %v1101 = vand.u32 %v117, 4294901760
    %1102 = vmatpush1.msra.mxu0 %v1101
    %1103 = vmatprep.subr.mxu0 0.0
    %v1104 = vand.u32 %v118, 4294901760
    %1105 = vmatpush1.msra.mxu0 %v1104
    %1106 = vmatprep.subr.mxu0 0.0
    %v1107 = vand.u32 %v119, 4294901760
    %1108 = vmatpush1.msra.mxu0 %v1107
    %1109 = vmatprep.subr.mxu0 0.0
    %v1110 = vand.u32 %v120, 4294901760
    %1111 = vmatpush1.msra.mxu0 %v1110
    %1112 = vmatprep.subr.mxu0 0.0
    %v1113 = vand.u32 %v121, 4294901760
    %1114 = vmatpush1.msra.mxu0 %v1113
    %v1115 = vand.u32 %v234, 4294901760
    %1116 = vmatprep.mubr.f32.mxu0 %v1115
    %v1117 = vand.u32 %v233, 4294901760
    %1118 = vmatmul.mubr.f32.gmra.mrb[0].mxu0 %v1117
    %v1119 = vpop.f32.mrb[0].mxu0
    %v1120 = vadd.f32 %v1016, %v1119
    %v1121 = vpop.f32.mrb[0].mxu0
    %1122 = vdwg.mxu0
    %1123 = vmatprep.subr.mxu0 0.0
    %v1124 = vand.u32 %v122, 4294901760
    %1125 = vmatpush1.msra.mxu0 %v1124
    %1126 = vmatprep.subr.mxu0 0.0
    %v1127 = vand.u32 %v123, 4294901760
    %1128 = vmatpush1.msra.mxu0 %v1127
    %1129 = vmatprep.subr.mxu0 0.0
    %v1130 = vand.u32 %v124, 4294901760
    %1131 = vmatpush1.msra.mxu0 %v1130
    %1132 = vmatprep.subr.mxu0 0.0
    %v1133 = vand.u32 %v125, 4294901760
    %1134 = vmatpush1.msra.mxu0 %v1133
    %1135 = vmatprep.subr.mxu0 0.0
    %v1136 = vand.u32 %v126, 4294901760
    %1137 = vmatpush1.msra.mxu0 %v1136
    %1138 = vmatprep.subr.mxu0 0.0
    %v1139 = vand.u32 %v127, 4294901760
    %1140 = vmatpush1.msra.mxu0 %v1139
    %1141 = vmatprep.subr.mxu0 0.0
    %v1142 = vand.u32 %v128, 4294901760
    %1143 = vmatpush1.msra.mxu0 %v1142
    %1144 = vmatprep.subr.mxu0 0.0
    %v1145 = vand.u32 %v129, 4294901760
    %1146 = vmatpush1.msra.mxu0 %v1145
    %1147 = vmatprep.subr.mxu0 0.0
    %v1148 = vand.u32 %v130, 4294901760
    %1149 = vmatpush1.msra.mxu0 %v1148
    %1150 = vmatprep.subr.mxu0 0.0
    %v1151 = vand.u32 %v131, 4294901760
    %1152 = vmatpush1.msra.mxu0 %v1151
    %1153 = vmatprep.subr.mxu0 0.0
    %v1154 = vand.u32 %v132, 4294901760
    %1155 = vmatpush1.msra.mxu0 %v1154
    %1156 = vmatprep.subr.mxu0 0.0
    %v1157 = vand.u32 %v133, 4294901760
    %1158 = vmatpush1.msra.mxu0 %v1157
    %1159 = vmatprep.subr.mxu0 0.0
    %v1160 = vand.u32 %v134, 4294901760
    %1161 = vmatpush1.msra.mxu0 %v1160
    %1162 = vmatprep.subr.mxu0 0.0
    %v1163 = vand.u32 %v135, 4294901760
    %1164 = vmatpush1.msra.mxu0 %v1163
    %1165 = vmatprep.subr.mxu0 0.0
    %v1166 = vand.u32 %v136, 4294901760
    %1167 = vmatpush1.msra.mxu0 %v1166
    %1168 = vmatprep.subr.mxu0 0.0
    %v1169 = vand.u32 %v137, 4294901760
    %1170 = vmatpush1.msra.mxu0 %v1169
    %1171 = vmatprep.subr.mxu0 0.0
    %v1172 = vand.u32 %v138, 4294901760
    %1173 = vmatpush1.msra.mxu0 %v1172
    %1174 = vmatprep.subr.mxu0 0.0
    %v1175 = vand.u32 %v139, 4294901760
    %1176 = vmatpush1.msra.mxu0 %v1175
    %1177 = vmatprep.subr.mxu0 0.0
    %v1178 = vand.u32 %v140, 4294901760
    %1179 = vmatpush1.msra.mxu0 %v1178
    %1180 = vmatprep.subr.mxu0 0.0
    %v1181 = vand.u32 %v141, 4294901760
    %1182 = vmatpush1.msra.mxu0 %v1181
    %1183 = vmatprep.subr.mxu0 0.0
    %v1184 = vand.u32 %v142, 4294901760
    %1185 = vmatpush1.msra.mxu0 %v1184
    %1186 = vmatprep.subr.mxu0 0.0
    %v1187 = vand.u32 %v143, 4294901760
    %1188 = vmatpush1.msra.mxu0 %v1187
    %1189 = vmatprep.subr.mxu0 0.0
    %v1190 = vand.u32 %v144, 4294901760
    %1191 = vmatpush1.msra.mxu0 %v1190
    %1192 = vmatprep.subr.mxu0 0.0
    %v1193 = vand.u32 %v145, 4294901760
    %1194 = vmatpush1.msra.mxu0 %v1193
    %1195 = vmatprep.subr.mxu0 0.0
    %v1196 = vand.u32 %v146, 4294901760
    %1197 = vmatpush1.msra.mxu0 %v1196
    %1198 = vmatprep.subr.mxu0 0.0
    %v1199 = vand.u32 %v147, 4294901760
    %1200 = vmatpush1.msra.mxu0 %v1199
    %1201 = vmatprep.subr.mxu0 0.0
    %v1202 = vand.u32 %v148, 4294901760
    %1203 = vmatpush1.msra.mxu0 %v1202
    %1204 = vmatprep.subr.mxu0 0.0
    %v1205 = vand.u32 %v149, 4294901760
    %1206 = vmatpush1.msra.mxu0 %v1205
    %1207 = vmatprep.subr.mxu0 0.0
    %v1208 = vand.u32 %v150, 4294901760
    %1209 = vmatpush1.msra.mxu0 %v1208
    %1210 = vmatprep.subr.mxu0 0.0
    %v1211 = vand.u32 %v151, 4294901760
    %1212 = vmatpush1.msra.mxu0 %v1211
    %1213 = vmatprep.subr.mxu0 0.0
    %v1214 = vand.u32 %v152, 4294901760
    %1215 = vmatpush1.msra.mxu0 %v1214
    %1216 = vmatprep.subr.mxu0 0.0
    %v1217 = vand.u32 %v153, 4294901760
    %1218 = vmatpush1.msra.mxu0 %v1217
    %v1219 = vand.u32 %v236, 4294901760
    %v1220 = vsub.f32 %v236, %v1219
    %v1221 = vand.u32 %v1220, 4294901760
    %v1222 = vsub.f32 %v1220, %v1221
    %v1223 = vand.u32 %v1222, 4294901760
    %1224 = vmatprep.mubr.f32.mxu0 %v1223
    %v1225 = vand.u32 %v235, 4294901760
    %v1226 = vsub.f32 %v235, %v1225
    %v1227 = vand.u32 %v1226, 4294901760
    %v1228 = vsub.f32 %v1226, %v1227
    %v1229 = vand.u32 %v1228, 4294901760
    %1230 = vmatmul.mubr.f32.gmra.mrb[0].mxu0 %v1229
    %v1231 = vpop.f32.mrb[0].mxu0
    %v1232 = vadd.f32 %v1120, %v1231
    %v1233 = vpop.f32.mrb[0].mxu0
    %1234 = vdwg.mxu0
    %1235 = vmatprep.subr.mxu0 0.0
    %v1236 = vand.u32 %v122, 4294901760
    %v1237 = vsub.f32 %v122, %v1236
    %v1238 = vand.u32 %v1237, 4294901760
    %v1239 = vsub.f32 %v1237, %v1238
    %v1240 = vand.u32 %v1239, 4294901760
    %1241 = vmatpush1.msra.mxu0 %v1240
    %1242 = vmatprep.subr.mxu0 0.0
    %v1243 = vand.u32 %v123, 4294901760
    %v1244 = vsub.f32 %v123, %v1243
    %v1245 = vand.u32 %v1244, 4294901760
    %v1246 = vsub.f32 %v1244, %v1245
    %v1247 = vand.u32 %v1246, 4294901760
    %1248 = vmatpush1.msra.mxu0 %v1247
    %1249 = vmatprep.subr.mxu0 0.0
    %v1250 = vand.u32 %v124, 4294901760
    %v1251 = vsub.f32 %v124, %v1250
    %v1252 = vand.u32 %v1251, 4294901760
    %v1253 = vsub.f32 %v1251, %v1252
    %v1254 = vand.u32 %v1253, 4294901760
    %1255 = vmatpush1.msra.mxu0 %v1254
    %1256 = vmatprep.subr.mxu0 0.0
    %v1257 = vand.u32 %v125, 4294901760
    %v1258 = vsub.f32 %v125, %v1257
    %v1259 = vand.u32 %v1258, 4294901760
    %v1260 = vsub.f32 %v1258, %v1259
    %v1261 = vand.u32 %v1260, 4294901760
    %1262 = vmatpush1.msra.mxu0 %v1261
    %1263 = vmatprep.subr.mxu0 0.0
    %v1264 = vand.u32 %v126, 4294901760
    %v1265 = vsub.f32 %v126, %v1264
    %v1266 = vand.u32 %v1265, 4294901760
    %v1267 = vsub.f32 %v1265, %v1266
    %v1268 = vand.u32 %v1267, 4294901760
    %1269 = vmatpush1.msra.mxu0 %v1268
    %1270 = vmatprep.subr.mxu0 0.0
    %v1271 = vand.u32 %v127, 4294901760
    %v1272 = vsub.f32 %v127, %v1271
    %v1273 = vand.u32 %v1272, 4294901760
    %v1274 = vsub.f32 %v1272, %v1273
    %v1275 = vand.u32 %v1274, 4294901760
    %1276 = vmatpush1.msra.mxu0 %v1275
    %1277 = vmatprep.subr.mxu0 0.0
    %v1278 = vand.u32 %v128, 4294901760
    %v1279 = vsub.f32 %v128, %v1278
    %v1280 = vand.u32 %v1279, 4294901760
    %v1281 = vsub.f32 %v1279, %v1280
    %v1282 = vand.u32 %v1281, 4294901760
    %1283 = vmatpush1.msra.mxu0 %v1282
    %1284 = vmatprep.subr.mxu0 0.0
    %v1285 = vand.u32 %v129, 4294901760
    %v1286 = vsub.f32 %v129, %v1285
    %v1287 = vand.u32 %v1286, 4294901760
    %v1288 = vsub.f32 %v1286, %v1287
    %v1289 = vand.u32 %v1288, 4294901760
    %1290 = vmatpush1.msra.mxu0 %v1289
    %1291 = vmatprep.subr.mxu0 0.0
    %v1292 = vand.u32 %v130, 4294901760
    %v1293 = vsub.f32 %v130, %v1292
    %v1294 = vand.u32 %v1293, 4294901760
    %v1295 = vsub.f32 %v1293, %v1294
    %v1296 = vand.u32 %v1295, 4294901760
    %1297 = vmatpush1.msra.mxu0 %v1296
    %1298 = vmatprep.subr.mxu0 0.0
    %v1299 = vand.u32 %v131, 4294901760
    %v1300 = vsub.f32 %v131, %v1299
    %v1301 = vand.u32 %v1300, 4294901760
    %v1302 = vsub.f32 %v1300, %v1301
    %v1303 = vand.u32 %v1302, 4294901760
    %1304 = vmatpush1.msra.mxu0 %v1303
    %1305 = vmatprep.subr.mxu0 0.0
    %v1306 = vand.u32 %v132, 4294901760
    %v1307 = vsub.f32 %v132, %v1306
    %v1308 = vand.u32 %v1307, 4294901760
    %v1309 = vsub.f32 %v1307, %v1308
    %v1310 = vand.u32 %v1309, 4294901760
    %1311 = vmatpush1.msra.mxu0 %v1310
    %1312 = vmatprep.subr.mxu0 0.0
    %v1313 = vand.u32 %v133, 4294901760
    %v1314 = vsub.f32 %v133, %v1313
    %v1315 = vand.u32 %v1314, 4294901760
    %v1316 = vsub.f32 %v1314, %v1315
    %v1317 = vand.u32 %v1316, 4294901760
    %1318 = vmatpush1.msra.mxu0 %v1317
    %1319 = vmatprep.subr.mxu0 0.0
    %v1320 = vand.u32 %v134, 4294901760
    %v1321 = vsub.f32 %v134, %v1320
    %v1322 = vand.u32 %v1321, 4294901760
    %v1323 = vsub.f32 %v1321, %v1322
    %v1324 = vand.u32 %v1323, 4294901760
    %1325 = vmatpush1.msra.mxu0 %v1324
    %1326 = vmatprep.subr.mxu0 0.0
    %v1327 = vand.u32 %v135, 4294901760
    %v1328 = vsub.f32 %v135, %v1327
    %v1329 = vand.u32 %v1328, 4294901760
    %v1330 = vsub.f32 %v1328, %v1329
    %v1331 = vand.u32 %v1330, 4294901760
    %1332 = vmatpush1.msra.mxu0 %v1331
    %1333 = vmatprep.subr.mxu0 0.0
    %v1334 = vand.u32 %v136, 4294901760
    %v1335 = vsub.f32 %v136, %v1334
    %v1336 = vand.u32 %v1335, 4294901760
    %v1337 = vsub.f32 %v1335, %v1336
    %v1338 = vand.u32 %v1337, 4294901760
    %1339 = vmatpush1.msra.mxu0 %v1338
    %1340 = vmatprep.subr.mxu0 0.0
    %v1341 = vand.u32 %v137, 4294901760
    %v1342 = vsub.f32 %v137, %v1341
    %v1343 = vand.u32 %v1342, 4294901760
    %v1344 = vsub.f32 %v1342, %v1343
    %v1345 = vand.u32 %v1344, 4294901760
    %1346 = vmatpush1.msra.mxu0 %v1345
    %1347 = vmatprep.subr.mxu0 0.0
    %v1348 = vand.u32 %v138, 4294901760
    %v1349 = vsub.f32 %v138, %v1348
    %v1350 = vand.u32 %v1349, 4294901760
    %v1351 = vsub.f32 %v1349, %v1350
    %v1352 = vand.u32 %v1351, 4294901760
    %1353 = vmatpush1.msra.mxu0 %v1352
    %1354 = vmatprep.subr.mxu0 0.0
    %v1355 = vand.u32 %v139, 4294901760
    %v1356 = vsub.f32 %v139, %v1355
    %v1357 = vand.u32 %v1356, 4294901760
    %v1358 = vsub.f32 %v1356, %v1357
    %v1359 = vand.u32 %v1358, 4294901760
    %1360 = vmatpush1.msra.mxu0 %v1359
    %1361 = vmatprep.subr.mxu0 0.0
    %v1362 = vand.u32 %v140, 4294901760
    %v1363 = vsub.f32 %v140, %v1362
    %v1364 = vand.u32 %v1363, 4294901760
    %v1365 = vsub.f32 %v1363, %v1364
    %v1366 = vand.u32 %v1365, 4294901760
    %1367 = vmatpush1.msra.mxu0 %v1366
    %1368 = vmatprep.subr.mxu0 0.0
    %v1369 = vand.u32 %v141, 4294901760
    %v1370 = vsub.f32 %v141, %v1369
    %v1371 = vand.u32 %v1370, 4294901760
    %v1372 = vsub.f32 %v1370, %v1371
    %v1373 = vand.u32 %v1372, 4294901760
    %1374 = vmatpush1.msra.mxu0 %v1373
    %1375 = vmatprep.subr.mxu0 0.0
    %v1376 = vand.u32 %v142, 4294901760
    %v1377 = vsub.f32 %v142, %v1376
    %v1378 = vand.u32 %v1377, 4294901760
    %v1379 = vsub.f32 %v1377, %v1378
    %v1380 = vand.u32 %v1379, 4294901760
    %1381 = vmatpush1.msra.mxu0 %v1380
    %1382 = vmatprep.subr.mxu0 0.0
    %v1383 = vand.u32 %v143, 4294901760
    %v1384 = vsub.f32 %v143, %v1383
    %v1385 = vand.u32 %v1384, 4294901760
    %v1386 = vsub.f32 %v1384, %v1385
    %v1387 = vand.u32 %v1386, 4294901760
    %1388 = vmatpush1.msra.mxu0 %v1387
    %1389 = vmatprep.subr.mxu0 0.0
    %v1390 = vand.u32 %v144, 4294901760
    %v1391 = vsub.f32 %v144, %v1390
    %v1392 = vand.u32 %v1391, 4294901760
    %v1393 = vsub.f32 %v1391, %v1392
    %v1394 = vand.u32 %v1393, 4294901760
    %1395 = vmatpush1.msra.mxu0 %v1394
    %1396 = vmatprep.subr.mxu0 0.0
    %v1397 = vand.u32 %v145, 4294901760
    %v1398 = vsub.f32 %v145, %v1397
    %v1399 = vand.u32 %v1398, 4294901760
    %v1400 = vsub.f32 %v1398, %v1399
    %v1401 = vand.u32 %v1400, 4294901760
    %1402 = vmatpush1.msra.mxu0 %v1401
    %1403 = vmatprep.subr.mxu0 0.0
    %v1404 = vand.u32 %v146, 4294901760
    %v1405 = vsub.f32 %v146, %v1404
    %v1406 = vand.u32 %v1405, 4294901760
    %v1407 = vsub.f32 %v1405, %v1406
    %v1408 = vand.u32 %v1407, 4294901760
    %1409 = vmatpush1.msra.mxu0 %v1408
    %1410 = vmatprep.subr.mxu0 0.0
    %v1411 = vand.u32 %v147, 4294901760
    %v1412 = vsub.f32 %v147, %v1411
    %v1413 = vand.u32 %v1412, 4294901760
    %v1414 = vsub.f32 %v1412, %v1413
    %v1415 = vand.u32 %v1414, 4294901760
    %1416 = vmatpush1.msra.mxu0 %v1415
    %1417 = vmatprep.subr.mxu0 0.0
    %v1418 = vand.u32 %v148, 4294901760
    %v1419 = vsub.f32 %v148, %v1418
    %v1420 = vand.u32 %v1419, 4294901760
    %v1421 = vsub.f32 %v1419, %v1420
    %v1422 = vand.u32 %v1421, 4294901760
    %1423 = vmatpush1.msra.mxu0 %v1422
    %1424 = vmatprep.subr.mxu0 0.0
    %v1425 = vand.u32 %v149, 4294901760
    %v1426 = vsub.f32 %v149, %v1425
    %v1427 = vand.u32 %v1426, 4294901760
    %v1428 = vsub.f32 %v1426, %v1427
    %v1429 = vand.u32 %v1428, 4294901760
    %1430 = vmatpush1.msra.mxu0 %v1429
    %1431 = vmatprep.subr.mxu0 0.0
    %v1432 = vand.u32 %v150, 4294901760
    %v1433 = vsub.f32 %v150, %v1432
    %v1434 = vand.u32 %v1433, 4294901760
    %v1435 = vsub.f32 %v1433, %v1434
    %v1436 = vand.u32 %v1435, 4294901760
    %1437 = vmatpush1.msra.mxu0 %v1436
    %1438 = vmatprep.subr.mxu0 0.0
    %v1439 = vand.u32 %v151, 4294901760
    %v1440 = vsub.f32 %v151, %v1439
    %v1441 = vand.u32 %v1440, 4294901760
    %v1442 = vsub.f32 %v1440, %v1441
    %v1443 = vand.u32 %v1442, 4294901760
    %1444 = vmatpush1.msra.mxu0 %v1443
    %1445 = vmatprep.subr.mxu0 0.0
    %v1446 = vand.u32 %v152, 4294901760
    %v1447 = vsub.f32 %v152, %v1446
    %v1448 = vand.u32 %v1447, 4294901760
    %v1449 = vsub.f32 %v1447, %v1448
    %v1450 = vand.u32 %v1449, 4294901760
    %1451 = vmatpush1.msra.mxu0 %v1450
    %1452 = vmatprep.subr.mxu0 0.0
    %v1453 = vand.u32 %v153, 4294901760
    %v1454 = vsub.f32 %v153, %v1453
    %v1455 = vand.u32 %v1454, 4294901760
    %v1456 = vsub.f32 %v1454, %v1455
    %v1457 = vand.u32 %v1456, 4294901760
    %1458 = vmatpush1.msra.mxu0 %v1457
    %v1459 = vand.u32 %v236, 4294901760
    %1460 = vmatprep.mubr.f32.mxu0 %v1459
    %v1461 = vand.u32 %v235, 4294901760
    %1462 = vmatmul.mubr.f32.gmra.mrb[0].mxu0 %v1461
    %v1463 = vpop.f32.mrb[0].mxu0
    %v1464 = vadd.f32 %v1232, %v1463
    %v1465 = vpop.f32.mrb[0].mxu0
    %1466 = vdwg.mxu0
    %1467 = vmatprep.subr.mxu0 0.0
    %v1468 = vand.u32 %v122, 4294901760
    %v1469 = vsub.f32 %v122, %v1468
    %1470 = vmatpush1.msra.mxu0 %v1469
    %1471 = vmatprep.subr.mxu0 0.0
    %v1472 = vand.u32 %v123, 4294901760
    %v1473 = vsub.f32 %v123, %v1472
    %1474 = vmatpush1.msra.mxu0 %v1473
    %1475 = vmatprep.subr.mxu0 0.0
    %v1476 = vand.u32 %v124, 4294901760
    %v1477 = vsub.f32 %v124, %v1476
    %1478 = vmatpush1.msra.mxu0 %v1477
    %1479 = vmatprep.subr.mxu0 0.0
    %v1480 = vand.u32 %v125, 4294901760
    %v1481 = vsub.f32 %v125, %v1480
    %1482 = vmatpush1.msra.mxu0 %v1481
    %1483 = vmatprep.subr.mxu0 0.0
    %v1484 = vand.u32 %v126, 4294901760
    %v1485 = vsub.f32 %v126, %v1484
    %1486 = vmatpush1.msra.mxu0 %v1485
    %1487 = vmatprep.subr.mxu0 0.0
    %v1488 = vand.u32 %v127, 4294901760
    %v1489 = vsub.f32 %v127, %v1488
    %1490 = vmatpush1.msra.mxu0 %v1489
    %1491 = vmatprep.subr.mxu0 0.0
    %v1492 = vand.u32 %v128, 4294901760
    %v1493 = vsub.f32 %v128, %v1492
    %1494 = vmatpush1.msra.mxu0 %v1493
    %1495 = vmatprep.subr.mxu0 0.0
    %v1496 = vand.u32 %v129, 4294901760
    %v1497 = vsub.f32 %v129, %v1496
    %1498 = vmatpush1.msra.mxu0 %v1497
    %1499 = vmatprep.subr.mxu0 0.0
    %v1500 = vand.u32 %v130, 4294901760
    %v1501 = vsub.f32 %v130, %v1500
    %1502 = vmatpush1.msra.mxu0 %v1501
    %1503 = vmatprep.subr.mxu0 0.0
    %v1504 = vand.u32 %v131, 4294901760
    %v1505 = vsub.f32 %v131, %v1504
    %1506 = vmatpush1.msra.mxu0 %v1505
    %1507 = vmatprep.subr.mxu0 0.0
    %v1508 = vand.u32 %v132, 4294901760
    %v1509 = vsub.f32 %v132, %v1508
    %1510 = vmatpush1.msra.mxu0 %v1509
    %1511 = vmatprep.subr.mxu0 0.0
    %v1512 = vand.u32 %v133, 4294901760
    %v1513 = vsub.f32 %v133, %v1512
    %1514 = vmatpush1.msra.mxu0 %v1513
    %1515 = vmatprep.subr.mxu0 0.0
    %v1516 = vand.u32 %v134, 4294901760
    %v1517 = vsub.f32 %v134, %v1516
    %1518 = vmatpush1.msra.mxu0 %v1517
    %1519 = vmatprep.subr.mxu0 0.0
    %v1520 = vand.u32 %v135, 4294901760
    %v1521 = vsub.f32 %v135, %v1520
    %1522 = vmatpush1.msra.mxu0 %v1521
    %1523 = vmatprep.subr.mxu0 0.0
    %v1524 = vand.u32 %v136, 4294901760
    %v1525 = vsub.f32 %v136, %v1524
    %1526 = vmatpush1.msra.mxu0 %v1525
    %1527 = vmatprep.subr.mxu0 0.0
    %v1528 = vand.u32 %v137, 4294901760
    %v1529 = vsub.f32 %v137, %v1528
    %1530 = vmatpush1.msra.mxu0 %v1529
    %1531 = vmatprep.subr.mxu0 0.0
    %v1532 = vand.u32 %v138, 4294901760
    %v1533 = vsub.f32 %v138, %v1532
    %1534 = vmatpush1.msra.mxu0 %v1533
    %1535 = vmatprep.subr.mxu0 0.0
    %v1536 = vand.u32 %v139, 4294901760
    %v1537 = vsub.f32 %v139, %v1536
    %1538 = vmatpush1.msra.mxu0 %v1537
    %1539 = vmatprep.subr.mxu0 0.0
    %v1540 = vand.u32 %v140, 4294901760
    %v1541 = vsub.f32 %v140, %v1540
    %1542 = vmatpush1.msra.mxu0 %v1541
    %1543 = vmatprep.subr.mxu0 0.0
    %v1544 = vand.u32 %v141, 4294901760
    %v1545 = vsub.f32 %v141, %v1544
    %1546 = vmatpush1.msra.mxu0 %v1545
    %1547 = vmatprep.subr.mxu0 0.0
    %v1548 = vand.u32 %v142, 4294901760
    %v1549 = vsub.f32 %v142, %v1548
    %1550 = vmatpush1.msra.mxu0 %v1549
    %1551 = vmatprep.subr.mxu0 0.0
    %v1552 = vand.u32 %v143, 4294901760
    %v1553 = vsub.f32 %v143, %v1552
    %1554 = vmatpush1.msra.mxu0 %v1553
    %1555 = vmatprep.subr.mxu0 0.0
    %v1556 = vand.u32 %v144, 4294901760
    %v1557 = vsub.f32 %v144, %v1556
    %1558 = vmatpush1.msra.mxu0 %v1557
    %1559 = vmatprep.subr.mxu0 0.0
    %v1560 = vand.u32 %v145, 4294901760
    %v1561 = vsub.f32 %v145, %v1560
    %1562 = vmatpush1.msra.mxu0 %v1561
    %1563 = vmatprep.subr.mxu0 0.0
    %v1564 = vand.u32 %v146, 4294901760
    %v1565 = vsub.f32 %v146, %v1564
    %1566 = vmatpush1.msra.mxu0 %v1565
    %1567 = vmatprep.subr.mxu0 0.0
    %v1568 = vand.u32 %v147, 4294901760
    %v1569 = vsub.f32 %v147, %v1568
    %1570 = vmatpush1.msra.mxu0 %v1569
    %1571 = vmatprep.subr.mxu0 0.0
    %v1572 = vand.u32 %v148, 4294901760
    %v1573 = vsub.f32 %v148, %v1572
    %1574 = vmatpush1.msra.mxu0 %v1573
    %1575 = vmatprep.subr.mxu0 0.0
    %v1576 = vand.u32 %v149, 4294901760
    %v1577 = vsub.f32 %v149, %v1576
    %1578 = vmatpush1.msra.mxu0 %v1577
    %1579 = vmatprep.subr.mxu0 0.0
    %v1580 = vand.u32 %v150, 4294901760
    %v1581 = vsub.f32 %v150, %v1580
    %1582 = vmatpush1.msra.mxu0 %v1581
    %1583 = vmatprep.subr.mxu0 0.0
    %v1584 = vand.u32 %v151, 4294901760
    %v1585 = vsub.f32 %v151, %v1584
    %1586 = vmatpush1.msra.mxu0 %v1585
    %1587 = vmatprep.subr.mxu0 0.0
    %v1588 = vand.u32 %v152, 4294901760
    %v1589 = vsub.f32 %v152, %v1588
    %1590 = vmatpush1.msra.mxu0 %v1589
    %1591 = vmatprep.subr.mxu0 0.0
    %v1592 = vand.u32 %v153, 4294901760
    %v1593 = vsub.f32 %v153, %v1592
    %1594 = vmatpush1.msra.mxu0 %v1593
    %v1595 = vand.u32 %v236, 4294901760
    %v1596 = vsub.f32 %v236, %v1595
    %1597 = vmatprep.mubr.f32.mxu0 %v1596
    %v1598 = vand.u32 %v235, 4294901760
    %v1599 = vsub.f32 %v235, %v1598
    %1600 = vmatmul.mubr.f32.gmra.mrb[0].mxu0 %v1599
    %v1601 = vpop.f32.mrb[0].mxu0
    %v1602 = vadd.f32 %v1464, %v1601
    %v1603 = vpop.f32.mrb[0].mxu0
    %1604 = vdwg.mxu0
    %1605 = vmatprep.subr.mxu0 0.0
    %v1606 = vand.u32 %v122, 4294901760
    %1607 = vmatpush1.msra.mxu0 %v1606
    %1608 = vmatprep.subr.mxu0 0.0
    %v1609 = vand.u32 %v123, 4294901760
    %1610 = vmatpush1.msra.mxu0 %v1609
    %1611 = vmatprep.subr.mxu0 0.0
    %v1612 = vand.u32 %v124, 4294901760
    %1613 = vmatpush1.msra.mxu0 %v1612
    %1614 = vmatprep.subr.mxu0 0.0
    %v1615 = vand.u32 %v125, 4294901760
    %1616 = vmatpush1.msra.mxu0 %v1615
    %1617 = vmatprep.subr.mxu0 0.0
    %v1618 = vand.u32 %v126, 4294901760
    %1619 = vmatpush1.msra.mxu0 %v1618
    %1620 = vmatprep.subr.mxu0 0.0
    %v1621 = vand.u32 %v127, 4294901760
    %1622 = vmatpush1.msra.mxu0 %v1621
    %1623 = vmatprep.subr.mxu0 0.0
    %v1624 = vand.u32 %v128, 4294901760
    %1625 = vmatpush1.msra.mxu0 %v1624
    %1626 = vmatprep.subr.mxu0 0.0
    %v1627 = vand.u32 %v129, 4294901760
    %1628 = vmatpush1.msra.mxu0 %v1627
    %1629 = vmatprep.subr.mxu0 0.0
    %v1630 = vand.u32 %v130, 4294901760
    %1631 = vmatpush1.msra.mxu0 %v1630
    %1632 = vmatprep.subr.mxu0 0.0
    %v1633 = vand.u32 %v131, 4294901760
    %1634 = vmatpush1.msra.mxu0 %v1633
    %1635 = vmatprep.subr.mxu0 0.0
    %v1636 = vand.u32 %v132, 4294901760
    %1637 = vmatpush1.msra.mxu0 %v1636
    %1638 = vmatprep.subr.mxu0 0.0
    %v1639 = vand.u32 %v133, 4294901760
    %1640 = vmatpush1.msra.mxu0 %v1639
    %1641 = vmatprep.subr.mxu0 0.0
    %v1642 = vand.u32 %v134, 4294901760
    %1643 = vmatpush1.msra.mxu0 %v1642
    %1644 = vmatprep.subr.mxu0 0.0
    %v1645 = vand.u32 %v135, 4294901760
    %1646 = vmatpush1.msra.mxu0 %v1645
    %1647 = vmatprep.subr.mxu0 0.0
    %v1648 = vand.u32 %v136, 4294901760
    %1649 = vmatpush1.msra.mxu0 %v1648
    %1650 = vmatprep.subr.mxu0 0.0
    %v1651 = vand.u32 %v137, 4294901760
    %1652 = vmatpush1.msra.mxu0 %v1651
    %1653 = vmatprep.subr.mxu0 0.0
    %v1654 = vand.u32 %v138, 4294901760
    %1655 = vmatpush1.msra.mxu0 %v1654
    %1656 = vmatprep.subr.mxu0 0.0
    %v1657 = vand.u32 %v139, 4294901760
    %1658 = vmatpush1.msra.mxu0 %v1657
    %1659 = vmatprep.subr.mxu0 0.0
    %v1660 = vand.u32 %v140, 4294901760
    %1661 = vmatpush1.msra.mxu0 %v1660
    %1662 = vmatprep.subr.mxu0 0.0
    %v1663 = vand.u32 %v141, 4294901760
    %1664 = vmatpush1.msra.mxu0 %v1663
    %1665 = vmatprep.subr.mxu0 0.0
    %v1666 = vand.u32 %v142, 4294901760
    %1667 = vmatpush1.msra.mxu0 %v1666
    %1668 = vmatprep.subr.mxu0 0.0
    %v1669 = vand.u32 %v143, 4294901760
    %1670 = vmatpush1.msra.mxu0 %v1669
    %1671 = vmatprep.subr.mxu0 0.0
    %v1672 = vand.u32 %v144, 4294901760
    %1673 = vmatpush1.msra.mxu0 %v1672
    %1674 = vmatprep.subr.mxu0 0.0
    %v1675 = vand.u32 %v145, 4294901760
    %1676 = vmatpush1.msra.mxu0 %v1675
    %1677 = vmatprep.subr.mxu0 0.0
    %v1678 = vand.u32 %v146, 4294901760
    %1679 = vmatpush1.msra.mxu0 %v1678
    %1680 = vmatprep.subr.mxu0 0.0
    %v1681 = vand.u32 %v147, 4294901760
    %1682 = vmatpush1.msra.mxu0 %v1681
    %1683 = vmatprep.subr.mxu0 0.0
    %v1684 = vand.u32 %v148, 4294901760
    %1685 = vmatpush1.msra.mxu0 %v1684
    %1686 = vmatprep.subr.mxu0 0.0
    %v1687 = vand.u32 %v149, 4294901760
    %1688 = vmatpush1.msra.mxu0 %v1687
    %1689 = vmatprep.subr.mxu0 0.0
    %v1690 = vand.u32 %v150, 4294901760
    %1691 = vmatpush1.msra.mxu0 %v1690
    %1692 = vmatprep.subr.mxu0 0.0
    %v1693 = vand.u32 %v151, 4294901760
    %1694 = vmatpush1.msra.mxu0 %v1693
    %1695 = vmatprep.subr.mxu0 0.0
    %v1696 = vand.u32 %v152, 4294901760
    %1697 = vmatpush1.msra.mxu0 %v1696
    %1698 = vmatprep.subr.mxu0 0.0
    %v1699 = vand.u32 %v153, 4294901760
    %1700 = vmatpush1.msra.mxu0 %v1699
    %v1701 = vand.u32 %v236, 4294901760
    %v1702 = vsub.f32 %v236, %v1701
    %v1703 = vand.u32 %v1702, 4294901760
    %1704 = vmatprep.mubr.f32.mxu0 %v1703
    %v1705 = vand.u32 %v235, 4294901760
    %v1706 = vsub.f32 %v235, %v1705
    %v1707 = vand.u32 %v1706, 4294901760
    %1708 = vmatmul.mubr.f32.gmra.mrb[0].mxu0 %v1707
    %v1709 = vpop.f32.mrb[0].mxu0
    %v1710 = vadd.f32 %v1602, %v1709
    %v1711 = vpop.f32.mrb[0].mxu0
    %1712 = vdwg.mxu0
    %1713 = vmatprep.subr.mxu0 0.0
    %v1714 = vand.u32 %v122, 4294901760
    %v1715 = vsub.f32 %v122, %v1714
    %v1716 = vand.u32 %v1715, 4294901760
    %1717 = vmatpush1.msra.mxu0 %v1716
    %1718 = vmatprep.subr.mxu0 0.0
    %v1719 = vand.u32 %v123, 4294901760
    %v1720 = vsub.f32 %v123, %v1719
    %v1721 = vand.u32 %v1720, 4294901760
    %1722 = vmatpush1.msra.mxu0 %v1721
    %1723 = vmatprep.subr.mxu0 0.0
    %v1724 = vand.u32 %v124, 4294901760
    %v1725 = vsub.f32 %v124, %v1724
    %v1726 = vand.u32 %v1725, 4294901760
    %1727 = vmatpush1.msra.mxu0 %v1726
    %1728 = vmatprep.subr.mxu0 0.0
    %v1729 = vand.u32 %v125, 4294901760
    %v1730 = vsub.f32 %v125, %v1729
    %v1731 = vand.u32 %v1730, 4294901760
    %1732 = vmatpush1.msra.mxu0 %v1731
    %1733 = vmatprep.subr.mxu0 0.0
    %v1734 = vand.u32 %v126, 4294901760
    %v1735 = vsub.f32 %v126, %v1734
    %v1736 = vand.u32 %v1735, 4294901760
    %1737 = vmatpush1.msra.mxu0 %v1736
    %1738 = vmatprep.subr.mxu0 0.0
    %v1739 = vand.u32 %v127, 4294901760
    %v1740 = vsub.f32 %v127, %v1739
    %v1741 = vand.u32 %v1740, 4294901760
    %1742 = vmatpush1.msra.mxu0 %v1741
    %1743 = vmatprep.subr.mxu0 0.0
    %v1744 = vand.u32 %v128, 4294901760
    %v1745 = vsub.f32 %v128, %v1744
    %v1746 = vand.u32 %v1745, 4294901760
    %1747 = vmatpush1.msra.mxu0 %v1746
    %1748 = vmatprep.subr.mxu0 0.0
    %v1749 = vand.u32 %v129, 4294901760
    %v1750 = vsub.f32 %v129, %v1749
    %v1751 = vand.u32 %v1750, 4294901760
    %1752 = vmatpush1.msra.mxu0 %v1751
    %1753 = vmatprep.subr.mxu0 0.0
    %v1754 = vand.u32 %v130, 4294901760
    %v1755 = vsub.f32 %v130, %v1754
    %v1756 = vand.u32 %v1755, 4294901760
    %1757 = vmatpush1.msra.mxu0 %v1756
    %1758 = vmatprep.subr.mxu0 0.0
    %v1759 = vand.u32 %v131, 4294901760
    %v1760 = vsub.f32 %v131, %v1759
    %v1761 = vand.u32 %v1760, 4294901760
    %1762 = vmatpush1.msra.mxu0 %v1761
    %1763 = vmatprep.subr.mxu0 0.0
    %v1764 = vand.u32 %v132, 4294901760
    %v1765 = vsub.f32 %v132, %v1764
    %v1766 = vand.u32 %v1765, 4294901760
    %1767 = vmatpush1.msra.mxu0 %v1766
    %1768 = vmatprep.subr.mxu0 0.0
    %v1769 = vand.u32 %v133, 4294901760
    %v1770 = vsub.f32 %v133, %v1769
    %v1771 = vand.u32 %v1770, 4294901760
    %1772 = vmatpush1.msra.mxu0 %v1771
    %1773 = vmatprep.subr.mxu0 0.0
    %v1774 = vand.u32 %v134, 4294901760
    %v1775 = vsub.f32 %v134, %v1774
    %v1776 = vand.u32 %v1775, 4294901760
    %1777 = vmatpush1.msra.mxu0 %v1776
    %1778 = vmatprep.subr.mxu0 0.0
    %v1779 = vand.u32 %v135, 4294901760
    %v1780 = vsub.f32 %v135, %v1779
    %v1781 = vand.u32 %v1780, 4294901760
    %1782 = vmatpush1.msra.mxu0 %v1781
    %1783 = vmatprep.subr.mxu0 0.0
    %v1784 = vand.u32 %v136, 4294901760
    %v1785 = vsub.f32 %v136, %v1784
    %v1786 = vand.u32 %v1785, 4294901760
    %1787 = vmatpush1.msra.mxu0 %v1786
    %1788 = vmatprep.subr.mxu0 0.0
    %v1789 = vand.u32 %v137, 4294901760
    %v1790 = vsub.f32 %v137, %v1789
    %v1791 = vand.u32 %v1790, 4294901760
    %1792 = vmatpush1.msra.mxu0 %v1791
    %1793 = vmatprep.subr.mxu0 0.0
    %v1794 = vand.u32 %v138, 4294901760
    %v1795 = vsub.f32 %v138, %v1794
    %v1796 = vand.u32 %v1795, 4294901760
    %1797 = vmatpush1.msra.mxu0 %v1796
    %1798 = vmatprep.subr.mxu0 0.0
    %v1799 = vand.u32 %v139, 4294901760
    %v1800 = vsub.f32 %v139, %v1799
    %v1801 = vand.u32 %v1800, 4294901760
    %1802 = vmatpush1.msra.mxu0 %v1801
    %1803 = vmatprep.subr.mxu0 0.0
    %v1804 = vand.u32 %v140, 4294901760
    %v1805 = vsub.f32 %v140, %v1804
    %v1806 = vand.u32 %v1805, 4294901760
    %1807 = vmatpush1.msra.mxu0 %v1806
    %1808 = vmatprep.subr.mxu0 0.0
    %v1809 = vand.u32 %v141, 4294901760
    %v1810 = vsub.f32 %v141, %v1809
    %v1811 = vand.u32 %v1810, 4294901760
    %1812 = vmatpush1.msra.mxu0 %v1811
    %1813 = vmatprep.subr.mxu0 0.0
    %v1814 = vand.u32 %v142, 4294901760
    %v1815 = vsub.f32 %v142, %v1814
    %v1816 = vand.u32 %v1815, 4294901760
    %1817 = vmatpush1.msra.mxu0 %v1816
    %1818 = vmatprep.subr.mxu0 0.0
    %v1819 = vand.u32 %v143, 4294901760
    %v1820 = vsub.f32 %v143, %v1819
    %v1821 = vand.u32 %v1820, 4294901760
    %1822 = vmatpush1.msra.mxu0 %v1821
    %1823 = vmatprep.subr.mxu0 0.0
    %v1824 = vand.u32 %v144, 4294901760
    %v1825 = vsub.f32 %v144, %v1824
    %v1826 = vand.u32 %v1825, 4294901760
    %1827 = vmatpush1.msra.mxu0 %v1826
    %1828 = vmatprep.subr.mxu0 0.0
    %v1829 = vand.u32 %v145, 4294901760
    %v1830 = vsub.f32 %v145, %v1829
    %v1831 = vand.u32 %v1830, 4294901760
    %1832 = vmatpush1.msra.mxu0 %v1831
    %1833 = vmatprep.subr.mxu0 0.0
    %v1834 = vand.u32 %v146, 4294901760
    %v1835 = vsub.f32 %v146, %v1834
    %v1836 = vand.u32 %v1835, 4294901760
    %1837 = vmatpush1.msra.mxu0 %v1836
    %1838 = vmatprep.subr.mxu0 0.0
    %v1839 = vand.u32 %v147, 4294901760
    %v1840 = vsub.f32 %v147, %v1839
    %v1841 = vand.u32 %v1840, 4294901760
    %1842 = vmatpush1.msra.mxu0 %v1841
    %1843 = vmatprep.subr.mxu0 0.0
    %v1844 = vand.u32 %v148, 4294901760
    %v1845 = vsub.f32 %v148, %v1844
    %v1846 = vand.u32 %v1845, 4294901760
    %1847 = vmatpush1.msra.mxu0 %v1846
    %1848 = vmatprep.subr.mxu0 0.0
    %v1849 = vand.u32 %v149, 4294901760
    %v1850 = vsub.f32 %v149, %v1849
    %v1851 = vand.u32 %v1850, 4294901760
    %1852 = vmatpush1.msra.mxu0 %v1851
    %1853 = vmatprep.subr.mxu0 0.0
    %v1854 = vand.u32 %v150, 4294901760
    %v1855 = vsub.f32 %v150, %v1854
    %v1856 = vand.u32 %v1855, 4294901760
    %1857 = vmatpush1.msra.mxu0 %v1856
    %1858 = vmatprep.subr.mxu0 0.0
    %v1859 = vand.u32 %v151, 4294901760
    %v1860 = vsub.f32 %v151, %v1859
    %v1861 = vand.u32 %v1860, 4294901760
    %1862 = vmatpush1.msra.mxu0 %v1861
    %1863 = vmatprep.subr.mxu0 0.0
    %v1864 = vand.u32 %v152, 4294901760
    %v1865 = vsub.f32 %v152, %v1864
    %v1866 = vand.u32 %v1865, 4294901760
    %1867 = vmatpush1.msra.mxu0 %v1866
    %1868 = vmatprep.subr.mxu0 0.0
    %v1869 = vand.u32 %v153, 4294901760
    %v1870 = vsub.f32 %v153, %v1869
    %v1871 = vand.u32 %v1870, 4294901760
    %1872 = vmatpush1.msra.mxu0 %v1871
    %v1873 = vand.u32 %v236, 4294901760
    %1874 = vmatprep.mubr.f32.mxu0 %v1873
    %v1875 = vand.u32 %v235, 4294901760
    %1876 = vmatmul.mubr.f32.gmra.mrb[0].mxu0 %v1875
    %v1877 = vpop.f32.mrb[0].mxu0
    %v1878 = vadd.f32 %v1710, %v1877
    %v1879 = vpop.f32.mrb[0].mxu0
    %1880 = vdwg.mxu0
    %1881 = vmatprep.subr.mxu0 0.0
    %v1882 = vand.u32 %v122, 4294901760
    %1883 = vmatpush1.msra.mxu0 %v1882
    %1884 = vmatprep.subr.mxu0 0.0
    %v1885 = vand.u32 %v123, 4294901760
    %1886 = vmatpush1.msra.mxu0 %v1885
    %1887 = vmatprep.subr.mxu0 0.0
    %v1888 = vand.u32 %v124, 4294901760
    %1889 = vmatpush1.msra.mxu0 %v1888
    %1890 = vmatprep.subr.mxu0 0.0
    %v1891 = vand.u32 %v125, 4294901760
    %1892 = vmatpush1.msra.mxu0 %v1891
    %1893 = vmatprep.subr.mxu0 0.0
    %v1894 = vand.u32 %v126, 4294901760
    %1895 = vmatpush1.msra.mxu0 %v1894
    %1896 = vmatprep.subr.mxu0 0.0
    %v1897 = vand.u32 %v127, 4294901760
    %1898 = vmatpush1.msra.mxu0 %v1897
    %1899 = vmatprep.subr.mxu0 0.0
    %v1900 = vand.u32 %v128, 4294901760
    %1901 = vmatpush1.msra.mxu0 %v1900
    %1902 = vmatprep.subr.mxu0 0.0
    %v1903 = vand.u32 %v129, 4294901760
    %1904 = vmatpush1.msra.mxu0 %v1903
    %1905 = vmatprep.subr.mxu0 0.0
    %v1906 = vand.u32 %v130, 4294901760
    %1907 = vmatpush1.msra.mxu0 %v1906
    %1908 = vmatprep.subr.mxu0 0.0
    %v1909 = vand.u32 %v131, 4294901760
    %1910 = vmatpush1.msra.mxu0 %v1909
    %1911 = vmatprep.subr.mxu0 0.0
    %v1912 = vand.u32 %v132, 4294901760
    %1913 = vmatpush1.msra.mxu0 %v1912
    %1914 = vmatprep.subr.mxu0 0.0
    %v1915 = vand.u32 %v133, 4294901760
    %1916 = vmatpush1.msra.mxu0 %v1915
    %1917 = vmatprep.subr.mxu0 0.0
    %v1918 = vand.u32 %v134, 4294901760
    %1919 = vmatpush1.msra.mxu0 %v1918
    %1920 = vmatprep.subr.mxu0 0.0
    %v1921 = vand.u32 %v135, 4294901760
    %1922 = vmatpush1.msra.mxu0 %v1921
    %1923 = vmatprep.subr.mxu0 0.0
    %v1924 = vand.u32 %v136, 4294901760
    %1925 = vmatpush1.msra.mxu0 %v1924
    %1926 = vmatprep.subr.mxu0 0.0
    %v1927 = vand.u32 %v137, 4294901760
    %1928 = vmatpush1.msra.mxu0 %v1927
    %1929 = vmatprep.subr.mxu0 0.0
    %v1930 = vand.u32 %v138, 4294901760
    %1931 = vmatpush1.msra.mxu0 %v1930
    %1932 = vmatprep.subr.mxu0 0.0
    %v1933 = vand.u32 %v139, 4294901760
    %1934 = vmatpush1.msra.mxu0 %v1933
    %1935 = vmatprep.subr.mxu0 0.0
    %v1936 = vand.u32 %v140, 4294901760
    %1937 = vmatpush1.msra.mxu0 %v1936
    %1938 = vmatprep.subr.mxu0 0.0
    %v1939 = vand.u32 %v141, 4294901760
    %1940 = vmatpush1.msra.mxu0 %v1939
    %1941 = vmatprep.subr.mxu0 0.0
    %v1942 = vand.u32 %v142, 4294901760
    %1943 = vmatpush1.msra.mxu0 %v1942
    %1944 = vmatprep.subr.mxu0 0.0
    %v1945 = vand.u32 %v143, 4294901760
    %1946 = vmatpush1.msra.mxu0 %v1945
    %1947 = vmatprep.subr.mxu0 0.0
    %v1948 = vand.u32 %v144, 4294901760
    %1949 = vmatpush1.msra.mxu0 %v1948
    %1950 = vmatprep.subr.mxu0 0.0
    %v1951 = vand.u32 %v145, 4294901760
    %1952 = vmatpush1.msra.mxu0 %v1951
    %1953 = vmatprep.subr.mxu0 0.0
    %v1954 = vand.u32 %v146, 4294901760
    %1955 = vmatpush1.msra.mxu0 %v1954
    %1956 = vmatprep.subr.mxu0 0.0
    %v1957 = vand.u32 %v147, 4294901760
    %1958 = vmatpush1.msra.mxu0 %v1957
    %1959 = vmatprep.subr.mxu0 0.0
    %v1960 = vand.u32 %v148, 4294901760
    %1961 = vmatpush1.msra.mxu0 %v1960
    %1962 = vmatprep.subr.mxu0 0.0
    %v1963 = vand.u32 %v149, 4294901760
    %1964 = vmatpush1.msra.mxu0 %v1963
    %1965 = vmatprep.subr.mxu0 0.0
    %v1966 = vand.u32 %v150, 4294901760
    %1967 = vmatpush1.msra.mxu0 %v1966
    %1968 = vmatprep.subr.mxu0 0.0
    %v1969 = vand.u32 %v151, 4294901760
    %1970 = vmatpush1.msra.mxu0 %v1969
    %1971 = vmatprep.subr.mxu0 0.0
    %v1972 = vand.u32 %v152, 4294901760
    %1973 = vmatpush1.msra.mxu0 %v1972
    %1974 = vmatprep.subr.mxu0 0.0
    %v1975 = vand.u32 %v153, 4294901760
    %1976 = vmatpush1.msra.mxu0 %v1975
    %v1977 = vand.u32 %v236, 4294901760
    %1978 = vmatprep.mubr.f32.mxu0 %v1977
    %v1979 = vand.u32 %v235, 4294901760
    %1980 = vmatmul.mubr.f32.gmra.mrb[0].mxu0 %v1979
    %v1981 = vpop.f32.mrb[0].mxu0
    %v1982 = vadd.f32 %v1878, %v1981
    %v1983 = vpop.f32.mrb[0].mxu0
    %1984 = vdwg.mxu0
    %1985 = vmatprep.subr.mxu0 0.0
    %v1986 = vand.u32 %v154, 4294901760
    %1987 = vmatpush1.msra.mxu0 %v1986
    %1988 = vmatprep.subr.mxu0 0.0
    %v1989 = vand.u32 %v155, 4294901760
    %1990 = vmatpush1.msra.mxu0 %v1989
    %1991 = vmatprep.subr.mxu0 0.0
    %v1992 = vand.u32 %v156, 4294901760
    %1993 = vmatpush1.msra.mxu0 %v1992
    %1994 = vmatprep.subr.mxu0 0.0
    %v1995 = vand.u32 %v157, 4294901760
    %1996 = vmatpush1.msra.mxu0 %v1995
    %1997 = vmatprep.subr.mxu0 0.0
    %v1998 = vand.u32 %v158, 4294901760
    %1999 = vmatpush1.msra.mxu0 %v1998
    %2000 = vmatprep.subr.mxu0 0.0
    %v2001 = vand.u32 %v159, 4294901760
    %2002 = vmatpush1.msra.mxu0 %v2001
    %2003 = vmatprep.subr.mxu0 0.0
    %v2004 = vand.u32 %v160, 4294901760
    %2005 = vmatpush1.msra.mxu0 %v2004
    %2006 = vmatprep.subr.mxu0 0.0
    %v2007 = vand.u32 %v161, 4294901760
    %2008 = vmatpush1.msra.mxu0 %v2007
    %2009 = vmatprep.subr.mxu0 0.0
    %v2010 = vand.u32 %v162, 4294901760
    %2011 = vmatpush1.msra.mxu0 %v2010
    %2012 = vmatprep.subr.mxu0 0.0
    %v2013 = vand.u32 %v163, 4294901760
    %2014 = vmatpush1.msra.mxu0 %v2013
    %2015 = vmatprep.subr.mxu0 0.0
    %v2016 = vand.u32 %v164, 4294901760
    %2017 = vmatpush1.msra.mxu0 %v2016
    %2018 = vmatprep.subr.mxu0 0.0
    %v2019 = vand.u32 %v165, 4294901760
    %2020 = vmatpush1.msra.mxu0 %v2019
    %2021 = vmatprep.subr.mxu0 0.0
    %v2022 = vand.u32 %v166, 4294901760
    %2023 = vmatpush1.msra.mxu0 %v2022
    %2024 = vmatprep.subr.mxu0 0.0
    %v2025 = vand.u32 %v167, 4294901760
    %2026 = vmatpush1.msra.mxu0 %v2025
    %2027 = vmatprep.subr.mxu0 0.0
    %v2028 = vand.u32 %v168, 4294901760
    %2029 = vmatpush1.msra.mxu0 %v2028
    %2030 = vmatprep.subr.mxu0 0.0
    %v2031 = vand.u32 %v169, 4294901760
    %2032 = vmatpush1.msra.mxu0 %v2031
    %2033 = vmatprep.subr.mxu0 0.0
    %v2034 = vand.u32 %v170, 4294901760
    %2035 = vmatpush1.msra.mxu0 %v2034
    %2036 = vmatprep.subr.mxu0 0.0
    %v2037 = vand.u32 %v171, 4294901760
    %2038 = vmatpush1.msra.mxu0 %v2037
    %2039 = vmatprep.subr.mxu0 0.0
    %v2040 = vand.u32 %v172, 4294901760
    %2041 = vmatpush1.msra.mxu0 %v2040
    %2042 = vmatprep.subr.mxu0 0.0
    %v2043 = vand.u32 %v173, 4294901760
    %2044 = vmatpush1.msra.mxu0 %v2043
    %2045 = vmatprep.subr.mxu0 0.0
    %v2046 = vand.u32 %v174, 4294901760
    %2047 = vmatpush1.msra.mxu0 %v2046
    %2048 = vmatprep.subr.mxu0 0.0
    %v2049 = vand.u32 %v175, 4294901760
    %2050 = vmatpush1.msra.mxu0 %v2049
    %2051 = vmatprep.subr.mxu0 0.0
    %v2052 = vand.u32 %v176, 4294901760
    %2053 = vmatpush1.msra.mxu0 %v2052
    %2054 = vmatprep.subr.mxu0 0.0
    %v2055 = vand.u32 %v177, 4294901760
    %2056 = vmatpush1.msra.mxu0 %v2055
    %2057 = vmatprep.subr.mxu0 0.0
    %v2058 = vand.u32 %v178, 4294901760
    %2059 = vmatpush1.msra.mxu0 %v2058
    %2060 = vmatprep.subr.mxu0 0.0
    %v2061 = vand.u32 %v179, 4294901760
    %2062 = vmatpush1.msra.mxu0 %v2061
    %2063 = vmatprep.subr.mxu0 0.0
    %v2064 = vand.u32 %v180, 4294901760
    %2065 = vmatpush1.msra.mxu0 %v2064
    %2066 = vmatprep.subr.mxu0 0.0
    %v2067 = vand.u32 %v181, 4294901760
    %2068 = vmatpush1.msra.mxu0 %v2067
    %2069 = vmatprep.subr.mxu0 0.0
    %v2070 = vand.u32 %v182, 4294901760
    %2071 = vmatpush1.msra.mxu0 %v2070
    %2072 = vmatprep.subr.mxu0 0.0
    %v2073 = vand.u32 %v183, 4294901760
    %2074 = vmatpush1.msra.mxu0 %v2073
    %2075 = vmatprep.subr.mxu0 0.0
    %v2076 = vand.u32 %v184, 4294901760
    %2077 = vmatpush1.msra.mxu0 %v2076
    %2078 = vmatprep.subr.mxu0 0.0
    %v2079 = vand.u32 %v185, 4294901760
    %2080 = vmatpush1.msra.mxu0 %v2079
    %v2081 = vand.u32 %v254, 4294901760
    %v2082 = vsub.f32 %v254, %v2081
    %v2083 = vand.u32 %v2082, 4294901760
    %v2084 = vsub.f32 %v2082, %v2083
    %v2085 = vand.u32 %v2084, 4294901760
    %2086 = vmatprep.mubr.f32.mxu0 %v2085
    %v2087 = vand.u32 %v253, 4294901760
    %v2088 = vsub.f32 %v253, %v2087
    %v2089 = vand.u32 %v2088, 4294901760
    %v2090 = vsub.f32 %v2088, %v2089
    %v2091 = vand.u32 %v2090, 4294901760
    %2092 = vmatmul.mubr.f32.gmra.mrb[0].mxu0 %v2091
    %v2093 = vpop.f32.mrb[0].mxu0
    %v2094 = vadd.f32 %v1982, %v2093
    %v2095 = vpop.f32.mrb[0].mxu0
    %2096 = vdwg.mxu0
    %2097 = vmatprep.subr.mxu0 0.0
    %v2098 = vand.u32 %v154, 4294901760
    %v2099 = vsub.f32 %v154, %v2098
    %v2100 = vand.u32 %v2099, 4294901760
    %v2101 = vsub.f32 %v2099, %v2100
    %v2102 = vand.u32 %v2101, 4294901760
    %2103 = vmatpush1.msra.mxu0 %v2102
    %2104 = vmatprep.subr.mxu0 0.0
    %v2105 = vand.u32 %v155, 4294901760
    %v2106 = vsub.f32 %v155, %v2105
    %v2107 = vand.u32 %v2106, 4294901760
    %v2108 = vsub.f32 %v2106, %v2107
    %v2109 = vand.u32 %v2108, 4294901760
    %2110 = vmatpush1.msra.mxu0 %v2109
    %2111 = vmatprep.subr.mxu0 0.0
    %v2112 = vand.u32 %v156, 4294901760
    %v2113 = vsub.f32 %v156, %v2112
    %v2114 = vand.u32 %v2113, 4294901760
    %v2115 = vsub.f32 %v2113, %v2114
    %v2116 = vand.u32 %v2115, 4294901760
    %2117 = vmatpush1.msra.mxu0 %v2116
    %2118 = vmatprep.subr.mxu0 0.0
    %v2119 = vand.u32 %v157, 4294901760
    %v2120 = vsub.f32 %v157, %v2119
    %v2121 = vand.u32 %v2120, 4294901760
    %v2122 = vsub.f32 %v2120, %v2121
    %v2123 = vand.u32 %v2122, 4294901760
    %2124 = vmatpush1.msra.mxu0 %v2123
    %2125 = vmatprep.subr.mxu0 0.0
    %v2126 = vand.u32 %v158, 4294901760
    %v2127 = vsub.f32 %v158, %v2126
    %v2128 = vand.u32 %v2127, 4294901760
    %v2129 = vsub.f32 %v2127, %v2128
    %v2130 = vand.u32 %v2129, 4294901760
    %2131 = vmatpush1.msra.mxu0 %v2130
    %2132 = vmatprep.subr.mxu0 0.0
    %v2133 = vand.u32 %v159, 4294901760
    %v2134 = vsub.f32 %v159, %v2133
    %v2135 = vand.u32 %v2134, 4294901760
    %v2136 = vsub.f32 %v2134, %v2135
    %v2137 = vand.u32 %v2136, 4294901760
    %2138 = vmatpush1.msra.mxu0 %v2137
    %2139 = vmatprep.subr.mxu0 0.0
    %v2140 = vand.u32 %v160, 4294901760
    %v2141 = vsub.f32 %v160, %v2140
    %v2142 = vand.u32 %v2141, 4294901760
    %v2143 = vsub.f32 %v2141, %v2142
    %v2144 = vand.u32 %v2143, 4294901760
    %2145 = vmatpush1.msra.mxu0 %v2144
    %2146 = vmatprep.subr.mxu0 0.0
    %v2147 = vand.u32 %v161, 4294901760
    %v2148 = vsub.f32 %v161, %v2147
    %v2149 = vand.u32 %v2148, 4294901760
    %v2150 = vsub.f32 %v2148, %v2149
    %v2151 = vand.u32 %v2150, 4294901760
    %2152 = vmatpush1.msra.mxu0 %v2151
    %2153 = vmatprep.subr.mxu0 0.0
    %v2154 = vand.u32 %v162, 4294901760
    %v2155 = vsub.f32 %v162, %v2154
    %v2156 = vand.u32 %v2155, 4294901760
    %v2157 = vsub.f32 %v2155, %v2156
    %v2158 = vand.u32 %v2157, 4294901760
    %2159 = vmatpush1.msra.mxu0 %v2158
    %2160 = vmatprep.subr.mxu0 0.0
    %v2161 = vand.u32 %v163, 4294901760
    %v2162 = vsub.f32 %v163, %v2161
    %v2163 = vand.u32 %v2162, 4294901760
    %v2164 = vsub.f32 %v2162, %v2163
    %v2165 = vand.u32 %v2164, 4294901760
    %2166 = vmatpush1.msra.mxu0 %v2165
    %2167 = vmatprep.subr.mxu0 0.0
    %v2168 = vand.u32 %v164, 4294901760
    %v2169 = vsub.f32 %v164, %v2168
    %v2170 = vand.u32 %v2169, 4294901760
    %v2171 = vsub.f32 %v2169, %v2170
    %v2172 = vand.u32 %v2171, 4294901760
    %2173 = vmatpush1.msra.mxu0 %v2172
    %2174 = vmatprep.subr.mxu0 0.0
    %v2175 = vand.u32 %v165, 4294901760
    %v2176 = vsub.f32 %v165, %v2175
    %v2177 = vand.u32 %v2176, 4294901760
    %v2178 = vsub.f32 %v2176, %v2177
    %v2179 = vand.u32 %v2178, 4294901760
    %2180 = vmatpush1.msra.mxu0 %v2179
    %2181 = vmatprep.subr.mxu0 0.0
    %v2182 = vand.u32 %v166, 4294901760
    %v2183 = vsub.f32 %v166, %v2182
    %v2184 = vand.u32 %v2183, 4294901760
    %v2185 = vsub.f32 %v2183, %v2184
    %v2186 = vand.u32 %v2185, 4294901760
    %2187 = vmatpush1.msra.mxu0 %v2186
    %2188 = vmatprep.subr.mxu0 0.0
    %v2189 = vand.u32 %v167, 4294901760
    %v2190 = vsub.f32 %v167, %v2189
    %v2191 = vand.u32 %v2190, 4294901760
    %v2192 = vsub.f32 %v2190, %v2191
    %v2193 = vand.u32 %v2192, 4294901760
    %2194 = vmatpush1.msra.mxu0 %v2193
    %2195 = vmatprep.subr.mxu0 0.0
    %v2196 = vand.u32 %v168, 4294901760
    %v2197 = vsub.f32 %v168, %v2196
    %v2198 = vand.u32 %v2197, 4294901760
    %v2199 = vsub.f32 %v2197, %v2198
    %v2200 = vand.u32 %v2199, 4294901760
    %2201 = vmatpush1.msra.mxu0 %v2200
    %2202 = vmatprep.subr.mxu0 0.0
    %v2203 = vand.u32 %v169, 4294901760
    %v2204 = vsub.f32 %v169, %v2203
    %v2205 = vand.u32 %v2204, 4294901760
    %v2206 = vsub.f32 %v2204, %v2205
    %v2207 = vand.u32 %v2206, 4294901760
    %2208 = vmatpush1.msra.mxu0 %v2207
    %2209 = vmatprep.subr.mxu0 0.0
    %v2210 = vand.u32 %v170, 4294901760
    %v2211 = vsub.f32 %v170, %v2210
    %v2212 = vand.u32 %v2211, 4294901760
    %v2213 = vsub.f32 %v2211, %v2212
    %v2214 = vand.u32 %v2213, 4294901760
    %2215 = vmatpush1.msra.mxu0 %v2214
    %2216 = vmatprep.subr.mxu0 0.0
    %v2217 = vand.u32 %v171, 4294901760
    %v2218 = vsub.f32 %v171, %v2217
    %v2219 = vand.u32 %v2218, 4294901760
    %v2220 = vsub.f32 %v2218, %v2219
    %v2221 = vand.u32 %v2220, 4294901760
    %2222 = vmatpush1.msra.mxu0 %v2221
    %2223 = vmatprep.subr.mxu0 0.0
    %v2224 = vand.u32 %v172, 4294901760
    %v2225 = vsub.f32 %v172, %v2224
    %v2226 = vand.u32 %v2225, 4294901760
    %v2227 = vsub.f32 %v2225, %v2226
    %v2228 = vand.u32 %v2227, 4294901760
    %2229 = vmatpush1.msra.mxu0 %v2228
    %2230 = vmatprep.subr.mxu0 0.0
    %v2231 = vand.u32 %v173, 4294901760
    %v2232 = vsub.f32 %v173, %v2231
    %v2233 = vand.u32 %v2232, 4294901760
    %v2234 = vsub.f32 %v2232, %v2233
    %v2235 = vand.u32 %v2234, 4294901760
    %2236 = vmatpush1.msra.mxu0 %v2235
    %2237 = vmatprep.subr.mxu0 0.0
    %v2238 = vand.u32 %v174, 4294901760
    %v2239 = vsub.f32 %v174, %v2238
    %v2240 = vand.u32 %v2239, 4294901760
    %v2241 = vsub.f32 %v2239, %v2240
    %v2242 = vand.u32 %v2241, 4294901760
    %2243 = vmatpush1.msra.mxu0 %v2242
    %2244 = vmatprep.subr.mxu0 0.0
    %v2245 = vand.u32 %v175, 4294901760
    %v2246 = vsub.f32 %v175, %v2245
    %v2247 = vand.u32 %v2246, 4294901760
    %v2248 = vsub.f32 %v2246, %v2247
    %v2249 = vand.u32 %v2248, 4294901760
    %2250 = vmatpush1.msra.mxu0 %v2249
    %2251 = vmatprep.subr.mxu0 0.0
    %v2252 = vand.u32 %v176, 4294901760
    %v2253 = vsub.f32 %v176, %v2252
    %v2254 = vand.u32 %v2253, 4294901760
    %v2255 = vsub.f32 %v2253, %v2254
    %v2256 = vand.u32 %v2255, 4294901760
    %2257 = vmatpush1.msra.mxu0 %v2256
    %2258 = vmatprep.subr.mxu0 0.0
    %v2259 = vand.u32 %v177, 4294901760
    %v2260 = vsub.f32 %v177, %v2259
    %v2261 = vand.u32 %v2260, 4294901760
    %v2262 = vsub.f32 %v2260, %v2261
    %v2263 = vand.u32 %v2262, 4294901760
    %2264 = vmatpush1.msra.mxu0 %v2263
    %2265 = vmatprep.subr.mxu0 0.0
    %v2266 = vand.u32 %v178, 4294901760
    %v2267 = vsub.f32 %v178, %v2266
    %v2268 = vand.u32 %v2267, 4294901760
    %v2269 = vsub.f32 %v2267, %v2268
    %v2270 = vand.u32 %v2269, 4294901760
    %2271 = vmatpush1.msra.mxu0 %v2270
    %2272 = vmatprep.subr.mxu0 0.0
    %v2273 = vand.u32 %v179, 4294901760
    %v2274 = vsub.f32 %v179, %v2273
    %v2275 = vand.u32 %v2274, 4294901760
    %v2276 = vsub.f32 %v2274, %v2275
    %v2277 = vand.u32 %v2276, 4294901760
    %2278 = vmatpush1.msra.mxu0 %v2277
    %2279 = vmatprep.subr.mxu0 0.0
    %v2280 = vand.u32 %v180, 4294901760
    %v2281 = vsub.f32 %v180, %v2280
    %v2282 = vand.u32 %v2281, 4294901760
    %v2283 = vsub.f32 %v2281, %v2282
    %v2284 = vand.u32 %v2283, 4294901760
    %2285 = vmatpush1.msra.mxu0 %v2284
    %2286 = vmatprep.subr.mxu0 0.0
    %v2287 = vand.u32 %v181, 4294901760
    %v2288 = vsub.f32 %v181, %v2287
    %v2289 = vand.u32 %v2288, 4294901760
    %v2290 = vsub.f32 %v2288, %v2289
    %v2291 = vand.u32 %v2290, 4294901760
    %2292 = vmatpush1.msra.mxu0 %v2291
    %2293 = vmatprep.subr.mxu0 0.0
    %v2294 = vand.u32 %v182, 4294901760
    %v2295 = vsub.f32 %v182, %v2294
    %v2296 = vand.u32 %v2295, 4294901760
    %v2297 = vsub.f32 %v2295, %v2296
    %v2298 = vand.u32 %v2297, 4294901760
    %2299 = vmatpush1.msra.mxu0 %v2298
    %2300 = vmatprep.subr.mxu0 0.0
    %v2301 = vand.u32 %v183, 4294901760
    %v2302 = vsub.f32 %v183, %v2301
    %v2303 = vand.u32 %v2302, 4294901760
    %v2304 = vsub.f32 %v2302, %v2303
    %v2305 = vand.u32 %v2304, 4294901760
    %2306 = vmatpush1.msra.mxu0 %v2305
    %2307 = vmatprep.subr.mxu0 0.0
    %v2308 = vand.u32 %v184, 4294901760
    %v2309 = vsub.f32 %v184, %v2308
    %v2310 = vand.u32 %v2309, 4294901760
    %v2311 = vsub.f32 %v2309, %v2310
    %v2312 = vand.u32 %v2311, 4294901760
    %2313 = vmatpush1.msra.mxu0 %v2312
    %2314 = vmatprep.subr.mxu0 0.0
    %v2315 = vand.u32 %v185, 4294901760
    %v2316 = vsub.f32 %v185, %v2315
    %v2317 = vand.u32 %v2316, 4294901760
    %v2318 = vsub.f32 %v2316, %v2317
    %v2319 = vand.u32 %v2318, 4294901760
    %2320 = vmatpush1.msra.mxu0 %v2319
    %v2321 = vand.u32 %v254, 4294901760
    %2322 = vmatprep.mubr.f32.mxu0 %v2321
    %v2323 = vand.u32 %v253, 4294901760
    %2324 = vmatmul.mubr.f32.gmra.mrb[0].mxu0 %v2323
    %v2325 = vpop.f32.mrb[0].mxu0
    %v2326 = vadd.f32 %v2094, %v2325
    %v2327 = vpop.f32.mrb[0].mxu0
    %2328 = vdwg.mxu0
    %2329 = vmatprep.subr.mxu0 0.0
    %v2330 = vand.u32 %v154, 4294901760
    %v2331 = vsub.f32 %v154, %v2330
    %2332 = vmatpush1.msra.mxu0 %v2331
    %2333 = vmatprep.subr.mxu0 0.0
    %v2334 = vand.u32 %v155, 4294901760
    %v2335 = vsub.f32 %v155, %v2334
    %2336 = vmatpush1.msra.mxu0 %v2335
    %2337 = vmatprep.subr.mxu0 0.0
    %v2338 = vand.u32 %v156, 4294901760
    %v2339 = vsub.f32 %v156, %v2338
    %2340 = vmatpush1.msra.mxu0 %v2339
    %2341 = vmatprep.subr.mxu0 0.0
    %v2342 = vand.u32 %v157, 4294901760
    %v2343 = vsub.f32 %v157, %v2342
    %2344 = vmatpush1.msra.mxu0 %v2343
    %2345 = vmatprep.subr.mxu0 0.0
    %v2346 = vand.u32 %v158, 4294901760
    %v2347 = vsub.f32 %v158, %v2346
    %2348 = vmatpush1.msra.mxu0 %v2347
    %2349 = vmatprep.subr.mxu0 0.0
    %v2350 = vand.u32 %v159, 4294901760
    %v2351 = vsub.f32 %v159, %v2350
    %2352 = vmatpush1.msra.mxu0 %v2351
    %2353 = vmatprep.subr.mxu0 0.0
    %v2354 = vand.u32 %v160, 4294901760
    %v2355 = vsub.f32 %v160, %v2354
    %2356 = vmatpush1.msra.mxu0 %v2355
    %2357 = vmatprep.subr.mxu0 0.0
    %v2358 = vand.u32 %v161, 4294901760
    %v2359 = vsub.f32 %v161, %v2358
    %2360 = vmatpush1.msra.mxu0 %v2359
    %2361 = vmatprep.subr.mxu0 0.0
    %v2362 = vand.u32 %v162, 4294901760
    %v2363 = vsub.f32 %v162, %v2362
    %2364 = vmatpush1.msra.mxu0 %v2363
    %2365 = vmatprep.subr.mxu0 0.0
    %v2366 = vand.u32 %v163, 4294901760
    %v2367 = vsub.f32 %v163, %v2366
    %2368 = vmatpush1.msra.mxu0 %v2367
    %2369 = vmatprep.subr.mxu0 0.0
    %v2370 = vand.u32 %v164, 4294901760
    %v2371 = vsub.f32 %v164, %v2370
    %2372 = vmatpush1.msra.mxu0 %v2371
    %2373 = vmatprep.subr.mxu0 0.0
    %v2374 = vand.u32 %v165, 4294901760
    %v2375 = vsub.f32 %v165, %v2374
    %2376 = vmatpush1.msra.mxu0 %v2375
    %2377 = vmatprep.subr.mxu0 0.0
    %v2378 = vand.u32 %v166, 4294901760
    %v2379 = vsub.f32 %v166, %v2378
    %2380 = vmatpush1.msra.mxu0 %v2379
    %2381 = vmatprep.subr.mxu0 0.0
    %v2382 = vand.u32 %v167, 4294901760
    %v2383 = vsub.f32 %v167, %v2382
    %2384 = vmatpush1.msra.mxu0 %v2383
    %2385 = vmatprep.subr.mxu0 0.0
    %v2386 = vand.u32 %v168, 4294901760
    %v2387 = vsub.f32 %v168, %v2386
    %2388 = vmatpush1.msra.mxu0 %v2387
    %2389 = vmatprep.subr.mxu0 0.0
    %v2390 = vand.u32 %v169, 4294901760
    %v2391 = vsub.f32 %v169, %v2390
    %2392 = vmatpush1.msra.mxu0 %v2391
    %2393 = vmatprep.subr.mxu0 0.0
    %v2394 = vand.u32 %v170, 4294901760
    %v2395 = vsub.f32 %v170, %v2394
    %2396 = vmatpush1.msra.mxu0 %v2395
    %2397 = vmatprep.subr.mxu0 0.0
    %v2398 = vand.u32 %v171, 4294901760
    %v2399 = vsub.f32 %v171, %v2398
    %2400 = vmatpush1.msra.mxu0 %v2399
    %2401 = vmatprep.subr.mxu0 0.0
    %v2402 = vand.u32 %v172, 4294901760
    %v2403 = vsub.f32 %v172, %v2402
    %2404 = vmatpush1.msra.mxu0 %v2403
    %2405 = vmatprep.subr.mxu0 0.0
    %v2406 = vand.u32 %v173, 4294901760
    %v2407 = vsub.f32 %v173, %v2406
    %2408 = vmatpush1.msra.mxu0 %v2407
    %2409 = vmatprep.subr.mxu0 0.0
    %v2410 = vand.u32 %v174, 4294901760
    %v2411 = vsub.f32 %v174, %v2410
    %2412 = vmatpush1.msra.mxu0 %v2411
    %2413 = vmatprep.subr.mxu0 0.0
    %v2414 = vand.u32 %v175, 4294901760
    %v2415 = vsub.f32 %v175, %v2414
    %2416 = vmatpush1.msra.mxu0 %v2415
    %2417 = vmatprep.subr.mxu0 0.0
    %v2418 = vand.u32 %v176, 4294901760
    %v2419 = vsub.f32 %v176, %v2418
    %2420 = vmatpush1.msra.mxu0 %v2419
    %2421 = vmatprep.subr.mxu0 0.0
    %v2422 = vand.u32 %v177, 4294901760
    %v2423 = vsub.f32 %v177, %v2422
    %2424 = vmatpush1.msra.mxu0 %v2423
    %2425 = vmatprep.subr.mxu0 0.0
    %v2426 = vand.u32 %v178, 4294901760
    %v2427 = vsub.f32 %v178, %v2426
    %2428 = vmatpush1.msra.mxu0 %v2427
    %2429 = vmatprep.subr.mxu0 0.0
    %v2430 = vand.u32 %v179, 4294901760
    %v2431 = vsub.f32 %v179, %v2430
    %2432 = vmatpush1.msra.mxu0 %v2431
    %2433 = vmatprep.subr.mxu0 0.0
    %v2434 = vand.u32 %v180, 4294901760
    %v2435 = vsub.f32 %v180, %v2434
    %2436 = vmatpush1.msra.mxu0 %v2435
    %2437 = vmatprep.subr.mxu0 0.0
    %v2438 = vand.u32 %v181, 4294901760
    %v2439 = vsub.f32 %v181, %v2438
    %2440 = vmatpush1.msra.mxu0 %v2439
    %2441 = vmatprep.subr.mxu0 0.0
    %v2442 = vand.u32 %v182, 4294901760
    %v2443 = vsub.f32 %v182, %v2442
    %2444 = vmatpush1.msra.mxu0 %v2443
    %2445 = vmatprep.subr.mxu0 0.0
    %v2446 = vand.u32 %v183, 4294901760
    %v2447 = vsub.f32 %v183, %v2446
    %2448 = vmatpush1.msra.mxu0 %v2447
    %2449 = vmatprep.subr.mxu0 0.0
    %v2450 = vand.u32 %v184, 4294901760
    %v2451 = vsub.f32 %v184, %v2450
    %2452 = vmatpush1.msra.mxu0 %v2451
    %2453 = vmatprep.subr.mxu0 0.0
    %v2454 = vand.u32 %v185, 4294901760
    %v2455 = vsub.f32 %v185, %v2454
    %2456 = vmatpush1.msra.mxu0 %v2455
    %v2457 = vand.u32 %v254, 4294901760
    %v2458 = vsub.f32 %v254, %v2457
    %2459 = vmatprep.mubr.f32.mxu0 %v2458
    %v2460 = vand.u32 %v253, 4294901760
    %v2461 = vsub.f32 %v253, %v2460
    %2462 = vmatmul.mubr.f32.gmra.mrb[0].mxu0 %v2461
    %v2463 = vpop.f32.mrb[0].mxu0
    %v2464 = vadd.f32 %v2326, %v2463
    %v2465 = vpop.f32.mrb[0].mxu0
    %2466 = vdwg.mxu0
    %2467 = vmatprep.subr.mxu0 0.0
    %v2468 = vand.u32 %v154, 4294901760
    %2469 = vmatpush1.msra.mxu0 %v2468
    %2470 = vmatprep.subr.mxu0 0.0
    %v2471 = vand.u32 %v155, 4294901760
    %2472 = vmatpush1.msra.mxu0 %v2471
    %2473 = vmatprep.subr.mxu0 0.0
    %v2474 = vand.u32 %v156, 4294901760
    %2475 = vmatpush1.msra.mxu0 %v2474
    %2476 = vmatprep.subr.mxu0 0.0
    %v2477 = vand.u32 %v157, 4294901760
    %2478 = vmatpush1.msra.mxu0 %v2477
    %2479 = vmatprep.subr.mxu0 0.0
    %v2480 = vand.u32 %v158, 4294901760
    %2481 = vmatpush1.msra.mxu0 %v2480
    %2482 = vmatprep.subr.mxu0 0.0
    %v2483 = vand.u32 %v159, 4294901760
    %2484 = vmatpush1.msra.mxu0 %v2483
    %2485 = vmatprep.subr.mxu0 0.0
    %v2486 = vand.u32 %v160, 4294901760
    %2487 = vmatpush1.msra.mxu0 %v2486
    %2488 = vmatprep.subr.mxu0 0.0
    %v2489 = vand.u32 %v161, 4294901760
    %2490 = vmatpush1.msra.mxu0 %v2489
    %2491 = vmatprep.subr.mxu0 0.0
    %v2492 = vand.u32 %v162, 4294901760
    %2493 = vmatpush1.msra.mxu0 %v2492
    %2494 = vmatprep.subr.mxu0 0.0
    %v2495 = vand.u32 %v163, 4294901760
    %2496 = vmatpush1.msra.mxu0 %v2495
    %2497 = vmatprep.subr.mxu0 0.0
    %v2498 = vand.u32 %v164, 4294901760
    %2499 = vmatpush1.msra.mxu0 %v2498
    %2500 = vmatprep.subr.mxu0 0.0
    %v2501 = vand.u32 %v165, 4294901760
    %2502 = vmatpush1.msra.mxu0 %v2501
    %2503 = vmatprep.subr.mxu0 0.0
    %v2504 = vand.u32 %v166, 4294901760
    %2505 = vmatpush1.msra.mxu0 %v2504
    %2506 = vmatprep.subr.mxu0 0.0
    %v2507 = vand.u32 %v167, 4294901760
    %2508 = vmatpush1.msra.mxu0 %v2507
    %2509 = vmatprep.subr.mxu0 0.0
    %v2510 = vand.u32 %v168, 4294901760
    %2511 = vmatpush1.msra.mxu0 %v2510
    %2512 = vmatprep.subr.mxu0 0.0
    %v2513 = vand.u32 %v169, 4294901760
    %2514 = vmatpush1.msra.mxu0 %v2513
    %2515 = vmatprep.subr.mxu0 0.0
    %v2516 = vand.u32 %v170, 4294901760
    %2517 = vmatpush1.msra.mxu0 %v2516
    %2518 = vmatprep.subr.mxu0 0.0
    %v2519 = vand.u32 %v171, 4294901760
    %2520 = vmatpush1.msra.mxu0 %v2519
    %2521 = vmatprep.subr.mxu0 0.0
    %v2522 = vand.u32 %v172, 4294901760
    %2523 = vmatpush1.msra.mxu0 %v2522
    %2524 = vmatprep.subr.mxu0 0.0
    %v2525 = vand.u32 %v173, 4294901760
    %2526 = vmatpush1.msra.mxu0 %v2525
    %2527 = vmatprep.subr.mxu0 0.0
    %v2528 = vand.u32 %v174, 4294901760
    %2529 = vmatpush1.msra.mxu0 %v2528
    %2530 = vmatprep.subr.mxu0 0.0
    %v2531 = vand.u32 %v175, 4294901760
    %2532 = vmatpush1.msra.mxu0 %v2531
    %2533 = vmatprep.subr.mxu0 0.0
    %v2534 = vand.u32 %v176, 4294901760
    %2535 = vmatpush1.msra.mxu0 %v2534
    %2536 = vmatprep.subr.mxu0 0.0
    %v2537 = vand.u32 %v177, 4294901760
    %2538 = vmatpush1.msra.mxu0 %v2537
    %2539 = vmatprep.subr.mxu0 0.0
    %v2540 = vand.u32 %v178, 4294901760
    %2541 = vmatpush1.msra.mxu0 %v2540
    %2542 = vmatprep.subr.mxu0 0.0
    %v2543 = vand.u32 %v179, 4294901760
    %2544 = vmatpush1.msra.mxu0 %v2543
    %2545 = vmatprep.subr.mxu0 0.0
    %v2546 = vand.u32 %v180, 4294901760
    %2547 = vmatpush1.msra.mxu0 %v2546
    %2548 = vmatprep.subr.mxu0 0.0
    %v2549 = vand.u32 %v181, 4294901760
    %2550 = vmatpush1.msra.mxu0 %v2549
    %2551 = vmatprep.subr.mxu0 0.0
    %v2552 = vand.u32 %v182, 4294901760
    %2553 = vmatpush1.msra.mxu0 %v2552
    %2554 = vmatprep.subr.mxu0 0.0
    %v2555 = vand.u32 %v183, 4294901760
    %2556 = vmatpush1.msra.mxu0 %v2555
    %2557 = vmatprep.subr.mxu0 0.0
    %v2558 = vand.u32 %v184, 4294901760
    %2559 = vmatpush1.msra.mxu0 %v2558
    %2560 = vmatprep.subr.mxu0 0.0
    %v2561 = vand.u32 %v185, 4294901760
    %2562 = vmatpush1.msra.mxu0 %v2561
    %v2563 = vand.u32 %v254, 4294901760
    %v2564 = vsub.f32 %v254, %v2563
    %v2565 = vand.u32 %v2564, 4294901760
    %2566 = vmatprep.mubr.f32.mxu0 %v2565
    %v2567 = vand.u32 %v253, 4294901760
    %v2568 = vsub.f32 %v253, %v2567
    %v2569 = vand.u32 %v2568, 4294901760
    %2570 = vmatmul.mubr.f32.gmra.mrb[0].mxu0 %v2569
    %v2571 = vpop.f32.mrb[0].mxu0
    %v2572 = vadd.f32 %v2464, %v2571
    %v2573 = vpop.f32.mrb[0].mxu0
    %2574 = vdwg.mxu0
    %2575 = vmatprep.subr.mxu0 0.0
    %v2576 = vand.u32 %v154, 4294901760
    %v2577 = vsub.f32 %v154, %v2576
    %v2578 = vand.u32 %v2577, 4294901760
    %2579 = vmatpush1.msra.mxu0 %v2578
    %2580 = vmatprep.subr.mxu0 0.0
    %v2581 = vand.u32 %v155, 4294901760
    %v2582 = vsub.f32 %v155, %v2581
    %v2583 = vand.u32 %v2582, 4294901760
    %2584 = vmatpush1.msra.mxu0 %v2583
    %2585 = vmatprep.subr.mxu0 0.0
    %v2586 = vand.u32 %v156, 4294901760
    %v2587 = vsub.f32 %v156, %v2586
    %v2588 = vand.u32 %v2587, 4294901760
    %2589 = vmatpush1.msra.mxu0 %v2588
    %2590 = vmatprep.subr.mxu0 0.0
    %v2591 = vand.u32 %v157, 4294901760
    %v2592 = vsub.f32 %v157, %v2591
    %v2593 = vand.u32 %v2592, 4294901760
    %2594 = vmatpush1.msra.mxu0 %v2593
    %2595 = vmatprep.subr.mxu0 0.0
    %v2596 = vand.u32 %v158, 4294901760
    %v2597 = vsub.f32 %v158, %v2596
    %v2598 = vand.u32 %v2597, 4294901760
    %2599 = vmatpush1.msra.mxu0 %v2598
    %2600 = vmatprep.subr.mxu0 0.0
    %v2601 = vand.u32 %v159, 4294901760
    %v2602 = vsub.f32 %v159, %v2601
    %v2603 = vand.u32 %v2602, 4294901760
    %2604 = vmatpush1.msra.mxu0 %v2603
    %2605 = vmatprep.subr.mxu0 0.0
    %v2606 = vand.u32 %v160, 4294901760
    %v2607 = vsub.f32 %v160, %v2606
    %v2608 = vand.u32 %v2607, 4294901760
    %2609 = vmatpush1.msra.mxu0 %v2608
    %2610 = vmatprep.subr.mxu0 0.0
    %v2611 = vand.u32 %v161, 4294901760
    %v2612 = vsub.f32 %v161, %v2611
    %v2613 = vand.u32 %v2612, 4294901760
    %2614 = vmatpush1.msra.mxu0 %v2613
    %2615 = vmatprep.subr.mxu0 0.0
    %v2616 = vand.u32 %v162, 4294901760
    %v2617 = vsub.f32 %v162, %v2616
    %v2618 = vand.u32 %v2617, 4294901760
    %2619 = vmatpush1.msra.mxu0 %v2618
    %2620 = vmatprep.subr.mxu0 0.0
    %v2621 = vand.u32 %v163, 4294901760
    %v2622 = vsub.f32 %v163, %v2621
    %v2623 = vand.u32 %v2622, 4294901760
    %2624 = vmatpush1.msra.mxu0 %v2623
    %2625 = vmatprep.subr.mxu0 0.0
    %v2626 = vand.u32 %v164, 4294901760
    %v2627 = vsub.f32 %v164, %v2626
    %v2628 = vand.u32 %v2627, 4294901760
    %2629 = vmatpush1.msra.mxu0 %v2628
    %2630 = vmatprep.subr.mxu0 0.0
    %v2631 = vand.u32 %v165, 4294901760
    %v2632 = vsub.f32 %v165, %v2631
    %v2633 = vand.u32 %v2632, 4294901760
    %2634 = vmatpush1.msra.mxu0 %v2633
    %2635 = vmatprep.subr.mxu0 0.0
    %v2636 = vand.u32 %v166, 4294901760
    %v2637 = vsub.f32 %v166, %v2636
    %v2638 = vand.u32 %v2637, 4294901760
    %2639 = vmatpush1.msra.mxu0 %v2638
    %2640 = vmatprep.subr.mxu0 0.0
    %v2641 = vand.u32 %v167, 4294901760
    %v2642 = vsub.f32 %v167, %v2641
    %v2643 = vand.u32 %v2642, 4294901760
    %2644 = vmatpush1.msra.mxu0 %v2643
    %2645 = vmatprep.subr.mxu0 0.0
    %v2646 = vand.u32 %v168, 4294901760
    %v2647 = vsub.f32 %v168, %v2646
    %v2648 = vand.u32 %v2647, 4294901760
    %2649 = vmatpush1.msra.mxu0 %v2648
    %2650 = vmatprep.subr.mxu0 0.0
    %v2651 = vand.u32 %v169, 4294901760
    %v2652 = vsub.f32 %v169, %v2651
    %v2653 = vand.u32 %v2652, 4294901760
    %2654 = vmatpush1.msra.mxu0 %v2653
    %2655 = vmatprep.subr.mxu0 0.0
    %v2656 = vand.u32 %v170, 4294901760
    %v2657 = vsub.f32 %v170, %v2656
    %v2658 = vand.u32 %v2657, 4294901760
    %2659 = vmatpush1.msra.mxu0 %v2658
    %2660 = vmatprep.subr.mxu0 0.0
    %v2661 = vand.u32 %v171, 4294901760
    %v2662 = vsub.f32 %v171, %v2661
    %v2663 = vand.u32 %v2662, 4294901760
    %2664 = vmatpush1.msra.mxu0 %v2663
    %2665 = vmatprep.subr.mxu0 0.0
    %v2666 = vand.u32 %v172, 4294901760
    %v2667 = vsub.f32 %v172, %v2666
    %v2668 = vand.u32 %v2667, 4294901760
    %2669 = vmatpush1.msra.mxu0 %v2668
    %2670 = vmatprep.subr.mxu0 0.0
    %v2671 = vand.u32 %v173, 4294901760
    %v2672 = vsub.f32 %v173, %v2671
    %v2673 = vand.u32 %v2672, 4294901760
    %2674 = vmatpush1.msra.mxu0 %v2673
    %2675 = vmatprep.subr.mxu0 0.0
    %v2676 = vand.u32 %v174, 4294901760
    %v2677 = vsub.f32 %v174, %v2676
    %v2678 = vand.u32 %v2677, 4294901760
    %2679 = vmatpush1.msra.mxu0 %v2678
    %2680 = vmatprep.subr.mxu0 0.0
    %v2681 = vand.u32 %v175, 4294901760
    %v2682 = vsub.f32 %v175, %v2681
    %v2683 = vand.u32 %v2682, 4294901760
    %2684 = vmatpush1.msra.mxu0 %v2683
    %2685 = vmatprep.subr.mxu0 0.0
    %v2686 = vand.u32 %v176, 4294901760
    %v2687 = vsub.f32 %v176, %v2686
    %v2688 = vand.u32 %v2687, 4294901760
    %2689 = vmatpush1.msra.mxu0 %v2688
    %2690 = vmatprep.subr.mxu0 0.0
    %v2691 = vand.u32 %v177, 4294901760
    %v2692 = vsub.f32 %v177, %v2691
    %v2693 = vand.u32 %v2692, 4294901760
    %2694 = vmatpush1.msra.mxu0 %v2693
    %2695 = vmatprep.subr.mxu0 0.0
    %v2696 = vand.u32 %v178, 4294901760
    %v2697 = vsub.f32 %v178, %v2696
    %v2698 = vand.u32 %v2697, 4294901760
    %2699 = vmatpush1.msra.mxu0 %v2698
    %2700 = vmatprep.subr.mxu0 0.0
    %v2701 = vand.u32 %v179, 4294901760
    %v2702 = vsub.f32 %v179, %v2701
    %v2703 = vand.u32 %v2702, 4294901760
    %2704 = vmatpush1.msra.mxu0 %v2703
    %2705 = vmatprep.subr.mxu0 0.0
    %v2706 = vand.u32 %v180, 4294901760
    %v2707 = vsub.f32 %v180, %v2706
    %v2708 = vand.u32 %v2707, 4294901760
    %2709 = vmatpush1.msra.mxu0 %v2708
    %2710 = vmatprep.subr.mxu0 0.0
    %v2711 = vand.u32 %v181, 4294901760
    %v2712 = vsub.f32 %v181, %v2711
    %v2713 = vand.u32 %v2712, 4294901760
    %2714 = vmatpush1.msra.mxu0 %v2713
    %2715 = vmatprep.subr.mxu0 0.0
    %v2716 = vand.u32 %v182, 4294901760
    %v2717 = vsub.f32 %v182, %v2716
    %v2718 = vand.u32 %v2717, 4294901760
    %2719 = vmatpush1.msra.mxu0 %v2718
    %2720 = vmatprep.subr.mxu0 0.0
    %v2721 = vand.u32 %v183, 4294901760
    %v2722 = vsub.f32 %v183, %v2721
    %v2723 = vand.u32 %v2722, 4294901760
    %2724 = vmatpush1.msra.mxu0 %v2723
    %2725 = vmatprep.subr.mxu0 0.0
    %v2726 = vand.u32 %v184, 4294901760
    %v2727 = vsub.f32 %v184, %v2726
    %v2728 = vand.u32 %v2727, 4294901760
    %2729 = vmatpush1.msra.mxu0 %v2728
    %2730 = vmatprep.subr.mxu0 0.0
    %v2731 = vand.u32 %v185, 4294901760
    %v2732 = vsub.f32 %v185, %v2731
    %v2733 = vand.u32 %v2732, 4294901760
    %2734 = vmatpush1.msra.mxu0 %v2733
    %v2735 = vand.u32 %v254, 4294901760
    %2736 = vmatprep.mubr.f32.mxu0 %v2735
    %v2737 = vand.u32 %v253, 4294901760
    %2738 = vmatmul.mubr.f32.gmra.mrb[0].mxu0 %v2737
    %v2739 = vpop.f32.mrb[0].mxu0
    %v2740 = vadd.f32 %v2572, %v2739
    %v2741 = vpop.f32.mrb[0].mxu0
    %2742 = vdwg.mxu0
    %2743 = vmatprep.subr.mxu0 0.0
    %v2744 = vand.u32 %v154, 4294901760
    %2745 = vmatpush1.msra.mxu0 %v2744
    %2746 = vmatprep.subr.mxu0 0.0
    %v2747 = vand.u32 %v155, 4294901760
    %2748 = vmatpush1.msra.mxu0 %v2747
    %2749 = vmatprep.subr.mxu0 0.0
    %v2750 = vand.u32 %v156, 4294901760
    %2751 = vmatpush1.msra.mxu0 %v2750
    %2752 = vmatprep.subr.mxu0 0.0
    %v2753 = vand.u32 %v157, 4294901760
    %2754 = vmatpush1.msra.mxu0 %v2753
    %2755 = vmatprep.subr.mxu0 0.0
    %v2756 = vand.u32 %v158, 4294901760
    %2757 = vmatpush1.msra.mxu0 %v2756
    %2758 = vmatprep.subr.mxu0 0.0
    %v2759 = vand.u32 %v159, 4294901760
    %2760 = vmatpush1.msra.mxu0 %v2759
    %2761 = vmatprep.subr.mxu0 0.0
    %v2762 = vand.u32 %v160, 4294901760
    %2763 = vmatpush1.msra.mxu0 %v2762
    %2764 = vmatprep.subr.mxu0 0.0
    %v2765 = vand.u32 %v161, 4294901760
    %2766 = vmatpush1.msra.mxu0 %v2765
    %2767 = vmatprep.subr.mxu0 0.0
    %v2768 = vand.u32 %v162, 4294901760
    %2769 = vmatpush1.msra.mxu0 %v2768
    %2770 = vmatprep.subr.mxu0 0.0
    %v2771 = vand.u32 %v163, 4294901760
    %2772 = vmatpush1.msra.mxu0 %v2771
    %2773 = vmatprep.subr.mxu0 0.0
    %v2774 = vand.u32 %v164, 4294901760
    %2775 = vmatpush1.msra.mxu0 %v2774
    %2776 = vmatprep.subr.mxu0 0.0
    %v2777 = vand.u32 %v165, 4294901760
    %2778 = vmatpush1.msra.mxu0 %v2777
    %2779 = vmatprep.subr.mxu0 0.0
    %v2780 = vand.u32 %v166, 4294901760
    %2781 = vmatpush1.msra.mxu0 %v2780
    %2782 = vmatprep.subr.mxu0 0.0
    %v2783 = vand.u32 %v167, 4294901760
    %2784 = vmatpush1.msra.mxu0 %v2783
    %2785 = vmatprep.subr.mxu0 0.0
    %v2786 = vand.u32 %v168, 4294901760
    %2787 = vmatpush1.msra.mxu0 %v2786
    %2788 = vmatprep.subr.mxu0 0.0
    %v2789 = vand.u32 %v169, 4294901760
    %2790 = vmatpush1.msra.mxu0 %v2789
    %2791 = vmatprep.subr.mxu0 0.0
    %v2792 = vand.u32 %v170, 4294901760
    %2793 = vmatpush1.msra.mxu0 %v2792
    %2794 = vmatprep.subr.mxu0 0.0
    %v2795 = vand.u32 %v171, 4294901760
    %2796 = vmatpush1.msra.mxu0 %v2795
    %2797 = vmatprep.subr.mxu0 0.0
    %v2798 = vand.u32 %v172, 4294901760
    %2799 = vmatpush1.msra.mxu0 %v2798
    %2800 = vmatprep.subr.mxu0 0.0
    %v2801 = vand.u32 %v173, 4294901760
    %2802 = vmatpush1.msra.mxu0 %v2801
    %2803 = vmatprep.subr.mxu0 0.0
    %v2804 = vand.u32 %v174, 4294901760
    %2805 = vmatpush1.msra.mxu0 %v2804
    %2806 = vmatprep.subr.mxu0 0.0
    %v2807 = vand.u32 %v175, 4294901760
    %2808 = vmatpush1.msra.mxu0 %v2807
    %2809 = vmatprep.subr.mxu0 0.0
    %v2810 = vand.u32 %v176, 4294901760
    %2811 = vmatpush1.msra.mxu0 %v2810
    %2812 = vmatprep.subr.mxu0 0.0
    %v2813 = vand.u32 %v177, 4294901760
    %2814 = vmatpush1.msra.mxu0 %v2813
    %2815 = vmatprep.subr.mxu0 0.0
    %v2816 = vand.u32 %v178, 4294901760
    %2817 = vmatpush1.msra.mxu0 %v2816
    %2818 = vmatprep.subr.mxu0 0.0
    %v2819 = vand.u32 %v179, 4294901760
    %2820 = vmatpush1.msra.mxu0 %v2819
    %2821 = vmatprep.subr.mxu0 0.0
    %v2822 = vand.u32 %v180, 4294901760
    %2823 = vmatpush1.msra.mxu0 %v2822
    %2824 = vmatprep.subr.mxu0 0.0
    %v2825 = vand.u32 %v181, 4294901760
    %2826 = vmatpush1.msra.mxu0 %v2825
    %2827 = vmatprep.subr.mxu0 0.0
    %v2828 = vand.u32 %v182, 4294901760
    %2829 = vmatpush1.msra.mxu0 %v2828
    %2830 = vmatprep.subr.mxu0 0.0
    %v2831 = vand.u32 %v183, 4294901760
    %2832 = vmatpush1.msra.mxu0 %v2831
    %2833 = vmatprep.subr.mxu0 0.0
    %v2834 = vand.u32 %v184, 4294901760
    %2835 = vmatpush1.msra.mxu0 %v2834
    %2836 = vmatprep.subr.mxu0 0.0
    %v2837 = vand.u32 %v185, 4294901760
    %2838 = vmatpush1.msra.mxu0 %v2837
    %v2839 = vand.u32 %v254, 4294901760
    %2840 = vmatprep.mubr.f32.mxu0 %v2839
    %v2841 = vand.u32 %v253, 4294901760
    %2842 = vmatmul.mubr.f32.gmra.mrb[0].mxu0 %v2841
    %v2843 = vpop.f32.mrb[0].mxu0
    %v2844 = vadd.f32 %v2740, %v2843
    %v2845 = vpop.f32.mrb[0].mxu0
    %2846 = vdwg.mxu0
    %v2847 = vmax.f32 %v2844, 0.0
    %v2848 = vld [vmem:[#allocation7] sm:$0xff]
    %v2849 = vld [vmem:[#allocation7 + $0x8] sm:$0xff]
    %v2850 = vld [vmem:[#allocation7 + $0x10] sm:$0xff]
    %v2851 = vld [vmem:[#allocation7 + $0x18] sm:$0xff]
    %v2852 = vld [vmem:[#allocation7 + $0x20] sm:$0xff]
    %v2853 = vld [vmem:[#allocation7 + $0x28] sm:$0xff]
    %v2854 = vld [vmem:[#allocation7 + $0x30] sm:$0xff]
    %v2855 = vld [vmem:[#allocation7 + $0x38] sm:$0xff]
    %v2856 = vld [vmem:[#allocation7 + $0x40] sm:$0xff]
    %v2857 = vld [vmem:[#allocation7 + $0x48] sm:$0xff]
    %v2858 = vld [vmem:[#allocation7 + $0x50] sm:$0xff]
    %v2859 = vld [vmem:[#allocation7 + $0x58] sm:$0xff]
    %v2860 = vld [vmem:[#allocation7 + $0x60] sm:$0xff]
    %v2861 = vld [vmem:[#allocation7 + $0x68] sm:$0xff]
    %v2862 = vld [vmem:[#allocation7 + $0x70] sm:$0xff]
    %v2863 = vld [vmem:[#allocation7 + $0x78] sm:$0xff]
    %v2864 = vld [vmem:[%s4] sm:$0x1]
    %v2866 = vlaneseq
    %v2867 = vshrl.u32 %v2866, 7
    %v2868 = vsub.s32 0, %v2867
    %v2869 = vrot.slane %v2864, %v2868
    %2871 = vmatprep.subr.mxu0 0.0
    %v2872 = vand.u32 %v2848, 4294901760
    %2873 = vmatpush1.msra.mxu0 %v2872
    %2874 = vmatprep.subr.mxu0 0.0
    %v2875 = vand.u32 %v2849, 4294901760
    %2876 = vmatpush1.msra.mxu0 %v2875
    %2877 = vmatprep.subr.mxu0 0.0
    %v2878 = vand.u32 %v2850, 4294901760
    %2879 = vmatpush1.msra.mxu0 %v2878
    %2880 = vmatprep.subr.mxu0 0.0
    %v2881 = vand.u32 %v2851, 4294901760
    %2882 = vmatpush1.msra.mxu0 %v2881
    %2883 = vmatprep.subr.mxu0 0.0
    %v2884 = vand.u32 %v2852, 4294901760
    %2885 = vmatpush1.msra.mxu0 %v2884
    %2886 = vmatprep.subr.mxu0 0.0
    %v2887 = vand.u32 %v2853, 4294901760
    %2888 = vmatpush1.msra.mxu0 %v2887
    %2889 = vmatprep.subr.mxu0 0.0
    %v2890 = vand.u32 %v2854, 4294901760
    %2891 = vmatpush1.msra.mxu0 %v2890
    %2892 = vmatprep.subr.mxu0 0.0
    %v2893 = vand.u32 %v2855, 4294901760
    %2894 = vmatpush1.msra.mxu0 %v2893
    %2895 = vmatprep.subr.mxu0 0.0
    %v2896 = vand.u32 %v2856, 4294901760
    %2897 = vmatpush1.msra.mxu0 %v2896
    %2898 = vmatprep.subr.mxu0 0.0
    %v2899 = vand.u32 %v2857, 4294901760
    %2900 = vmatpush1.msra.mxu0 %v2899
    %2901 = vmatprep.subr.mxu0 0.0
    %v2902 = vand.u32 %v2858, 4294901760
    %2903 = vmatpush1.msra.mxu0 %v2902
    %2904 = vmatprep.subr.mxu0 0.0
    %v2905 = vand.u32 %v2859, 4294901760
    %2906 = vmatpush1.msra.mxu0 %v2905
    %2907 = vmatprep.subr.mxu0 0.0
    %v2908 = vand.u32 %v2860, 4294901760
    %2909 = vmatpush1.msra.mxu0 %v2908
    %2910 = vmatprep.subr.mxu0 0.0
    %v2911 = vand.u32 %v2861, 4294901760
    %2912 = vmatpush1.msra.mxu0 %v2911
    %2913 = vmatprep.subr.mxu0 0.0
    %v2914 = vand.u32 %v2862, 4294901760
    %2915 = vmatpush1.msra.mxu0 %v2914
    %2916 = vmatprep.subr.mxu0 0.0
    %v2917 = vand.u32 %v2863, 4294901760
    %2918 = vmatpush1.msra.mxu0 %v2917
    %2919 = vmatprep.subr.mxu0 0.0
    %2920 = vmatpush1.msra.mxu0 0.0
    %2921 = vmatprep.subr.mxu0 0.0
    %2922 = vmatpush1.msra.mxu0 0.0
    %2923 = vmatprep.subr.mxu0 0.0
    %2924 = vmatpush1.msra.mxu0 0.0
    %2925 = vmatprep.subr.mxu0 0.0
    %2926 = vmatpush1.msra.mxu0 0.0
    %2927 = vmatprep.subr.mxu0 0.0
    %2928 = vmatpush1.msra.mxu0 0.0
    %2929 = vmatprep.subr.mxu0 0.0
    %2930 = vmatpush1.msra.mxu0 0.0
    %2931 = vmatprep.subr.mxu0 0.0
    %2932 = vmatpush1.msra.mxu0 0.0
    %2933 = vmatprep.subr.mxu0 0.0
    %2934 = vmatpush1.msra.mxu0 0.0
    %2935 = vmatprep.subr.mxu0 0.0
    %2936 = vmatpush1.msra.mxu0 0.0
    %2937 = vmatprep.subr.mxu0 0.0
    %2938 = vmatpush1.msra.mxu0 0.0
    %2939 = vmatprep.subr.mxu0 0.0
    %2940 = vmatpush1.msra.mxu0 0.0
    %2941 = vmatprep.subr.mxu0 0.0
    %2942 = vmatpush1.msra.mxu0 0.0
    %2943 = vmatprep.subr.mxu0 0.0
    %2944 = vmatpush1.msra.mxu0 0.0
    %2945 = vmatprep.subr.mxu0 0.0
    %2946 = vmatpush1.msra.mxu0 0.0
    %2947 = vmatprep.subr.mxu0 0.0
    %2948 = vmatpush1.msra.mxu0 0.0
    %2949 = vmatprep.subr.mxu0 0.0
    %2950 = vmatpush1.msra.mxu0 0.0
    %2951 = vmatprep.mubr.f32.mxu0 0.0
    %v2952 = vand.u32 %v2847, 4294901760
    %v2953 = vsub.f32 %v2847, %v2952
    %v2954 = vand.u32 %v2953, 4294901760
    %v2955 = vsub.f32 %v2953, %v2954
    %v2956 = vand.u32 %v2955, 4294901760
    %2957 = vmatmul.mubr.f32.gmra.mrb[0].mxu0 %v2956
    %v2958 = vpop.f32.mrb[0].mxu0
    %v2959 = vadd.f32 %v2869, %v2958
    %v2960 = vpop.f32.mrb[0].mxu0
    %2961 = vdwg.mxu0
    %2962 = vmatprep.subr.mxu0 0.0
    %v2963 = vand.u32 %v2848, 4294901760
    %v2964 = vsub.f32 %v2848, %v2963
    %v2965 = vand.u32 %v2964, 4294901760
    %v2966 = vsub.f32 %v2964, %v2965
    %v2967 = vand.u32 %v2966, 4294901760
    %2968 = vmatpush1.msra.mxu0 %v2967
    %2969 = vmatprep.subr.mxu0 0.0
    %v2970 = vand.u32 %v2849, 4294901760
    %v2971 = vsub.f32 %v2849, %v2970
    %v2972 = vand.u32 %v2971, 4294901760
    %v2973 = vsub.f32 %v2971, %v2972
    %v2974 = vand.u32 %v2973, 4294901760
    %2975 = vmatpush1.msra.mxu0 %v2974
    %2976 = vmatprep.subr.mxu0 0.0
    %v2977 = vand.u32 %v2850, 4294901760
    %v2978 = vsub.f32 %v2850, %v2977
    %v2979 = vand.u32 %v2978, 4294901760
    %v2980 = vsub.f32 %v2978, %v2979
    %v2981 = vand.u32 %v2980, 4294901760
    %2982 = vmatpush1.msra.mxu0 %v2981
    %2983 = vmatprep.subr.mxu0 0.0
    %v2984 = vand.u32 %v2851, 4294901760
    %v2985 = vsub.f32 %v2851, %v2984
    %v2986 = vand.u32 %v2985, 4294901760
    %v2987 = vsub.f32 %v2985, %v2986
    %v2988 = vand.u32 %v2987, 4294901760
    %2989 = vmatpush1.msra.mxu0 %v2988
    %2990 = vmatprep.subr.mxu0 0.0
    %v2991 = vand.u32 %v2852, 4294901760
    %v2992 = vsub.f32 %v2852, %v2991
    %v2993 = vand.u32 %v2992, 4294901760
    %v2994 = vsub.f32 %v2992, %v2993
    %v2995 = vand.u32 %v2994, 4294901760
    %2996 = vmatpush1.msra.mxu0 %v2995
    %2997 = vmatprep.subr.mxu0 0.0
    %v2998 = vand.u32 %v2853, 4294901760
    %v2999 = vsub.f32 %v2853, %v2998
    %v3000 = vand.u32 %v2999, 4294901760
    %v3001 = vsub.f32 %v2999, %v3000
    %v3002 = vand.u32 %v3001, 4294901760
    %3003 = vmatpush1.msra.mxu0 %v3002
    %3004 = vmatprep.subr.mxu0 0.0
    %v3005 = vand.u32 %v2854, 4294901760
    %v3006 = vsub.f32 %v2854, %v3005
    %v3007 = vand.u32 %v3006, 4294901760
    %v3008 = vsub.f32 %v3006, %v3007
    %v3009 = vand.u32 %v3008, 4294901760
    %3010 = vmatpush1.msra.mxu0 %v3009
    %3011 = vmatprep.subr.mxu0 0.0
    %v3012 = vand.u32 %v2855, 4294901760
    %v3013 = vsub.f32 %v2855, %v3012
    %v3014 = vand.u32 %v3013, 4294901760
    %v3015 = vsub.f32 %v3013, %v3014
    %v3016 = vand.u32 %v3015, 4294901760
    %3017 = vmatpush1.msra.mxu0 %v3016
    %3018 = vmatprep.subr.mxu0 0.0
    %v3019 = vand.u32 %v2856, 4294901760
    %v3020 = vsub.f32 %v2856, %v3019
    %v3021 = vand.u32 %v3020, 4294901760
    %v3022 = vsub.f32 %v3020, %v3021
    %v3023 = vand.u32 %v3022, 4294901760
    %3024 = vmatpush1.msra.mxu0 %v3023
    %3025 = vmatprep.subr.mxu0 0.0
    %v3026 = vand.u32 %v2857, 4294901760
    %v3027 = vsub.f32 %v2857, %v3026
    %v3028 = vand.u32 %v3027, 4294901760
    %v3029 = vsub.f32 %v3027, %v3028
    %v3030 = vand.u32 %v3029, 4294901760
    %3031 = vmatpush1.msra.mxu0 %v3030
    %3032 = vmatprep.subr.mxu0 0.0
    %v3033 = vand.u32 %v2858, 4294901760
    %v3034 = vsub.f32 %v2858, %v3033
    %v3035 = vand.u32 %v3034, 4294901760
    %v3036 = vsub.f32 %v3034, %v3035
    %v3037 = vand.u32 %v3036, 4294901760
    %3038 = vmatpush1.msra.mxu0 %v3037
    %3039 = vmatprep.subr.mxu0 0.0
    %v3040 = vand.u32 %v2859, 4294901760
    %v3041 = vsub.f32 %v2859, %v3040
    %v3042 = vand.u32 %v3041, 4294901760
    %v3043 = vsub.f32 %v3041, %v3042
    %v3044 = vand.u32 %v3043, 4294901760
    %3045 = vmatpush1.msra.mxu0 %v3044
    %3046 = vmatprep.subr.mxu0 0.0
    %v3047 = vand.u32 %v2860, 4294901760
    %v3048 = vsub.f32 %v2860, %v3047
    %v3049 = vand.u32 %v3048, 4294901760
    %v3050 = vsub.f32 %v3048, %v3049
    %v3051 = vand.u32 %v3050, 4294901760
    %3052 = vmatpush1.msra.mxu0 %v3051
    %3053 = vmatprep.subr.mxu0 0.0
    %v3054 = vand.u32 %v2861, 4294901760
    %v3055 = vsub.f32 %v2861, %v3054
    %v3056 = vand.u32 %v3055, 4294901760
    %v3057 = vsub.f32 %v3055, %v3056
    %v3058 = vand.u32 %v3057, 4294901760
    %3059 = vmatpush1.msra.mxu0 %v3058
    %3060 = vmatprep.subr.mxu0 0.0
    %v3061 = vand.u32 %v2862, 4294901760
    %v3062 = vsub.f32 %v2862, %v3061
    %v3063 = vand.u32 %v3062, 4294901760
    %v3064 = vsub.f32 %v3062, %v3063
    %v3065 = vand.u32 %v3064, 4294901760
    %3066 = vmatpush1.msra.mxu0 %v3065
    %3067 = vmatprep.subr.mxu0 0.0
    %v3068 = vand.u32 %v2863, 4294901760
    %v3069 = vsub.f32 %v2863, %v3068
    %v3070 = vand.u32 %v3069, 4294901760
    %v3071 = vsub.f32 %v3069, %v3070
    %v3072 = vand.u32 %v3071, 4294901760
    %3073 = vmatpush1.msra.mxu0 %v3072
    %3074 = vmatprep.subr.mxu0 0.0
    %3075 = vmatpush1.msra.mxu0 0.0
    %3076 = vmatprep.subr.mxu0 0.0
    %3077 = vmatpush1.msra.mxu0 0.0
    %3078 = vmatprep.subr.mxu0 0.0
    %3079 = vmatpush1.msra.mxu0 0.0
    %3080 = vmatprep.subr.mxu0 0.0
    %3081 = vmatpush1.msra.mxu0 0.0
    %3082 = vmatprep.subr.mxu0 0.0
    %3083 = vmatpush1.msra.mxu0 0.0
    %3084 = vmatprep.subr.mxu0 0.0
    %3085 = vmatpush1.msra.mxu0 0.0
    %3086 = vmatprep.subr.mxu0 0.0
    %3087 = vmatpush1.msra.mxu0 0.0
    %3088 = vmatprep.subr.mxu0 0.0
    %3089 = vmatpush1.msra.mxu0 0.0
    %3090 = vmatprep.subr.mxu0 0.0
    %3091 = vmatpush1.msra.mxu0 0.0
    %3092 = vmatprep.subr.mxu0 0.0
    %3093 = vmatpush1.msra.mxu0 0.0
    %3094 = vmatprep.subr.mxu0 0.0
    %3095 = vmatpush1.msra.mxu0 0.0
    %3096 = vmatprep.subr.mxu0 0.0
    %3097 = vmatpush1.msra.mxu0 0.0
    %3098 = vmatprep.subr.mxu0 0.0
    %3099 = vmatpush1.msra.mxu0 0.0
    %3100 = vmatprep.subr.mxu0 0.0
    %3101 = vmatpush1.msra.mxu0 0.0
    %3102 = vmatprep.subr.mxu0 0.0
    %3103 = vmatpush1.msra.mxu0 0.0
    %3104 = vmatprep.subr.mxu0 0.0
    %3105 = vmatpush1.msra.mxu0 0.0
    %3106 = vmatprep.mubr.f32.mxu0 0.0
    %v3107 = vand.u32 %v2847, 4294901760
    %3108 = vmatmul.mubr.f32.gmra.mrb[0].mxu0 %v3107
    %v3109 = vpop.f32.mrb[0].mxu0
    %v3110 = vadd.f32 %v2959, %v3109
    %v3111 = vpop.f32.mrb[0].mxu0
    %3112 = vdwg.mxu0
    %3113 = vmatprep.subr.mxu0 0.0
    %v3114 = vand.u32 %v2848, 4294901760
    %v3115 = vsub.f32 %v2848, %v3114
    %3116 = vmatpush1.msra.mxu0 %v3115
    %3117 = vmatprep.subr.mxu0 0.0
    %v3118 = vand.u32 %v2849, 4294901760
    %v3119 = vsub.f32 %v2849, %v3118
    %3120 = vmatpush1.msra.mxu0 %v3119
    %3121 = vmatprep.subr.mxu0 0.0
    %v3122 = vand.u32 %v2850, 4294901760
    %v3123 = vsub.f32 %v2850, %v3122
    %3124 = vmatpush1.msra.mxu0 %v3123
    %3125 = vmatprep.subr.mxu0 0.0
    %v3126 = vand.u32 %v2851, 4294901760
    %v3127 = vsub.f32 %v2851, %v3126
    %3128 = vmatpush1.msra.mxu0 %v3127
    %3129 = vmatprep.subr.mxu0 0.0
    %v3130 = vand.u32 %v2852, 4294901760
    %v3131 = vsub.f32 %v2852, %v3130
    %3132 = vmatpush1.msra.mxu0 %v3131
    %3133 = vmatprep.subr.mxu0 0.0
    %v3134 = vand.u32 %v2853, 4294901760
    %v3135 = vsub.f32 %v2853, %v3134
    %3136 = vmatpush1.msra.mxu0 %v3135
    %3137 = vmatprep.subr.mxu0 0.0
    %v3138 = vand.u32 %v2854, 4294901760
    %v3139 = vsub.f32 %v2854, %v3138
    %3140 = vmatpush1.msra.mxu0 %v3139
    %3141 = vmatprep.subr.mxu0 0.0
    %v3142 = vand.u32 %v2855, 4294901760
    %v3143 = vsub.f32 %v2855, %v3142
    %3144 = vmatpush1.msra.mxu0 %v3143
    %3145 = vmatprep.subr.mxu0 0.0
    %v3146 = vand.u32 %v2856, 4294901760
    %v3147 = vsub.f32 %v2856, %v3146
    %3148 = vmatpush1.msra.mxu0 %v3147
    %3149 = vmatprep.subr.mxu0 0.0
    %v3150 = vand.u32 %v2857, 4294901760
    %v3151 = vsub.f32 %v2857, %v3150
    %3152 = vmatpush1.msra.mxu0 %v3151
    %3153 = vmatprep.subr.mxu0 0.0
    %v3154 = vand.u32 %v2858, 4294901760
    %v3155 = vsub.f32 %v2858, %v3154
    %3156 = vmatpush1.msra.mxu0 %v3155
    %3157 = vmatprep.subr.mxu0 0.0
    %v3158 = vand.u32 %v2859, 4294901760
    %v3159 = vsub.f32 %v2859, %v3158
    %3160 = vmatpush1.msra.mxu0 %v3159
    %3161 = vmatprep.subr.mxu0 0.0
    %v3162 = vand.u32 %v2860, 4294901760
    %v3163 = vsub.f32 %v2860, %v3162
    %3164 = vmatpush1.msra.mxu0 %v3163
    %3165 = vmatprep.subr.mxu0 0.0
    %v3166 = vand.u32 %v2861, 4294901760
    %v3167 = vsub.f32 %v2861, %v3166
    %3168 = vmatpush1.msra.mxu0 %v3167
    %3169 = vmatprep.subr.mxu0 0.0
    %v3170 = vand.u32 %v2862, 4294901760
    %v3171 = vsub.f32 %v2862, %v3170
    %3172 = vmatpush1.msra.mxu0 %v3171
    %3173 = vmatprep.subr.mxu0 0.0
    %v3174 = vand.u32 %v2863, 4294901760
    %v3175 = vsub.f32 %v2863, %v3174
    %3176 = vmatpush1.msra.mxu0 %v3175
    %3177 = vmatprep.subr.mxu0 0.0
    %3178 = vmatpush1.msra.mxu0 0.0
    %3179 = vmatprep.subr.mxu0 0.0
    %3180 = vmatpush1.msra.mxu0 0.0
    %3181 = vmatprep.subr.mxu0 0.0
    %3182 = vmatpush1.msra.mxu0 0.0
    %3183 = vmatprep.subr.mxu0 0.0
    %3184 = vmatpush1.msra.mxu0 0.0
    %3185 = vmatprep.subr.mxu0 0.0
    %3186 = vmatpush1.msra.mxu0 0.0
    %3187 = vmatprep.subr.mxu0 0.0
    %3188 = vmatpush1.msra.mxu0 0.0
    %3189 = vmatprep.subr.mxu0 0.0
    %3190 = vmatpush1.msra.mxu0 0.0
    %3191 = vmatprep.subr.mxu0 0.0
    %3192 = vmatpush1.msra.mxu0 0.0
    %3193 = vmatprep.subr.mxu0 0.0
    %3194 = vmatpush1.msra.mxu0 0.0
    %3195 = vmatprep.subr.mxu0 0.0
    %3196 = vmatpush1.msra.mxu0 0.0
    %3197 = vmatprep.subr.mxu0 0.0
    %3198 = vmatpush1.msra.mxu0 0.0
    %3199 = vmatprep.subr.mxu0 0.0
    %3200 = vmatpush1.msra.mxu0 0.0
    %3201 = vmatprep.subr.mxu0 0.0
    %3202 = vmatpush1.msra.mxu0 0.0
    %3203 = vmatprep.subr.mxu0 0.0
    %3204 = vmatpush1.msra.mxu0 0.0
    %3205 = vmatprep.subr.mxu0 0.0
    %3206 = vmatpush1.msra.mxu0 0.0
    %3207 = vmatprep.subr.mxu0 0.0
    %3208 = vmatpush1.msra.mxu0 0.0
    %3209 = vmatprep.mubr.f32.mxu0 0.0
    %v3210 = vand.u32 %v2847, 4294901760
    %v3211 = vsub.f32 %v2847, %v3210
    %3212 = vmatmul.mubr.f32.gmra.mrb[0].mxu0 %v3211
    %v3213 = vpop.f32.mrb[0].mxu0
    %v3214 = vadd.f32 %v3110, %v3213
    %v3215 = vpop.f32.mrb[0].mxu0
    %3216 = vdwg.mxu0
    %3217 = vmatprep.subr.mxu0 0.0
    %v3218 = vand.u32 %v2848, 4294901760
    %3219 = vmatpush1.msra.mxu0 %v3218
    %3220 = vmatprep.subr.mxu0 0.0
    %v3221 = vand.u32 %v2849, 4294901760
    %3222 = vmatpush1.msra.mxu0 %v3221
    %3223 = vmatprep.subr.mxu0 0.0
    %v3224 = vand.u32 %v2850, 4294901760
    %3225 = vmatpush1.msra.mxu0 %v3224
    %3226 = vmatprep.subr.mxu0 0.0
    %v3227 = vand.u32 %v2851, 4294901760
    %3228 = vmatpush1.msra.mxu0 %v3227
    %3229 = vmatprep.subr.mxu0 0.0
    %v3230 = vand.u32 %v2852, 4294901760
    %3231 = vmatpush1.msra.mxu0 %v3230
    %3232 = vmatprep.subr.mxu0 0.0
    %v3233 = vand.u32 %v2853, 4294901760
    %3234 = vmatpush1.msra.mxu0 %v3233
    %3235 = vmatprep.subr.mxu0 0.0
    %v3236 = vand.u32 %v2854, 4294901760
    %3237 = vmatpush1.msra.mxu0 %v3236
    %3238 = vmatprep.subr.mxu0 0.0
    %v3239 = vand.u32 %v2855, 4294901760
    %3240 = vmatpush1.msra.mxu0 %v3239
    %3241 = vmatprep.subr.mxu0 0.0
    %v3242 = vand.u32 %v2856, 4294901760
    %3243 = vmatpush1.msra.mxu0 %v3242
    %3244 = vmatprep.subr.mxu0 0.0
    %v3245 = vand.u32 %v2857, 4294901760
    %3246 = vmatpush1.msra.mxu0 %v3245
    %3247 = vmatprep.subr.mxu0 0.0
    %v3248 = vand.u32 %v2858, 4294901760
    %3249 = vmatpush1.msra.mxu0 %v3248
    %3250 = vmatprep.subr.mxu0 0.0
    %v3251 = vand.u32 %v2859, 4294901760
    %3252 = vmatpush1.msra.mxu0 %v3251
    %3253 = vmatprep.subr.mxu0 0.0
    %v3254 = vand.u32 %v2860, 4294901760
    %3255 = vmatpush1.msra.mxu0 %v3254
    %3256 = vmatprep.subr.mxu0 0.0
    %v3257 = vand.u32 %v2861, 4294901760
    %3258 = vmatpush1.msra.mxu0 %v3257
    %3259 = vmatprep.subr.mxu0 0.0
    %v3260 = vand.u32 %v2862, 4294901760
    %3261 = vmatpush1.msra.mxu0 %v3260
    %3262 = vmatprep.subr.mxu0 0.0
    %v3263 = vand.u32 %v2863, 4294901760
    %3264 = vmatpush1.msra.mxu0 %v3263
    %3265 = vmatprep.subr.mxu0 0.0
    %3266 = vmatpush1.msra.mxu0 0.0
    %3267 = vmatprep.subr.mxu0 0.0
    %3268 = vmatpush1.msra.mxu0 0.0
    %3269 = vmatprep.subr.mxu0 0.0
    %3270 = vmatpush1.msra.mxu0 0.0
    %3271 = vmatprep.subr.mxu0 0.0
    %3272 = vmatpush1.msra.mxu0 0.0
    %3273 = vmatprep.subr.mxu0 0.0
    %3274 = vmatpush1.msra.mxu0 0.0
    %3275 = vmatprep.subr.mxu0 0.0
    %3276 = vmatpush1.msra.mxu0 0.0
    %3277 = vmatprep.subr.mxu0 0.0
    %3278 = vmatpush1.msra.mxu0 0.0
    %3279 = vmatprep.subr.mxu0 0.0
    %3280 = vmatpush1.msra.mxu0 0.0
    %3281 = vmatprep.subr.mxu0 0.0
    %3282 = vmatpush1.msra.mxu0 0.0
    %3283 = vmatprep.subr.mxu0 0.0
    %3284 = vmatpush1.msra.mxu0 0.0
    %3285 = vmatprep.subr.mxu0 0.0
    %3286 = vmatpush1.msra.mxu0 0.0
    %3287 = vmatprep.subr.mxu0 0.0
    %3288 = vmatpush1.msra.mxu0 0.0
    %3289 = vmatprep.subr.mxu0 0.0
    %3290 = vmatpush1.msra.mxu0 0.0
    %3291 = vmatprep.subr.mxu0 0.0
    %3292 = vmatpush1.msra.mxu0 0.0
    %3293 = vmatprep.subr.mxu0 0.0
    %3294 = vmatpush1.msra.mxu0 0.0
    %3295 = vmatprep.subr.mxu0 0.0
    %3296 = vmatpush1.msra.mxu0 0.0
    %3297 = vmatprep.mubr.f32.mxu0 0.0
    %v3298 = vand.u32 %v2847, 4294901760
    %v3299 = vsub.f32 %v2847, %v3298
    %v3300 = vand.u32 %v3299, 4294901760
    %3301 = vmatmul.mubr.f32.gmra.mrb[0].mxu0 %v3300
    %v3302 = vpop.f32.mrb[0].mxu0
    %v3303 = vadd.f32 %v3214, %v3302
    %v3304 = vpop.f32.mrb[0].mxu0
    %3305 = vdwg.mxu0
    %3306 = vmatprep.subr.mxu0 0.0
    %v3307 = vand.u32 %v2848, 4294901760
    %v3308 = vsub.f32 %v2848, %v3307
    %v3309 = vand.u32 %v3308, 4294901760
    %3310 = vmatpush1.msra.mxu0 %v3309
    %3311 = vmatprep.subr.mxu0 0.0
    %v3312 = vand.u32 %v2849, 4294901760
    %v3313 = vsub.f32 %v2849, %v3312
    %v3314 = vand.u32 %v3313, 4294901760
    %3315 = vmatpush1.msra.mxu0 %v3314
    %3316 = vmatprep.subr.mxu0 0.0
    %v3317 = vand.u32 %v2850, 4294901760
    %v3318 = vsub.f32 %v2850, %v3317
    %v3319 = vand.u32 %v3318, 4294901760
    %3320 = vmatpush1.msra.mxu0 %v3319
    %3321 = vmatprep.subr.mxu0 0.0
    %v3322 = vand.u32 %v2851, 4294901760
    %v3323 = vsub.f32 %v2851, %v3322
    %v3324 = vand.u32 %v3323, 4294901760
    %3325 = vmatpush1.msra.mxu0 %v3324
    %3326 = vmatprep.subr.mxu0 0.0
    %v3327 = vand.u32 %v2852, 4294901760
    %v3328 = vsub.f32 %v2852, %v3327
    %v3329 = vand.u32 %v3328, 4294901760
    %3330 = vmatpush1.msra.mxu0 %v3329
    %3331 = vmatprep.subr.mxu0 0.0
    %v3332 = vand.u32 %v2853, 4294901760
    %v3333 = vsub.f32 %v2853, %v3332
    %v3334 = vand.u32 %v3333, 4294901760
    %3335 = vmatpush1.msra.mxu0 %v3334
    %3336 = vmatprep.subr.mxu0 0.0
    %v3337 = vand.u32 %v2854, 4294901760
    %v3338 = vsub.f32 %v2854, %v3337
    %v3339 = vand.u32 %v3338, 4294901760
    %3340 = vmatpush1.msra.mxu0 %v3339
    %3341 = vmatprep.subr.mxu0 0.0
    %v3342 = vand.u32 %v2855, 4294901760
    %v3343 = vsub.f32 %v2855, %v3342
    %v3344 = vand.u32 %v3343, 4294901760
    %3345 = vmatpush1.msra.mxu0 %v3344
    %3346 = vmatprep.subr.mxu0 0.0
    %v3347 = vand.u32 %v2856, 4294901760
    %v3348 = vsub.f32 %v2856, %v3347
    %v3349 = vand.u32 %v3348, 4294901760
    %3350 = vmatpush1.msra.mxu0 %v3349
    %3351 = vmatprep.subr.mxu0 0.0
    %v3352 = vand.u32 %v2857, 4294901760
    %v3353 = vsub.f32 %v2857, %v3352
    %v3354 = vand.u32 %v3353, 4294901760
    %3355 = vmatpush1.msra.mxu0 %v3354
    %3356 = vmatprep.subr.mxu0 0.0
    %v3357 = vand.u32 %v2858, 4294901760
    %v3358 = vsub.f32 %v2858, %v3357
    %v3359 = vand.u32 %v3358, 4294901760
    %3360 = vmatpush1.msra.mxu0 %v3359
    %3361 = vmatprep.subr.mxu0 0.0
    %v3362 = vand.u32 %v2859, 4294901760
    %v3363 = vsub.f32 %v2859, %v3362
    %v3364 = vand.u32 %v3363, 4294901760
    %3365 = vmatpush1.msra.mxu0 %v3364
    %3366 = vmatprep.subr.mxu0 0.0
    %v3367 = vand.u32 %v2860, 4294901760
    %v3368 = vsub.f32 %v2860, %v3367
    %v3369 = vand.u32 %v3368, 4294901760
    %3370 = vmatpush1.msra.mxu0 %v3369
    %3371 = vmatprep.subr.mxu0 0.0
    %v3372 = vand.u32 %v2861, 4294901760
    %v3373 = vsub.f32 %v2861, %v3372
    %v3374 = vand.u32 %v3373, 4294901760
    %3375 = vmatpush1.msra.mxu0 %v3374
    %3376 = vmatprep.subr.mxu0 0.0
    %v3377 = vand.u32 %v2862, 4294901760
    %v3378 = vsub.f32 %v2862, %v3377
    %v3379 = vand.u32 %v3378, 4294901760
    %3380 = vmatpush1.msra.mxu0 %v3379
    %3381 = vmatprep.subr.mxu0 0.0
    %v3382 = vand.u32 %v2863, 4294901760
    %v3383 = vsub.f32 %v2863, %v3382
    %v3384 = vand.u32 %v3383, 4294901760
    %3385 = vmatpush1.msra.mxu0 %v3384
    %3386 = vmatprep.subr.mxu0 0.0
    %3387 = vmatpush1.msra.mxu0 0.0
    %3388 = vmatprep.subr.mxu0 0.0
    %3389 = vmatpush1.msra.mxu0 0.0
    %3390 = vmatprep.subr.mxu0 0.0
    %3391 = vmatpush1.msra.mxu0 0.0
    %3392 = vmatprep.subr.mxu0 0.0
    %3393 = vmatpush1.msra.mxu0 0.0
    %3394 = vmatprep.subr.mxu0 0.0
    %3395 = vmatpush1.msra.mxu0 0.0
    %3396 = vmatprep.subr.mxu0 0.0
    %3397 = vmatpush1.msra.mxu0 0.0
    %3398 = vmatprep.subr.mxu0 0.0
    %3399 = vmatpush1.msra.mxu0 0.0
    %3400 = vmatprep.subr.mxu0 0.0
    %3401 = vmatpush1.msra.mxu0 0.0
    %3402 = vmatprep.subr.mxu0 0.0
    %3403 = vmatpush1.msra.mxu0 0.0
    %3404 = vmatprep.subr.mxu0 0.0
    %3405 = vmatpush1.msra.mxu0 0.0
    %3406 = vmatprep.subr.mxu0 0.0
    %3407 = vmatpush1.msra.mxu0 0.0
    %3408 = vmatprep.subr.mxu0 0.0
    %3409 = vmatpush1.msra.mxu0 0.0
    %3410 = vmatprep.subr.mxu0 0.0
    %3411 = vmatpush1.msra.mxu0 0.0
    %3412 = vmatprep.subr.mxu0 0.0
    %3413 = vmatpush1.msra.mxu0 0.0
    %3414 = vmatprep.subr.mxu0 0.0
    %3415 = vmatpush1.msra.mxu0 0.0
    %3416 = vmatprep.subr.mxu0 0.0
    %3417 = vmatpush1.msra.mxu0 0.0
    %3418 = vmatprep.mubr.f32.mxu0 0.0
    %v3419 = vand.u32 %v2847, 4294901760
    %3420 = vmatmul.mubr.f32.gmra.mrb[0].mxu0 %v3419
    %v3421 = vpop.f32.mrb[0].mxu0
    %v3422 = vadd.f32 %v3303, %v3421
    %v3423 = vpop.f32.mrb[0].mxu0
    %3424 = vdwg.mxu0
    %3425 = vmatprep.subr.mxu0 0.0
    %v3426 = vand.u32 %v2848, 4294901760
    %3427 = vmatpush1.msra.mxu0 %v3426
    %3428 = vmatprep.subr.mxu0 0.0
    %v3429 = vand.u32 %v2849, 4294901760
    %3430 = vmatpush1.msra.mxu0 %v3429
    %3431 = vmatprep.subr.mxu0 0.0
    %v3432 = vand.u32 %v2850, 4294901760
    %3433 = vmatpush1.msra.mxu0 %v3432
    %3434 = vmatprep.subr.mxu0 0.0
    %v3435 = vand.u32 %v2851, 4294901760
    %3436 = vmatpush1.msra.mxu0 %v3435
    %3437 = vmatprep.subr.mxu0 0.0
    %v3438 = vand.u32 %v2852, 4294901760
    %3439 = vmatpush1.msra.mxu0 %v3438
    %3440 = vmatprep.subr.mxu0 0.0
    %v3441 = vand.u32 %v2853, 4294901760
    %3442 = vmatpush1.msra.mxu0 %v3441
    %3443 = vmatprep.subr.mxu0 0.0
    %v3444 = vand.u32 %v2854, 4294901760
    %3445 = vmatpush1.msra.mxu0 %v3444
    %3446 = vmatprep.subr.mxu0 0.0
    %v3447 = vand.u32 %v2855, 4294901760
    %3448 = vmatpush1.msra.mxu0 %v3447
    %3449 = vmatprep.subr.mxu0 0.0
    %v3450 = vand.u32 %v2856, 4294901760
    %3451 = vmatpush1.msra.mxu0 %v3450
    %3452 = vmatprep.subr.mxu0 0.0
    %v3453 = vand.u32 %v2857, 4294901760
    %3454 = vmatpush1.msra.mxu0 %v3453
    %3455 = vmatprep.subr.mxu0 0.0
    %v3456 = vand.u32 %v2858, 4294901760
    %3457 = vmatpush1.msra.mxu0 %v3456
    %3458 = vmatprep.subr.mxu0 0.0
    %v3459 = vand.u32 %v2859, 4294901760
    %3460 = vmatpush1.msra.mxu0 %v3459
    %3461 = vmatprep.subr.mxu0 0.0
    %v3462 = vand.u32 %v2860, 4294901760
    %3463 = vmatpush1.msra.mxu0 %v3462
    %3464 = vmatprep.subr.mxu0 0.0
    %v3465 = vand.u32 %v2861, 4294901760
    %3466 = vmatpush1.msra.mxu0 %v3465
    %3467 = vmatprep.subr.mxu0 0.0
    %v3468 = vand.u32 %v2862, 4294901760
    %3469 = vmatpush1.msra.mxu0 %v3468
    %3470 = vmatprep.subr.mxu0 0.0
    %v3471 = vand.u32 %v2863, 4294901760
    %3472 = vmatpush1.msra.mxu0 %v3471
    %3473 = vmatprep.subr.mxu0 0.0
    %3474 = vmatpush1.msra.mxu0 0.0
    %3475 = vmatprep.subr.mxu0 0.0
    %3476 = vmatpush1.msra.mxu0 0.0
    %3477 = vmatprep.subr.mxu0 0.0
    %3478 = vmatpush1.msra.mxu0 0.0
    %3479 = vmatprep.subr.mxu0 0.0
    %3480 = vmatpush1.msra.mxu0 0.0
    %3481 = vmatprep.subr.mxu0 0.0
    %3482 = vmatpush1.msra.mxu0 0.0
    %3483 = vmatprep.subr.mxu0 0.0
    %3484 = vmatpush1.msra.mxu0 0.0
    %3485 = vmatprep.subr.mxu0 0.0
    %3486 = vmatpush1.msra.mxu0 0.0
    %3487 = vmatprep.subr.mxu0 0.0
    %3488 = vmatpush1.msra.mxu0 0.0
    %3489 = vmatprep.subr.mxu0 0.0
    %3490 = vmatpush1.msra.mxu0 0.0
    %3491 = vmatprep.subr.mxu0 0.0
    %3492 = vmatpush1.msra.mxu0 0.0
    %3493 = vmatprep.subr.mxu0 0.0
    %3494 = vmatpush1.msra.mxu0 0.0
    %3495 = vmatprep.subr.mxu0 0.0
    %3496 = vmatpush1.msra.mxu0 0.0
    %3497 = vmatprep.subr.mxu0 0.0
    %3498 = vmatpush1.msra.mxu0 0.0
    %3499 = vmatprep.subr.mxu0 0.0
    %3500 = vmatpush1.msra.mxu0 0.0
    %3501 = vmatprep.subr.mxu0 0.0
    %3502 = vmatpush1.msra.mxu0 0.0
    %3503 = vmatprep.subr.mxu0 0.0
    %3504 = vmatpush1.msra.mxu0 0.0
    %3505 = vmatprep.mubr.f32.mxu0 0.0
    %v3506 = vand.u32 %v2847, 4294901760
    %3507 = vmatmul.mubr.f32.gmra.mrb[0].mxu0 %v3506
    %v3508 = vpop.f32.mrb[0].mxu0
    %v3509 = vadd.f32 %v3422, %v3508
    %v3510 = vpop.f32.mrb[0].mxu0
    %3511 = vdwg.mxu0
    %v3512 = vmax.f32 %v3509, 0.0
    %v3513 = vld [vmem:[#allocation8] sm:$0xff]
    %v3514 = vld [vmem:[#allocation8 + $0x8] sm:$0xff]
    %v3515 = vld [vmem:[#allocation8 + $0x10] sm:$0xff]
    %v3516 = vld [vmem:[#allocation8 + $0x18] sm:$0xff]
    %v3517 = vld [vmem:[#allocation8 + $0x20] sm:$0xff]
    %v3518 = vld [vmem:[#allocation8 + $0x28] sm:$0xff]
    %v3519 = vld [vmem:[#allocation8 + $0x30] sm:$0xff]
    %v3520 = vld [vmem:[#allocation8 + $0x38] sm:$0xff]
    %v3521 = vld [vmem:[#allocation8 + $0x40] sm:$0xff]
    %v3522 = vld [vmem:[#allocation8 + $0x48] sm:$0xff]
    %v3523 = vld [vmem:[#allocation8 + $0x50] sm:$0xff]
    %v3524 = vld [vmem:[#allocation8 + $0x58] sm:$0xff]
    %v3525 = vld [vmem:[#allocation8 + $0x60] sm:$0xff]
    %v3526 = vld [vmem:[#allocation8 + $0x68] sm:$0xff]
    %v3527 = vld [vmem:[#allocation8 + $0x70] sm:$0xff]
    %v3528 = vld [vmem:[#allocation8 + $0x78] sm:$0xff]
    %v3529 = vld [vmem:[%s6] sm:$0x1]
    %v3531 = vlaneseq
    %v3532 = vshrl.u32 %v3531, 7
    %v3533 = vsub.s32 0, %v3532
    %v3534 = vrot.slane %v3529, %v3533
    %3536 = vmatprep.subr.mxu0 0.0
    %v3537 = vand.u32 %v3513, 4294901760
    %3538 = vmatpush1.msra.mxu0 %v3537
    %3539 = vmatprep.subr.mxu0 0.0
    %v3540 = vand.u32 %v3514, 4294901760
    %3541 = vmatpush1.msra.mxu0 %v3540
    %3542 = vmatprep.subr.mxu0 0.0
    %v3543 = vand.u32 %v3515, 4294901760
    %3544 = vmatpush1.msra.mxu0 %v3543
    %3545 = vmatprep.subr.mxu0 0.0
    %v3546 = vand.u32 %v3516, 4294901760
    %3547 = vmatpush1.msra.mxu0 %v3546
    %3548 = vmatprep.subr.mxu0 0.0
    %v3549 = vand.u32 %v3517, 4294901760
    %3550 = vmatpush1.msra.mxu0 %v3549
    %3551 = vmatprep.subr.mxu0 0.0
    %v3552 = vand.u32 %v3518, 4294901760
    %3553 = vmatpush1.msra.mxu0 %v3552
    %3554 = vmatprep.subr.mxu0 0.0
    %v3555 = vand.u32 %v3519, 4294901760
    %3556 = vmatpush1.msra.mxu0 %v3555
    %3557 = vmatprep.subr.mxu0 0.0
    %v3558 = vand.u32 %v3520, 4294901760
    %3559 = vmatpush1.msra.mxu0 %v3558
    %3560 = vmatprep.subr.mxu0 0.0
    %v3561 = vand.u32 %v3521, 4294901760
    %3562 = vmatpush1.msra.mxu0 %v3561
    %3563 = vmatprep.subr.mxu0 0.0
    %v3564 = vand.u32 %v3522, 4294901760
    %3565 = vmatpush1.msra.mxu0 %v3564
    %3566 = vmatprep.subr.mxu0 0.0
    %v3567 = vand.u32 %v3523, 4294901760
    %3568 = vmatpush1.msra.mxu0 %v3567
    %3569 = vmatprep.subr.mxu0 0.0
    %v3570 = vand.u32 %v3524, 4294901760
    %3571 = vmatpush1.msra.mxu0 %v3570
    %3572 = vmatprep.subr.mxu0 0.0
    %v3573 = vand.u32 %v3525, 4294901760
    %3574 = vmatpush1.msra.mxu0 %v3573
    %3575 = vmatprep.subr.mxu0 0.0
    %v3576 = vand.u32 %v3526, 4294901760
    %3577 = vmatpush1.msra.mxu0 %v3576
    %3578 = vmatprep.subr.mxu0 0.0
    %v3579 = vand.u32 %v3527, 4294901760
    %3580 = vmatpush1.msra.mxu0 %v3579
    %3581 = vmatprep.subr.mxu0 0.0
    %v3582 = vand.u32 %v3528, 4294901760
    %3583 = vmatpush1.msra.mxu0 %v3582
    %3584 = vmatprep.subr.mxu0 0.0
    %3585 = vmatpush1.msra.mxu0 0.0
    %3586 = vmatprep.subr.mxu0 0.0
    %3587 = vmatpush1.msra.mxu0 0.0
    %3588 = vmatprep.subr.mxu0 0.0
    %3589 = vmatpush1.msra.mxu0 0.0
    %3590 = vmatprep.subr.mxu0 0.0
    %3591 = vmatpush1.msra.mxu0 0.0
    %3592 = vmatprep.subr.mxu0 0.0
    %3593 = vmatpush1.msra.mxu0 0.0
    %3594 = vmatprep.subr.mxu0 0.0
    %3595 = vmatpush1.msra.mxu0 0.0
    %3596 = vmatprep.subr.mxu0 0.0
    %3597 = vmatpush1.msra.mxu0 0.0
    %3598 = vmatprep.subr.mxu0 0.0
    %3599 = vmatpush1.msra.mxu0 0.0
    %3600 = vmatprep.subr.mxu0 0.0
    %3601 = vmatpush1.msra.mxu0 0.0
    %3602 = vmatprep.subr.mxu0 0.0
    %3603 = vmatpush1.msra.mxu0 0.0
    %3604 = vmatprep.subr.mxu0 0.0
    %3605 = vmatpush1.msra.mxu0 0.0
    %3606 = vmatprep.subr.mxu0 0.0
    %3607 = vmatpush1.msra.mxu0 0.0
    %3608 = vmatprep.subr.mxu0 0.0
    %3609 = vmatpush1.msra.mxu0 0.0
    %3610 = vmatprep.subr.mxu0 0.0
    %3611 = vmatpush1.msra.mxu0 0.0
    %3612 = vmatprep.subr.mxu0 0.0
    %3613 = vmatpush1.msra.mxu0 0.0
    %3614 = vmatprep.subr.mxu0 0.0
    %3615 = vmatpush1.msra.mxu0 0.0
    %3616 = vmatprep.mubr.f32.mxu0 0.0
    %v3617 = vand.u32 %v3512, 4294901760
    %v3618 = vsub.f32 %v3512, %v3617
    %v3619 = vand.u32 %v3618, 4294901760
    %v3620 = vsub.f32 %v3618, %v3619
    %v3621 = vand.u32 %v3620, 4294901760
    %3622 = vmatmul.mubr.f32.gmra.mrb[0].mxu0 %v3621
    %v3623 = vpop.f32.mrb[0].mxu0
    %v3624 = vadd.f32 %v3534, %v3623
    %v3625 = vpop.f32.mrb[0].mxu0
    %3626 = vdwg.mxu0
    %3627 = vmatprep.subr.mxu0 0.0
    %v3628 = vand.u32 %v3513, 4294901760
    %v3629 = vsub.f32 %v3513, %v3628
    %v3630 = vand.u32 %v3629, 4294901760
    %v3631 = vsub.f32 %v3629, %v3630
    %v3632 = vand.u32 %v3631, 4294901760
    %3633 = vmatpush1.msra.mxu0 %v3632
    %3634 = vmatprep.subr.mxu0 0.0
    %v3635 = vand.u32 %v3514, 4294901760
    %v3636 = vsub.f32 %v3514, %v3635
    %v3637 = vand.u32 %v3636, 4294901760
    %v3638 = vsub.f32 %v3636, %v3637
    %v3639 = vand.u32 %v3638, 4294901760
    %3640 = vmatpush1.msra.mxu0 %v3639
    %3641 = vmatprep.subr.mxu0 0.0
    %v3642 = vand.u32 %v3515, 4294901760
    %v3643 = vsub.f32 %v3515, %v3642
    %v3644 = vand.u32 %v3643, 4294901760
    %v3645 = vsub.f32 %v3643, %v3644
    %v3646 = vand.u32 %v3645, 4294901760
    %3647 = vmatpush1.msra.mxu0 %v3646
    %3648 = vmatprep.subr.mxu0 0.0
    %v3649 = vand.u32 %v3516, 4294901760
    %v3650 = vsub.f32 %v3516, %v3649
    %v3651 = vand.u32 %v3650, 4294901760
    %v3652 = vsub.f32 %v3650, %v3651
    %v3653 = vand.u32 %v3652, 4294901760
    %3654 = vmatpush1.msra.mxu0 %v3653
    %3655 = vmatprep.subr.mxu0 0.0
    %v3656 = vand.u32 %v3517, 4294901760
    %v3657 = vsub.f32 %v3517, %v3656
    %v3658 = vand.u32 %v3657, 4294901760
    %v3659 = vsub.f32 %v3657, %v3658
    %v3660 = vand.u32 %v3659, 4294901760
    %3661 = vmatpush1.msra.mxu0 %v3660
    %3662 = vmatprep.subr.mxu0 0.0
    %v3663 = vand.u32 %v3518, 4294901760
    %v3664 = vsub.f32 %v3518, %v3663
    %v3665 = vand.u32 %v3664, 4294901760
    %v3666 = vsub.f32 %v3664, %v3665
    %v3667 = vand.u32 %v3666, 4294901760
    %3668 = vmatpush1.msra.mxu0 %v3667
    %3669 = vmatprep.subr.mxu0 0.0
    %v3670 = vand.u32 %v3519, 4294901760
    %v3671 = vsub.f32 %v3519, %v3670
    %v3672 = vand.u32 %v3671, 4294901760
    %v3673 = vsub.f32 %v3671, %v3672
    %v3674 = vand.u32 %v3673, 4294901760
    %3675 = vmatpush1.msra.mxu0 %v3674
    %3676 = vmatprep.subr.mxu0 0.0
    %v3677 = vand.u32 %v3520, 4294901760
    %v3678 = vsub.f32 %v3520, %v3677
    %v3679 = vand.u32 %v3678, 4294901760
    %v3680 = vsub.f32 %v3678, %v3679
    %v3681 = vand.u32 %v3680, 4294901760
    %3682 = vmatpush1.msra.mxu0 %v3681
    %3683 = vmatprep.subr.mxu0 0.0
    %v3684 = vand.u32 %v3521, 4294901760
    %v3685 = vsub.f32 %v3521, %v3684
    %v3686 = vand.u32 %v3685, 4294901760
    %v3687 = vsub.f32 %v3685, %v3686
    %v3688 = vand.u32 %v3687, 4294901760
    %3689 = vmatpush1.msra.mxu0 %v3688
    %3690 = vmatprep.subr.mxu0 0.0
    %v3691 = vand.u32 %v3522, 4294901760
    %v3692 = vsub.f32 %v3522, %v3691
    %v3693 = vand.u32 %v3692, 4294901760
    %v3694 = vsub.f32 %v3692, %v3693
    %v3695 = vand.u32 %v3694, 4294901760
    %3696 = vmatpush1.msra.mxu0 %v3695
    %3697 = vmatprep.subr.mxu0 0.0
    %v3698 = vand.u32 %v3523, 4294901760
    %v3699 = vsub.f32 %v3523, %v3698
    %v3700 = vand.u32 %v3699, 4294901760
    %v3701 = vsub.f32 %v3699, %v3700
    %v3702 = vand.u32 %v3701, 4294901760
    %3703 = vmatpush1.msra.mxu0 %v3702
    %3704 = vmatprep.subr.mxu0 0.0
    %v3705 = vand.u32 %v3524, 4294901760
    %v3706 = vsub.f32 %v3524, %v3705
    %v3707 = vand.u32 %v3706, 4294901760
    %v3708 = vsub.f32 %v3706, %v3707
    %v3709 = vand.u32 %v3708, 4294901760
    %3710 = vmatpush1.msra.mxu0 %v3709
    %3711 = vmatprep.subr.mxu0 0.0
    %v3712 = vand.u32 %v3525, 4294901760
    %v3713 = vsub.f32 %v3525, %v3712
    %v3714 = vand.u32 %v3713, 4294901760
    %v3715 = vsub.f32 %v3713, %v3714
    %v3716 = vand.u32 %v3715, 4294901760
    %3717 = vmatpush1.msra.mxu0 %v3716
    %3718 = vmatprep.subr.mxu0 0.0
    %v3719 = vand.u32 %v3526, 4294901760
    %v3720 = vsub.f32 %v3526, %v3719
    %v3721 = vand.u32 %v3720, 4294901760
    %v3722 = vsub.f32 %v3720, %v3721
    %v3723 = vand.u32 %v3722, 4294901760
    %3724 = vmatpush1.msra.mxu0 %v3723
    %3725 = vmatprep.subr.mxu0 0.0
    %v3726 = vand.u32 %v3527, 4294901760
    %v3727 = vsub.f32 %v3527, %v3726
    %v3728 = vand.u32 %v3727, 4294901760
    %v3729 = vsub.f32 %v3727, %v3728
    %v3730 = vand.u32 %v3729, 4294901760
    %3731 = vmatpush1.msra.mxu0 %v3730
    %3732 = vmatprep.subr.mxu0 0.0
    %v3733 = vand.u32 %v3528, 4294901760
    %v3734 = vsub.f32 %v3528, %v3733
    %v3735 = vand.u32 %v3734, 4294901760
    %v3736 = vsub.f32 %v3734, %v3735
    %v3737 = vand.u32 %v3736, 4294901760
    %3738 = vmatpush1.msra.mxu0 %v3737
    %3739 = vmatprep.subr.mxu0 0.0
    %3740 = vmatpush1.msra.mxu0 0.0
    %3741 = vmatprep.subr.mxu0 0.0
    %3742 = vmatpush1.msra.mxu0 0.0
    %3743 = vmatprep.subr.mxu0 0.0
    %3744 = vmatpush1.msra.mxu0 0.0
    %3745 = vmatprep.subr.mxu0 0.0
    %3746 = vmatpush1.msra.mxu0 0.0
    %3747 = vmatprep.subr.mxu0 0.0
    %3748 = vmatpush1.msra.mxu0 0.0
    %3749 = vmatprep.subr.mxu0 0.0
    %3750 = vmatpush1.msra.mxu0 0.0
    %3751 = vmatprep.subr.mxu0 0.0
    %3752 = vmatpush1.msra.mxu0 0.0
    %3753 = vmatprep.subr.mxu0 0.0
    %3754 = vmatpush1.msra.mxu0 0.0
    %3755 = vmatprep.subr.mxu0 0.0
    %3756 = vmatpush1.msra.mxu0 0.0
    %3757 = vmatprep.subr.mxu0 0.0
    %3758 = vmatpush1.msra.mxu0 0.0
    %3759 = vmatprep.subr.mxu0 0.0
    %3760 = vmatpush1.msra.mxu0 0.0
    %3761 = vmatprep.subr.mxu0 0.0
    %3762 = vmatpush1.msra.mxu0 0.0
    %3763 = vmatprep.subr.mxu0 0.0
    %3764 = vmatpush1.msra.mxu0 0.0
    %3765 = vmatprep.subr.mxu0 0.0
    %3766 = vmatpush1.msra.mxu0 0.0
    %3767 = vmatprep.subr.mxu0 0.0
    %3768 = vmatpush1.msra.mxu0 0.0
    %3769 = vmatprep.subr.mxu0 0.0
    %3770 = vmatpush1.msra.mxu0 0.0
    %3771 = vmatprep.mubr.f32.mxu0 0.0
    %v3772 = vand.u32 %v3512, 4294901760
    %3773 = vmatmul.mubr.f32.gmra.mrb[0].mxu0 %v3772
    %v3774 = vpop.f32.mrb[0].mxu0
    %v3775 = vadd.f32 %v3624, %v3774
    %v3776 = vpop.f32.mrb[0].mxu0
    %3777 = vdwg.mxu0
    %3778 = vmatprep.subr.mxu0 0.0
    %v3779 = vand.u32 %v3513, 4294901760
    %v3780 = vsub.f32 %v3513, %v3779
    %3781 = vmatpush1.msra.mxu0 %v3780
    %3782 = vmatprep.subr.mxu0 0.0
    %v3783 = vand.u32 %v3514, 4294901760
    %v3784 = vsub.f32 %v3514, %v3783
    %3785 = vmatpush1.msra.mxu0 %v3784
    %3786 = vmatprep.subr.mxu0 0.0
    %v3787 = vand.u32 %v3515, 4294901760
    %v3788 = vsub.f32 %v3515, %v3787
    %3789 = vmatpush1.msra.mxu0 %v3788
    %3790 = vmatprep.subr.mxu0 0.0
    %v3791 = vand.u32 %v3516, 4294901760
    %v3792 = vsub.f32 %v3516, %v3791
    %3793 = vmatpush1.msra.mxu0 %v3792
    %3794 = vmatprep.subr.mxu0 0.0
    %v3795 = vand.u32 %v3517, 4294901760
    %v3796 = vsub.f32 %v3517, %v3795
    %3797 = vmatpush1.msra.mxu0 %v3796
    %3798 = vmatprep.subr.mxu0 0.0
    %v3799 = vand.u32 %v3518, 4294901760
    %v3800 = vsub.f32 %v3518, %v3799
    %3801 = vmatpush1.msra.mxu0 %v3800
    %3802 = vmatprep.subr.mxu0 0.0
    %v3803 = vand.u32 %v3519, 4294901760
    %v3804 = vsub.f32 %v3519, %v3803
    %3805 = vmatpush1.msra.mxu0 %v3804
    %3806 = vmatprep.subr.mxu0 0.0
    %v3807 = vand.u32 %v3520, 4294901760
    %v3808 = vsub.f32 %v3520, %v3807
    %3809 = vmatpush1.msra.mxu0 %v3808
    %3810 = vmatprep.subr.mxu0 0.0
    %v3811 = vand.u32 %v3521, 4294901760
    %v3812 = vsub.f32 %v3521, %v3811
    %3813 = vmatpush1.msra.mxu0 %v3812
    %3814 = vmatprep.subr.mxu0 0.0
    %v3815 = vand.u32 %v3522, 4294901760
    %v3816 = vsub.f32 %v3522, %v3815
    %3817 = vmatpush1.msra.mxu0 %v3816
    %3818 = vmatprep.subr.mxu0 0.0
    %v3819 = vand.u32 %v3523, 4294901760
    %v3820 = vsub.f32 %v3523, %v3819
    %3821 = vmatpush1.msra.mxu0 %v3820
    %3822 = vmatprep.subr.mxu0 0.0
    %v3823 = vand.u32 %v3524, 4294901760
    %v3824 = vsub.f32 %v3524, %v3823
    %3825 = vmatpush1.msra.mxu0 %v3824
    %3826 = vmatprep.subr.mxu0 0.0
    %v3827 = vand.u32 %v3525, 4294901760
    %v3828 = vsub.f32 %v3525, %v3827
    %3829 = vmatpush1.msra.mxu0 %v3828
    %3830 = vmatprep.subr.mxu0 0.0
    %v3831 = vand.u32 %v3526, 4294901760
    %v3832 = vsub.f32 %v3526, %v3831
    %3833 = vmatpush1.msra.mxu0 %v3832
    %3834 = vmatprep.subr.mxu0 0.0
    %v3835 = vand.u32 %v3527, 4294901760
    %v3836 = vsub.f32 %v3527, %v3835
    %3837 = vmatpush1.msra.mxu0 %v3836
    %3838 = vmatprep.subr.mxu0 0.0
    %v3839 = vand.u32 %v3528, 4294901760
    %v3840 = vsub.f32 %v3528, %v3839
    %3841 = vmatpush1.msra.mxu0 %v3840
    %3842 = vmatprep.subr.mxu0 0.0
    %3843 = vmatpush1.msra.mxu0 0.0
    %3844 = vmatprep.subr.mxu0 0.0
    %3845 = vmatpush1.msra.mxu0 0.0
    %3846 = vmatprep.subr.mxu0 0.0
    %3847 = vmatpush1.msra.mxu0 0.0
    %3848 = vmatprep.subr.mxu0 0.0
    %3849 = vmatpush1.msra.mxu0 0.0
    %3850 = vmatprep.subr.mxu0 0.0
    %3851 = vmatpush1.msra.mxu0 0.0
    %3852 = vmatprep.subr.mxu0 0.0
    %3853 = vmatpush1.msra.mxu0 0.0
    %3854 = vmatprep.subr.mxu0 0.0
    %3855 = vmatpush1.msra.mxu0 0.0
    %3856 = vmatprep.subr.mxu0 0.0
    %3857 = vmatpush1.msra.mxu0 0.0
    %3858 = vmatprep.subr.mxu0 0.0
    %3859 = vmatpush1.msra.mxu0 0.0
    %3860 = vmatprep.subr.mxu0 0.0
    %3861 = vmatpush1.msra.mxu0 0.0
    %3862 = vmatprep.subr.mxu0 0.0
    %3863 = vmatpush1.msra.mxu0 0.0
    %3864 = vmatprep.subr.mxu0 0.0
    %3865 = vmatpush1.msra.mxu0 0.0
    %3866 = vmatprep.subr.mxu0 0.0
    %3867 = vmatpush1.msra.mxu0 0.0
    %3868 = vmatprep.subr.mxu0 0.0
    %3869 = vmatpush1.msra.mxu0 0.0
    %3870 = vmatprep.subr.mxu0 0.0
    %3871 = vmatpush1.msra.mxu0 0.0
    %3872 = vmatprep.subr.mxu0 0.0
    %3873 = vmatpush1.msra.mxu0 0.0
    %3874 = vmatprep.mubr.f32.mxu0 0.0
    %v3875 = vand.u32 %v3512, 4294901760
    %v3876 = vsub.f32 %v3512, %v3875
    %3877 = vmatmul.mubr.f32.gmra.mrb[0].mxu0 %v3876
    %v3878 = vpop.f32.mrb[0].mxu0
    %v3879 = vadd.f32 %v3775, %v3878
    %v3880 = vpop.f32.mrb[0].mxu0
    %3881 = vdwg.mxu0
    %3882 = vmatprep.subr.mxu0 0.0
    %v3883 = vand.u32 %v3513, 4294901760
    %3884 = vmatpush1.msra.mxu0 %v3883
    %3885 = vmatprep.subr.mxu0 0.0
    %v3886 = vand.u32 %v3514, 4294901760
    %3887 = vmatpush1.msra.mxu0 %v3886
    %3888 = vmatprep.subr.mxu0 0.0
    %v3889 = vand.u32 %v3515, 4294901760
    %3890 = vmatpush1.msra.mxu0 %v3889
    %3891 = vmatprep.subr.mxu0 0.0
    %v3892 = vand.u32 %v3516, 4294901760
    %3893 = vmatpush1.msra.mxu0 %v3892
    %3894 = vmatprep.subr.mxu0 0.0
    %v3895 = vand.u32 %v3517, 4294901760
    %3896 = vmatpush1.msra.mxu0 %v3895
    %3897 = vmatprep.subr.mxu0 0.0
    %v3898 = vand.u32 %v3518, 4294901760
    %3899 = vmatpush1.msra.mxu0 %v3898
    %3900 = vmatprep.subr.mxu0 0.0
    %v3901 = vand.u32 %v3519, 4294901760
    %3902 = vmatpush1.msra.mxu0 %v3901
    %3903 = vmatprep.subr.mxu0 0.0
    %v3904 = vand.u32 %v3520, 4294901760
    %3905 = vmatpush1.msra.mxu0 %v3904
    %3906 = vmatprep.subr.mxu0 0.0
    %v3907 = vand.u32 %v3521, 4294901760
    %3908 = vmatpush1.msra.mxu0 %v3907
    %3909 = vmatprep.subr.mxu0 0.0
    %v3910 = vand.u32 %v3522, 4294901760
    %3911 = vmatpush1.msra.mxu0 %v3910
    %3912 = vmatprep.subr.mxu0 0.0
    %v3913 = vand.u32 %v3523, 4294901760
    %3914 = vmatpush1.msra.mxu0 %v3913
    %3915 = vmatprep.subr.mxu0 0.0
    %v3916 = vand.u32 %v3524, 4294901760
    %3917 = vmatpush1.msra.mxu0 %v3916
    %3918 = vmatprep.subr.mxu0 0.0
    %v3919 = vand.u32 %v3525, 4294901760
    %3920 = vmatpush1.msra.mxu0 %v3919
    %3921 = vmatprep.subr.mxu0 0.0
    %v3922 = vand.u32 %v3526, 4294901760
    %3923 = vmatpush1.msra.mxu0 %v3922
    %3924 = vmatprep.subr.mxu0 0.0
    %v3925 = vand.u32 %v3527, 4294901760
    %3926 = vmatpush1.msra.mxu0 %v3925
    %3927 = vmatprep.subr.mxu0 0.0
    %v3928 = vand.u32 %v3528, 4294901760
    %3929 = vmatpush1.msra.mxu0 %v3928
    %3930 = vmatprep.subr.mxu0 0.0
    %3931 = vmatpush1.msra.mxu0 0.0
    %3932 = vmatprep.subr.mxu0 0.0
    %3933 = vmatpush1.msra.mxu0 0.0
    %3934 = vmatprep.subr.mxu0 0.0
    %3935 = vmatpush1.msra.mxu0 0.0
    %3936 = vmatprep.subr.mxu0 0.0
    %3937 = vmatpush1.msra.mxu0 0.0
    %3938 = vmatprep.subr.mxu0 0.0
    %3939 = vmatpush1.msra.mxu0 0.0
    %3940 = vmatprep.subr.mxu0 0.0
    %3941 = vmatpush1.msra.mxu0 0.0
    %3942 = vmatprep.subr.mxu0 0.0
    %3943 = vmatpush1.msra.mxu0 0.0
    %3944 = vmatprep.subr.mxu0 0.0
    %3945 = vmatpush1.msra.mxu0 0.0
    %3946 = vmatprep.subr.mxu0 0.0
    %3947 = vmatpush1.msra.mxu0 0.0
    %3948 = vmatprep.subr.mxu0 0.0
    %3949 = vmatpush1.msra.mxu0 0.0
    %3950 = vmatprep.subr.mxu0 0.0
    %3951 = vmatpush1.msra.mxu0 0.0
    %3952 = vmatprep.subr.mxu0 0.0
    %3953 = vmatpush1.msra.mxu0 0.0
    %3954 = vmatprep.subr.mxu0 0.0
    %3955 = vmatpush1.msra.mxu0 0.0
    %3956 = vmatprep.subr.mxu0 0.0
    %3957 = vmatpush1.msra.mxu0 0.0
    %3958 = vmatprep.subr.mxu0 0.0
    %3959 = vmatpush1.msra.mxu0 0.0
    %3960 = vmatprep.subr.mxu0 0.0
    %3961 = vmatpush1.msra.mxu0 0.0
    %3962 = vmatprep.mubr.f32.mxu0 0.0
    %v3963 = vand.u32 %v3512, 4294901760
    %v3964 = vsub.f32 %v3512, %v3963
    %v3965 = vand.u32 %v3964, 4294901760
    %3966 = vmatmul.mubr.f32.gmra.mrb[0].mxu0 %v3965
    %v3967 = vpop.f32.mrb[0].mxu0
    %v3968 = vadd.f32 %v3879, %v3967
    %v3969 = vpop.f32.mrb[0].mxu0
    %3970 = vdwg.mxu0
    %3971 = vmatprep.subr.mxu0 0.0
    %v3972 = vand.u32 %v3513, 4294901760
    %v3973 = vsub.f32 %v3513, %v3972
    %v3974 = vand.u32 %v3973, 4294901760
    %3975 = vmatpush1.msra.mxu0 %v3974
    %3976 = vmatprep.subr.mxu0 0.0
    %v3977 = vand.u32 %v3514, 4294901760
    %v3978 = vsub.f32 %v3514, %v3977
    %v3979 = vand.u32 %v3978, 4294901760
    %3980 = vmatpush1.msra.mxu0 %v3979
    %3981 = vmatprep.subr.mxu0 0.0
    %v3982 = vand.u32 %v3515, 4294901760
    %v3983 = vsub.f32 %v3515, %v3982
    %v3984 = vand.u32 %v3983, 4294901760
    %3985 = vmatpush1.msra.mxu0 %v3984
    %3986 = vmatprep.subr.mxu0 0.0
    %v3987 = vand.u32 %v3516, 4294901760
    %v3988 = vsub.f32 %v3516, %v3987
    %v3989 = vand.u32 %v3988, 4294901760
    %3990 = vmatpush1.msra.mxu0 %v3989
    %3991 = vmatprep.subr.mxu0 0.0
    %v3992 = vand.u32 %v3517, 4294901760
    %v3993 = vsub.f32 %v3517, %v3992
    %v3994 = vand.u32 %v3993, 4294901760
    %3995 = vmatpush1.msra.mxu0 %v3994
    %3996 = vmatprep.subr.mxu0 0.0
    %v3997 = vand.u32 %v3518, 4294901760
    %v3998 = vsub.f32 %v3518, %v3997
    %v3999 = vand.u32 %v3998, 4294901760
    %4000 = vmatpush1.msra.mxu0 %v3999
    %4001 = vmatprep.subr.mxu0 0.0
    %v4002 = vand.u32 %v3519, 4294901760
    %v4003 = vsub.f32 %v3519, %v4002
    %v4004 = vand.u32 %v4003, 4294901760
    %4005 = vmatpush1.msra.mxu0 %v4004
    %4006 = vmatprep.subr.mxu0 0.0
    %v4007 = vand.u32 %v3520, 4294901760
    %v4008 = vsub.f32 %v3520, %v4007
    %v4009 = vand.u32 %v4008, 4294901760
    %4010 = vmatpush1.msra.mxu0 %v4009
    %4011 = vmatprep.subr.mxu0 0.0
    %v4012 = vand.u32 %v3521, 4294901760
    %v4013 = vsub.f32 %v3521, %v4012
    %v4014 = vand.u32 %v4013, 4294901760
    %4015 = vmatpush1.msra.mxu0 %v4014
    %4016 = vmatprep.subr.mxu0 0.0
    %v4017 = vand.u32 %v3522, 4294901760
    %v4018 = vsub.f32 %v3522, %v4017
    %v4019 = vand.u32 %v4018, 4294901760
    %4020 = vmatpush1.msra.mxu0 %v4019
    %4021 = vmatprep.subr.mxu0 0.0
    %v4022 = vand.u32 %v3523, 4294901760
    %v4023 = vsub.f32 %v3523, %v4022
    %v4024 = vand.u32 %v4023, 4294901760
    %4025 = vmatpush1.msra.mxu0 %v4024
    %4026 = vmatprep.subr.mxu0 0.0
    %v4027 = vand.u32 %v3524, 4294901760
    %v4028 = vsub.f32 %v3524, %v4027
    %v4029 = vand.u32 %v4028, 4294901760
    %4030 = vmatpush1.msra.mxu0 %v4029
    %4031 = vmatprep.subr.mxu0 0.0
    %v4032 = vand.u32 %v3525, 4294901760
    %v4033 = vsub.f32 %v3525, %v4032
    %v4034 = vand.u32 %v4033, 4294901760
    %4035 = vmatpush1.msra.mxu0 %v4034
    %4036 = vmatprep.subr.mxu0 0.0
    %v4037 = vand.u32 %v3526, 4294901760
    %v4038 = vsub.f32 %v3526, %v4037
    %v4039 = vand.u32 %v4038, 4294901760
    %4040 = vmatpush1.msra.mxu0 %v4039
    %4041 = vmatprep.subr.mxu0 0.0
    %v4042 = vand.u32 %v3527, 4294901760
    %v4043 = vsub.f32 %v3527, %v4042
    %v4044 = vand.u32 %v4043, 4294901760
    %4045 = vmatpush1.msra.mxu0 %v4044
    %4046 = vmatprep.subr.mxu0 0.0
    %v4047 = vand.u32 %v3528, 4294901760
    %v4048 = vsub.f32 %v3528, %v4047
    %v4049 = vand.u32 %v4048, 4294901760
    %4050 = vmatpush1.msra.mxu0 %v4049
    %4051 = vmatprep.subr.mxu0 0.0
    %4052 = vmatpush1.msra.mxu0 0.0
    %4053 = vmatprep.subr.mxu0 0.0
    %4054 = vmatpush1.msra.mxu0 0.0
    %4055 = vmatprep.subr.mxu0 0.0
    %4056 = vmatpush1.msra.mxu0 0.0
    %4057 = vmatprep.subr.mxu0 0.0
    %4058 = vmatpush1.msra.mxu0 0.0
    %4059 = vmatprep.subr.mxu0 0.0
    %4060 = vmatpush1.msra.mxu0 0.0
    %4061 = vmatprep.subr.mxu0 0.0
    %4062 = vmatpush1.msra.mxu0 0.0
    %4063 = vmatprep.subr.mxu0 0.0
    %4064 = vmatpush1.msra.mxu0 0.0
    %4065 = vmatprep.subr.mxu0 0.0
    %4066 = vmatpush1.msra.mxu0 0.0
    %4067 = vmatprep.subr.mxu0 0.0
    %4068 = vmatpush1.msra.mxu0 0.0
    %4069 = vmatprep.subr.mxu0 0.0
    %4070 = vmatpush1.msra.mxu0 0.0
    %4071 = vmatprep.subr.mxu0 0.0
    %4072 = vmatpush1.msra.mxu0 0.0
    %4073 = vmatprep.subr.mxu0 0.0
    %4074 = vmatpush1.msra.mxu0 0.0
    %4075 = vmatprep.subr.mxu0 0.0
    %4076 = vmatpush1.msra.mxu0 0.0
    %4077 = vmatprep.subr.mxu0 0.0
    %4078 = vmatpush1.msra.mxu0 0.0
    %4079 = vmatprep.subr.mxu0 0.0
    %4080 = vmatpush1.msra.mxu0 0.0
    %4081 = vmatprep.subr.mxu0 0.0
    %4082 = vmatpush1.msra.mxu0 0.0
    %4083 = vmatprep.mubr.f32.mxu0 0.0
    %v4084 = vand.u32 %v3512, 4294901760
    %4085 = vmatmul.mubr.f32.gmra.mrb[0].mxu0 %v4084
    %v4086 = vpop.f32.mrb[0].mxu0
    %v4087 = vadd.f32 %v3968, %v4086
    %v4088 = vpop.f32.mrb[0].mxu0
    %4089 = vdwg.mxu0
    %4090 = vmatprep.subr.mxu0 0.0
    %v4091 = vand.u32 %v3513, 4294901760
    %4092 = vmatpush1.msra.mxu0 %v4091
    %4093 = vmatprep.subr.mxu0 0.0
    %v4094 = vand.u32 %v3514, 4294901760
    %4095 = vmatpush1.msra.mxu0 %v4094
    %4096 = vmatprep.subr.mxu0 0.0
    %v4097 = vand.u32 %v3515, 4294901760
    %4098 = vmatpush1.msra.mxu0 %v4097
    %4099 = vmatprep.subr.mxu0 0.0
    %v4100 = vand.u32 %v3516, 4294901760
    %4101 = vmatpush1.msra.mxu0 %v4100
    %4102 = vmatprep.subr.mxu0 0.0
    %v4103 = vand.u32 %v3517, 4294901760
    %4104 = vmatpush1.msra.mxu0 %v4103
    %4105 = vmatprep.subr.mxu0 0.0
    %v4106 = vand.u32 %v3518, 4294901760
    %4107 = vmatpush1.msra.mxu0 %v4106
    %4108 = vmatprep.subr.mxu0 0.0
    %v4109 = vand.u32 %v3519, 4294901760
    %4110 = vmatpush1.msra.mxu0 %v4109
    %4111 = vmatprep.subr.mxu0 0.0
    %v4112 = vand.u32 %v3520, 4294901760
    %4113 = vmatpush1.msra.mxu0 %v4112
    %4114 = vmatprep.subr.mxu0 0.0
    %v4115 = vand.u32 %v3521, 4294901760
    %4116 = vmatpush1.msra.mxu0 %v4115
    %4117 = vmatprep.subr.mxu0 0.0
    %v4118 = vand.u32 %v3522, 4294901760
    %4119 = vmatpush1.msra.mxu0 %v4118
    %4120 = vmatprep.subr.mxu0 0.0
    %v4121 = vand.u32 %v3523, 4294901760
    %4122 = vmatpush1.msra.mxu0 %v4121
    %4123 = vmatprep.subr.mxu0 0.0
    %v4124 = vand.u32 %v3524, 4294901760
    %4125 = vmatpush1.msra.mxu0 %v4124
    %4126 = vmatprep.subr.mxu0 0.0
    %v4127 = vand.u32 %v3525, 4294901760
    %4128 = vmatpush1.msra.mxu0 %v4127
    %4129 = vmatprep.subr.mxu0 0.0
    %v4130 = vand.u32 %v3526, 4294901760
    %4131 = vmatpush1.msra.mxu0 %v4130
    %4132 = vmatprep.subr.mxu0 0.0
    %v4133 = vand.u32 %v3527, 4294901760
    %4134 = vmatpush1.msra.mxu0 %v4133
    %4135 = vmatprep.subr.mxu0 0.0
    %v4136 = vand.u32 %v3528, 4294901760
    %4137 = vmatpush1.msra.mxu0 %v4136
    %4138 = vmatprep.subr.mxu0 0.0
    %4139 = vmatpush1.msra.mxu0 0.0
    %4140 = vmatprep.subr.mxu0 0.0
    %4141 = vmatpush1.msra.mxu0 0.0
    %4142 = vmatprep.subr.mxu0 0.0
    %4143 = vmatpush1.msra.mxu0 0.0
    %4144 = vmatprep.subr.mxu0 0.0
    %4145 = vmatpush1.msra.mxu0 0.0
    %4146 = vmatprep.subr.mxu0 0.0
    %4147 = vmatpush1.msra.mxu0 0.0
    %4148 = vmatprep.subr.mxu0 0.0
    %4149 = vmatpush1.msra.mxu0 0.0
    %4150 = vmatprep.subr.mxu0 0.0
    %4151 = vmatpush1.msra.mxu0 0.0
    %4152 = vmatprep.subr.mxu0 0.0
    %4153 = vmatpush1.msra.mxu0 0.0
    %4154 = vmatprep.subr.mxu0 0.0
    %4155 = vmatpush1.msra.mxu0 0.0
    %4156 = vmatprep.subr.mxu0 0.0
    %4157 = vmatpush1.msra.mxu0 0.0
    %4158 = vmatprep.subr.mxu0 0.0
    %4159 = vmatpush1.msra.mxu0 0.0
    %4160 = vmatprep.subr.mxu0 0.0
    %4161 = vmatpush1.msra.mxu0 0.0
    %4162 = vmatprep.subr.mxu0 0.0
    %4163 = vmatpush1.msra.mxu0 0.0
    %4164 = vmatprep.subr.mxu0 0.0
    %4165 = vmatpush1.msra.mxu0 0.0
    %4166 = vmatprep.subr.mxu0 0.0
    %4167 = vmatpush1.msra.mxu0 0.0
    %4168 = vmatprep.subr.mxu0 0.0
    %4169 = vmatpush1.msra.mxu0 0.0
    %4170 = vmatprep.mubr.f32.mxu0 0.0
    %v4171 = vand.u32 %v3512, 4294901760
    %4172 = vmatmul.mubr.f32.gmra.mrb[0].mxu0 %v4171
    %v4173 = vpop.f32.mrb[0].mxu0
    %v4174 = vadd.f32 %v4087, %v4173
    %v4175 = vpop.f32.mrb[0].mxu0
    %4176 = vdwg.mxu0
    %4177 = vst [vmem:[#allocation10] sm:$0xff] %v4174
    // Predicated region
    $region46: #{tpu_custom_call.1} parent=1 // pred_check
      _
    $region47: #{tpu_custom_call.1} parent=1 // pred_check_branch
      %4179 = sbr.rel (0) target = $region49
    $region48: #{tpu_custom_call.1} parent=1 // pred_region
      %s4181 = ssub.s32 128, 32
      %4182 = vsyncadd [#allocation4], %s4181
      %s4183 = sshll.u32 [#allocation10], 4
      %s4184 = int_to_ptr.vmem [resolvable:$true] %s4183
      %4189 = dma.vmem_to_hbm [thread:$0]  %s4184, 32, %s7, [#allocation4], 32, 32, 2
    $region49: #{tpu_custom_call.1} parent=1 // pred_fallthru
      _
    // Predicated region
    $region50: #{tpu_custom_call.1} parent=1 // pred_check
      _
    $region51: #{tpu_custom_call.1} parent=1 // pred_check_branch
      %4191 = sbr.rel (0) target = $region53
    $region52: #{tpu_custom_call.1} parent=1 // pred_region
      %4192 = dma.done [#allocation4], 128
    $region53: #{tpu_custom_call.1} parent=1 // pred_fallthru
      _
    %4193 = vsyncpa [#allocation3], 1
    %4194 = vsyncpa [#allocation6], 1
    %4195 = vsyncpa [#allocation9], 1
    %4196 = vsyncpa [#allocation4], 1

</llo_original>
